<compile_context>
chip_gen: v7x
topology: tpu7x:2x2x1
jax: 0.10.0
libtpu: 0.0.40
codegen_flags: <defaults>
</compile_context>

<pallas_src>
import math

import jax
import jax.numpy as jnp
import numpy as np
from jax import lax
from jax.experimental import pallas as pl
from jax.experimental.pallas import tpu as pltpu


# --------------------------------------------------------------------------------------
# Kernel
# --------------------------------------------------------------------------------------
def _cgsu_down_kernel(main_ref, halo_ref, w_ref, shift_ref, out_ref, acc_ref, ph01_ref):
    """One (image, row-tile) block of CGSU_DOWN.

    main_ref:  (1, 4, hb, Wp2, C)  bf16  phase-decomposed padded input rows; phase
               p = 2*(pad_row % 2) + (pad_col % 2), phase row r = pad_row // 2
    halo_ref:  (1, 2, 1,  Wp2, C)  bf16  bottom halo row for the even-row phases (0, 1)
    w_ref:     (9, C, C)           bf16  conv taps (tap = kh*3+kw), BN scale pre-folded
    shift_ref: (1, C)              f32   fused BN shift = beta - mean * scale
    out_ref:   (1, 2C, hb*Wo)      out   channel-major fused output:
                                         rows [0,C)  = conv + BN + ReLU branch
                                         rows [C,2C) = 2x2 / stride-2 maxpool branch
    acc_ref:   (hb*Wo, C)          f32   VMEM accumulator scratch
    ph01_ref:  (2, hb+1, Wp2, C)   bf16  even-row phases stitched with their halo row
    """
    _, _, hb, wp2, C = main_ref.shape
    Wo = wp2 - 1
    M = hb * Wo

    # Stitch the even-row phases (0, 1) with the 1-row bottom halo.  Only those two
    # phases are ever read at row offset +1 (conv taps kh == 2 and the pool's lower row).
    ph01_ref[:, 0:hb, :, :] = main_ref[0, 0:2, :, :, :]
    ph01_ref[:, hb:hb + 1, :, :] = halo_ref[0, :, :, :, :]

    def tap_patch(kh, kw):
        p = 2 * (kh % 2) + (kw % 2)            # parity phase holding this tap
        ro, co = kh // 2, kw // 2              # row / col offset inside the phase array
        if ro == 0:
            patch = main_ref[0, p, :, co:co + Wo, :]            # (hb, Wo, C)
        else:                                  # kh == 2 -> even-row phases 0/1, +1 row
            patch = ph01_ref[p, 1:hb + 1, co:co + Wo, :]        # (hb, Wo, C)
        return patch.reshape(M, C)

    taps = [(kh, kw) for kh in range(3) for kw in range(3)]

    # ---- conv1: 3x3 / stride 2 / pad 1, bias-free, BN scale folded into weights -------
    if C % 128 == 0:
        # im2col in VMEM (lane-aligned concat) -> single K=9C MXU matmul (v6e/v7x win).
        lhs = jnp.concatenate([tap_patch(kh, kw) for kh, kw in taps], axis=1)   # (M, 9C)
        acc_ref[...] = jnp.dot(lhs, w_ref[:, :, :].reshape(9 * C, C),
                               preferred_element_type=jnp.float32)
    else:
        # 9 small K=C matmuls accumulated into VMEM scratch (bounded vreg live range).
        for t, (kh, kw) in enumerate(taps):
            contrib = jnp.dot(tap_patch(kh, kw), w_ref[t, :, :],
                              preferred_element_type=jnp.float32)
            if t == 0:
                acc_ref[...] = contrib
            else:
                acc_ref[...] += contrib

    # BatchNorm shift + ReLU, then transpose to channel-major (C sublanes, M lanes).
    # TODO(synk): Dropout(p=ph.dropout_p) is identity in inference mode; training-mode
    #             random masking (pltpu.prng_*) is not implemented here.
    conv = jnp.maximum(acc_ref[...] + shift_ref[...], 0.0)                 # (M, C) f32
    out_ref[0, 0:C, :] = jnp.transpose(conv).astype(out_ref.dtype)         # (C, M)

    # ---- conv_res: MaxPool2d(kernel=2, stride=2) on the UN-padded input ---------------
    # padded coords of the 2x2 window at output (i,j): rows {2i+1, 2i+2}, cols {2j+1, 2j+2}
    a = main_ref[0, 3, :, 0:Wo, :]                     # (2i+1, 2j+1)
    b = main_ref[0, 2, :, 1:Wo + 1, :]                 # (2i+1, 2j+2)
    c = ph01_ref[1, 1:hb + 1, 0:Wo, :]                 # (2i+2, 2j+1)
    d = ph01_ref[0, 1:hb + 1, 1:Wo + 1, :]             # (2i+2, 2j+2)
    pool = jnp.maximum(jnp.maximum(a, b), jnp.maximum(c, d))               # (hb, Wo, C)
    pool = pool.reshape(M, C).astype(jnp.float32)
    out_ref[0, C:2 * C, :] = jnp.transpose(pool).astype(out_ref.dtype)     # (C, M)


# --------------------------------------------------------------------------------------
# Tiling helpers
# --------------------------------------------------------------------------------------
def _vmem_budget_bytes():
    """~75% of per-core VMEM: ~48 MiB on v7x (64 MiB physical), ~96 MiB on v5e/v6e."""
    try:
        cap = int(pltpu.get_tpu_info().vmem_capacity_bytes)
    except Exception:
        cap = 64 * 1024 * 1024           # conservative default (v7x per-TensorCore)
    return (cap * 3) // 4


def _block_footprint_bytes(hb, Wo, C, out_bytes):
    """Per-grid-step VMEM footprint incl. pipeline double-buffering of inputs/outputs."""
    Wp2 = Wo + 1
    main = 4 * hb * Wp2 * C * 2          # bf16 phase block
    halo = 2 * 1 * Wp2 * C * 2           # bf16 halo row (phases 0, 1)
    out = 2 * C * hb * Wo * out_bytes    # fused conv+pool output block
    w = 9 * C * C * 2                    # resident bf16 weights
    acc = hb * Wo * C * 4                # f32 accumulator scratch
    ph01 = 2 * (hb + 1) * Wp2 * C * 2    # stitched even-phase scratch
    return 2 * (main + halo + out + w) + acc + ph01 + (1 << 20)   # + slack


def _pick_block_rows(Ho, Wo, C, out_bytes, budget_bytes):
    """Largest legal row tile fitting the VMEM budget.

    Legal: the output block's lane dim (hb*Wo) is a multiple of 128, or the tile covers
    the full (possibly padded) height (single tile == full lane dim)."""
    step = 128 // math.gcd(Wo, 128)      # smallest hb with (hb * Wo) % 128 == 0
    cands = list(range(step, Ho + 1, step))
    if Ho not in cands:
        cands.append(Ho)
    fits = [h for h in cands if _block_footprint_bytes(h, Wo, C, out_bytes) <= budget_bytes]
    if fits:
        # least bottom-row padding first, then the largest tile
        return min(fits, key=lambda h: (-(-Ho // h) * h, -h))
    return min(cands, key=lambda h: _block_footprint_bytes(h, Wo, C, out_bytes))


# --------------------------------------------------------------------------------------
# Wrapper
# --------------------------------------------------------------------------------------
def cgsu_down(x_nchw, w_hwio, gamma, beta, running_mean, running_var,
              eps=1e-5, block_rows=None, out_dtype=jnp.bfloat16):
    """x_nchw: (N, C, H, W) -> (N, 2C, H//2, W//2), matching torch CGSU_DOWN.forward (eval)."""
    N, C, H, W = x_nchw.shape
    assert H % 2 == 0 and W % 2 == 0, "even spatial dims expected"
    Ho, Wo = H // 2, W // 2
    Wp2 = Wo + 1
    out_bytes = np.dtype(out_dtype).itemsize

    budget = _vmem_budget_bytes()
    hb = int(block_rows) if block_rows is not None else \
        _pick_block_rows(Ho, Wo, C, out_bytes, budget)
    hb = max(1, hb)
    nb = -(-Ho // hb)                    # number of row tiles (ceil)
    if nb > 1 and (hb * Wo) % 128 != 0:
        raise ValueError(
            f"block_rows={hb}: hb*Wo={hb * Wo} must be a multiple of 128 when tiling rows")
    Ho_pad = nb * hb                     # bottom rows zero-padded, cropped after the kernel
    Hp2 = Ho_pad + 1

    # ---- wrapper glue (single restructuring pass; fuses under jit) ---------------------
    # NCHW -> NHWC bf16, zero pad (conv pad=1 plus any bottom-row tiling pad), then a
    # stride-2 phase decomposition: phase p holds padded (row%2, col%2) == (p>>1, p&1).
    x_nhwc = jnp.transpose(x_nchw.astype(jnp.bfloat16), (0, 2, 3, 1))
    xp = jnp.pad(x_nhwc, ((0, 0), (1, 1 + 2 * (Ho_pad - Ho)), (1, 1), (0, 0)))
    phases = jnp.stack(
        [xp[:, 0::2, 0::2, :], xp[:, 0::2, 1::2, :],
         xp[:, 1::2, 0::2, :], xp[:, 1::2, 1::2, :]],
        axis=1)                                                   # (N, 4, Hp2, Wp2, C)

    # fold the BatchNorm scale into the conv weights (f32 math, bf16 for the MXU)
    inv_std = 1.0 / jnp.sqrt(running_var.astype(jnp.float32) + eps)
    scale = gamma.astype(jnp.float32) * inv_std                   # (C,)
    w9 = (w_hwio.astype(jnp.float32) * scale[None, None, None, :]) \
        .reshape(9, C, C).astype(jnp.bfloat16)                    # (tap, C_in, C_out)
    shift = (beta.astype(jnp.float32) - running_mean.astype(jnp.float32) * scale) \
        .reshape(1, C)

    flops = 2 * N * Ho_pad * Wo * 9 * C * C + 3 * N * Ho_pad * Wo * C
    bytes_accessed = (phases.size * 2 + N * nb * 2 * Wp2 * C * 2
                      + w9.size * 2 + shift.size * 4
                      + N * 2 * C * Ho_pad * Wo * out_bytes)

    out_flat = pl.pallas_call(
        _cgsu_down_kernel,
        out_shape=jax.ShapeDtypeStruct((N, 2 * C, Ho_pad * Wo), out_dtype),
        grid=(N, nb),
        in_specs=[
            # main phase block: 4 phases x hb rows
            pl.BlockSpec((1, 4, hb, Wp2, C), lambda n, i: (n, 0, i, 0, 0)),
            # 1-row bottom halo of the even-row phases (block row size 1 -> element row)
            pl.BlockSpec((1, 2, 1, Wp2, C), lambda n, i: (n, 0, (i + 1) * hb, 0, 0)),
            pl.BlockSpec((9, C, C), lambda n, i: (0, 0, 0)),
            pl.BlockSpec((1, C), lambda n, i: (0, 0)),
        ],
        out_specs=pl.BlockSpec((1, 2 * C, hb * Wo), lambda n, i: (n, 0, i)),
        scratch_shapes=[
            pltpu.VMEM((hb * Wo, C), jnp.float32),              # conv f32 accumulator
            pltpu.VMEM((2, hb + 1, Wp2, C), jnp.bfloat16),      # stitched even phases
        ],
        compiler_params=pltpu.CompilerParams(
            dimension_semantics=("parallel", "parallel"),
            vmem_limit_bytes=int(max(budget,
                                     _block_footprint_bytes(hb, Wo, C, out_bytes))),
        ),
        cost_estimate=pl.CostEstimate(flops=int(flops), transcendentals=0,
                                      bytes_accessed=int(bytes_accessed)),
    )(phases, phases, w9, shift)

    # channel-major already == NCHW; crop any padded bottom rows (contiguous in the flat
    # spatial dim) and do a data-movement-free row-major reshape.
    return out_flat[:, :, :Ho * Wo].reshape(N, 2 * C, Ho, Wo)


# --------------------------------------------------------------------------------------
# Reference + self-test
# --------------------------------------------------------------------------------------
def _reference(x, w_hwio, gamma, beta, mean, var, eps=1e-5):
    """Pure-JAX f32 reference of the torch forward (eval mode)."""
    w_oihw = jnp.transpose(w_hwio, (3, 2, 0, 1))
    conv = lax.conv_general_dilated(
        x, w_oihw, window_strides=(2, 2), padding=((1, 1), (1, 1)),
        dimension_numbers=("NCHW", "OIHW", "NCHW"),
        precision=lax.Precision.HIGHEST)
    scale = gamma / jnp.sqrt(var + eps)
    shift = beta - mean * scale
    bn = conv * scale[None, :, None, None] + shift[None, :, None, None]
    relu = jnp.maximum(bn, 0.0)
    pool = lax.reduce_window(x, -jnp.inf, lax.max, (1, 1, 2, 2), (1, 1, 2, 2), "VALID")
    return jnp.concatenate([relu, pool], axis=1)


def _run_case(N, C, H, W, block_rows=None):
    key = jax.random.PRNGKey(0)
    k_w, k_g, k_b, k_m, k_v, k_x = jax.random.split(key, 6)
    w_hwio = 0.1 * jax.random.normal(k_w, (3, 3, C, C), dtype=jnp.float32)
    gamma = 1.0 + 0.1 * jax.random.normal(k_g, (C,), dtype=jnp.float32)
    beta = 0.1 * jax.random.normal(k_b, (C,), dtype=jnp.float32)
    mean = 0.1 * jax.random.normal(k_m, (C,), dtype=jnp.float32)
    var = 0.5 + jnp.abs(jax.random.normal(k_v, (C,), dtype=jnp.float32))
    x = jax.random.normal(k_x, (N, C, H, W), dtype=jnp.float32)

    fn = jax.jit(lambda *a: cgsu_down(*a, block_rows=block_rows))
    out = jax.block_until_ready(fn(x, w_hwio, gamma, beta, mean, var))
    assert out.shape == (N, 2 * C, H // 2, W // 2), out.shape

    ref = _reference(x, w_hwio, gamma, beta, mean, var)
    # bf16 conv operands + bf16 output -> loose tolerance
    np.testing.assert_allclose(np.asarray(out.astype(jnp.float32)), np.asarray(ref),
                               rtol=2e-2, atol=3e-2)


if __name__ == "__main__":
    # primary small case (auto tiling -> single row tile per image)
    _run_case(2, 4, 16, 16)
    # multi-row-tile + halo + ragged-Ho path: Ho=12, hb=8 -> 2 tiles, 4 padded rows,
    # hb*Wo = 128 (lane-dense output blocks)
    _run_case(1, 4, 24, 32, block_rows=8)
    print("KERNEL_OK")
</pallas_src>

<mosaic_0001>
module attributes {stable_mosaic.version = 11 : i64} {
  func.func @_cgsu_down_kernel(%arg0: i32, %arg1: i32, %arg2: memref<1x4x8x9x4xbf16, #tpu.memory_space<vmem>>, %arg3: memref<1x2x1x9x4xbf16, #tpu.memory_space<vmem>>, %arg4: memref<9x4x4xbf16, #tpu.memory_space<vmem>>, %arg5: memref<1x4xf32, #tpu.memory_space<vmem>>, %arg6: memref<1x8x64xbf16, #tpu.memory_space<vmem>>, %arg7: memref<64x4xf32, #tpu.memory_space<vmem>>, %arg8: memref<2x9x9x4xbf16, #tpu.memory_space<vmem>>) attributes {dimension_semantics = [#tpu.dimension_semantics<parallel>, #tpu.dimension_semantics<parallel>], iteration_bounds = array<i64: 2, 1>, scalar_prefetch = 0 : i64, scratch_operands = 2 : i64, tpu.core_type = #tpu.core_type<tc>, window_params = [{transform_indices = @transform_0, window_bounds = array<i64: 1, 4, 8, 9, 4>}, {transform_indices = @transform_1, window_bounds = array<i64: 1, 2, 1, 9, 4>}, {pipeline_mode = #tpu.pipeline_mode<synchronous>, transform_indices = @transform_2, window_bounds = array<i64: 9, 4, 4>}, {pipeline_mode = #tpu.pipeline_mode<synchronous>, transform_indices = @transform_3, window_bounds = array<i64: 1, 4>}, {transform_indices = @transform_4, window_bounds = array<i64: 1, 8, 64>}]} {
    %c0 = arith.constant 0 : index
    %c0_0 = arith.constant 0 : index
    %c0_1 = arith.constant 0 : index
    %c0_2 = arith.constant 0 : index
    %c0_3 = arith.constant 0 : index
    %0 = vector.load %arg2[%c0, %c0_0, %c0_1, %c0_2, %c0_3] : memref<1x4x8x9x4xbf16, #tpu.memory_space<vmem>>, vector<1x2x8x9x4xbf16>
    %1 = vector.shape_cast %0 : vector<1x2x8x9x4xbf16> to vector<2x8x9x4xbf16>
    %c0_4 = arith.constant 0 : index
    %c0_5 = arith.constant 0 : index
    %c0_6 = arith.constant 0 : index
    %c0_7 = arith.constant 0 : index
    %2 = vector.load %arg8[%c0_4, %c0_5, %c0_6, %c0_7] : memref<2x9x9x4xbf16, #tpu.memory_space<vmem>>, vector<2x8x9x4xbf16>
    tpu.vector_store %arg8[%c0_4, %c0_5, %c0_6, %c0_7], %1 {strides = array<i32>} : memref<2x9x9x4xbf16, #tpu.memory_space<vmem>>, vector<2x8x9x4xbf16>,
    %c0_8 = arith.constant 0 : index
    %c0_9 = arith.constant 0 : index
    %c0_10 = arith.constant 0 : index
    %c0_11 = arith.constant 0 : index
    %c0_12 = arith.constant 0 : index
    %3 = vector.load %arg3[%c0_8, %c0_9, %c0_10, %c0_11, %c0_12] : memref<1x2x1x9x4xbf16, #tpu.memory_space<vmem>>, vector<1x2x1x9x4xbf16>
    %4 = vector.shape_cast %3 : vector<1x2x1x9x4xbf16> to vector<2x1x9x4xbf16>
    %c0_13 = arith.constant 0 : index
    %c8 = arith.constant 8 : index
    %c0_14 = arith.constant 0 : index
    %c0_15 = arith.constant 0 : index
    %5 = vector.load %arg8[%c0_13, %c8, %c0_14, %c0_15] : memref<2x9x9x4xbf16, #tpu.memory_space<vmem>>, vector<2x1x9x4xbf16>
    tpu.vector_store %arg8[%c0_13, %c8, %c0_14, %c0_15], %4 {strides = array<i32>} : memref<2x9x9x4xbf16, #tpu.memory_space<vmem>>, vector<2x1x9x4xbf16>,
    %c0_16 = arith.constant 0 : index
    %c0_17 = arith.constant 0 : index
    %c0_18 = arith.constant 0 : index
    %c0_19 = arith.constant 0 : index
    %c0_20 = arith.constant 0 : index
    %6 = vector.load %arg2[%c0_16, %c0_17, %c0_18, %c0_19, %c0_20] : memref<1x4x8x9x4xbf16, #tpu.memory_space<vmem>>, vector<1x1x8x8x4xbf16>
    %7 = vector.shape_cast %6 : vector<1x1x8x8x4xbf16> to vector<8x8x4xbf16>
    %8 = vector.shape_cast %7 : vector<8x8x4xbf16> to vector<64x4xbf16>
    %c0_21 = arith.constant 0 : index
    %c0_22 = arith.constant 0 : index
    %c0_23 = arith.constant 0 : index
    %9 = vector.load %arg4[%c0_21, %c0_22, %c0_23] : memref<9x4x4xbf16, #tpu.memory_space<vmem>>, vector<1x4x4xbf16>
    %10 = vector.shape_cast %9 : vector<1x4x4xbf16> to vector<4x4xbf16>
    %cst = arith.constant dense<0.000000e+00> : vector<64x4xf32>
    %11 = tpu.matmul %8, %10, %cst {dimension_numbers = #tpu.dot_dimension_numbers<[1], [0], [0], [1], [0, 0, 1, 1], [], []>} : vector<64x4xbf16>, vector<4x4xbf16>, vector<64x4xf32> -> vector<64x4xf32>
    %c0_24 = arith.constant 0 : index
    %c0_25 = arith.constant 0 : index
    %12 = vector.load %arg7[%c0_24, %c0_25] : memref<64x4xf32, #tpu.memory_space<vmem>>, vector<64x4xf32>
    tpu.vector_store %arg7[%c0_24, %c0_25], %11 {strides = array<i32>} : memref<64x4xf32, #tpu.memory_space<vmem>>, vector<64x4xf32>,
    %c0_26 = arith.constant 0 : index
    %c1 = arith.constant 1 : index
    %c0_27 = arith.constant 0 : index
    %c0_28 = arith.constant 0 : index
    %c0_29 = arith.constant 0 : index
    %13 = vector.load %arg2[%c0_26, %c1, %c0_27, %c0_28, %c0_29] : memref<1x4x8x9x4xbf16, #tpu.memory_space<vmem>>, vector<1x1x8x8x4xbf16>
    %14 = vector.shape_cast %13 : vector<1x1x8x8x4xbf16> to vector<8x8x4xbf16>
    %15 = vector.shape_cast %14 : vector<8x8x4xbf16> to vector<64x4xbf16>
    %c1_30 = arith.constant 1 : index
    %c0_31 = arith.constant 0 : index
    %c0_32 = arith.constant 0 : index
    %16 = vector.load %arg4[%c1_30, %c0_31, %c0_32] : memref<9x4x4xbf16, #tpu.memory_space<vmem>>, vector<1x4x4xbf16>
    %17 = vector.shape_cast %16 : vector<1x4x4xbf16> to vector<4x4xbf16>
    %cst_33 = arith.constant dense<0.000000e+00> : vector<64x4xf32>
    %18 = tpu.matmul %15, %17, %cst_33 {dimension_numbers = #tpu.dot_dimension_numbers<[1], [0], [0], [1], [0, 0, 1, 1], [], []>} : vector<64x4xbf16>, vector<4x4xbf16>, vector<64x4xf32> -> vector<64x4xf32>
    %c0_34 = arith.constant 0 : index
    %c0_35 = arith.constant 0 : index
    %19 = vector.load %arg7[%c0_34, %c0_35] : memref<64x4xf32, #tpu.memory_space<vmem>>, vector<64x4xf32>
    %20 = arith.addf %19, %18 : vector<64x4xf32>
    %c0_36 = arith.constant 0 : index
    %c0_37 = arith.constant 0 : index
    %21 = vector.load %arg7[%c0_36, %c0_37] : memref<64x4xf32, #tpu.memory_space<vmem>>, vector<64x4xf32>
    tpu.vector_store %arg7[%c0_36, %c0_37], %20 {strides = array<i32>} : memref<64x4xf32, #tpu.memory_space<vmem>>, vector<64x4xf32>,
    %c0_38 = arith.constant 0 : index
    %c0_39 = arith.constant 0 : index
    %c0_40 = arith.constant 0 : index
    %c1_41 = arith.constant 1 : index
    %c0_42 = arith.constant 0 : index
    %22 = vector.load %arg2[%c0_38, %c0_39, %c0_40, %c1_41, %c0_42] : memref<1x4x8x9x4xbf16, #tpu.memory_space<vmem>>, vector<1x1x8x8x4xbf16>
    %23 = vector.shape_cast %22 : vector<1x1x8x8x4xbf16> to vector<8x8x4xbf16>
    %24 = vector.shape_cast %23 : vector<8x8x4xbf16> to vector<64x4xbf16>
    %c2 = arith.constant 2 : index
    %c0_43 = arith.constant 0 : index
    %c0_44 = arith.constant 0 : index
    %25 = vector.load %arg4[%c2, %c0_43, %c0_44] : memref<9x4x4xbf16, #tpu.memory_space<vmem>>, vector<1x4x4xbf16>
    %26 = vector.shape_cast %25 : vector<1x4x4xbf16> to vector<4x4xbf16>
    %cst_45 = arith.constant dense<0.000000e+00> : vector<64x4xf32>
    %27 = tpu.matmul %24, %26, %cst_45 {dimension_numbers = #tpu.dot_dimension_numbers<[1], [0], [0], [1], [0, 0, 1, 1], [], []>} : vector<64x4xbf16>, vector<4x4xbf16>, vector<64x4xf32> -> vector<64x4xf32>
    %c0_46 = arith.constant 0 : index
    %c0_47 = arith.constant 0 : index
    %28 = vector.load %arg7[%c0_46, %c0_47] : memref<64x4xf32, #tpu.memory_space<vmem>>, vector<64x4xf32>
    %29 = arith.addf %28, %27 : vector<64x4xf32>
    %c0_48 = arith.constant 0 : index
    %c0_49 = arith.constant 0 : index
    %30 = vector.load %arg7[%c0_48, %c0_49] : memref<64x4xf32, #tpu.memory_space<vmem>>, vector<64x4xf32>
    tpu.vector_store %arg7[%c0_48, %c0_49], %29 {strides = array<i32>} : memref<64x4xf32, #tpu.memory_space<vmem>>, vector<64x4xf32>,
    %c0_50 = arith.constant 0 : index
    %c2_51 = arith.constant 2 : index
    %c0_52 = arith.constant 0 : index
    %c0_53 = arith.constant 0 : index
    %c0_54 = arith.constant 0 : index
    %31 = vector.load %arg2[%c0_50, %c2_51, %c0_52, %c0_53, %c0_54] : memref<1x4x8x9x4xbf16, #tpu.memory_space<vmem>>, vector<1x1x8x8x4xbf16>
    %32 = vector.shape_cast %31 : vector<1x1x8x8x4xbf16> to vector<8x8x4xbf16>
    %33 = vector.shape_cast %32 : vector<8x8x4xbf16> to vector<64x4xbf16>
    %c3 = arith.constant 3 : index
    %c0_55 = arith.constant 0 : index
    %c0_56 = arith.constant 0 : index
    %34 = vector.load %arg4[%c3, %c0_55, %c0_56] : memref<9x4x4xbf16, #tpu.memory_space<vmem>>, vector<1x4x4xbf16>
    %35 = vector.shape_cast %34 : vector<1x4x4xbf16> to vector<4x4xbf16>
    %cst_57 = arith.constant dense<0.000000e+00> : vector<64x4xf32>
    %36 = tpu.matmul %33, %35, %cst_57 {dimension_numbers = #tpu.dot_dimension_numbers<[1], [0], [0], [1], [0, 0, 1, 1], [], []>} : vector<64x4xbf16>, vector<4x4xbf16>, vector<64x4xf32> -> vector<64x4xf32>
    %c0_58 = arith.constant 0 : index
    %c0_59 = arith.constant 0 : index
    %37 = vector.load %arg7[%c0_58, %c0_59] : memref<64x4xf32, #tpu.memory_space<vmem>>, vector<64x4xf32>
    %38 = arith.addf %37, %36 : vector<64x4xf32>
    %c0_60 = arith.constant 0 : index
    %c0_61 = arith.constant 0 : index
    %39 = vector.load %arg7[%c0_60, %c0_61] : memref<64x4xf32, #tpu.memory_space<vmem>>, vector<64x4xf32>
    tpu.vector_store %arg7[%c0_60, %c0_61], %38 {strides = array<i32>} : memref<64x4xf32, #tpu.memory_space<vmem>>, vector<64x4xf32>,
    %c0_62 = arith.constant 0 : index
    %c3_63 = arith.constant 3 : index
    %c0_64 = arith.constant 0 : index
    %c0_65 = arith.constant 0 : index
    %c0_66 = arith.constant 0 : index
    %40 = vector.load %arg2[%c0_62, %c3_63, %c0_64, %c0_65, %c0_66] : memref<1x4x8x9x4xbf16, #tpu.memory_space<vmem>>, vector<1x1x8x8x4xbf16>
    %41 = vector.shape_cast %40 : vector<1x1x8x8x4xbf16> to vector<8x8x4xbf16>
    %42 = vector.shape_cast %41 : vector<8x8x4xbf16> to vector<64x4xbf16>
    %c4 = arith.constant 4 : index
    %c0_67 = arith.constant 0 : index
    %c0_68 = arith.constant 0 : index
    %43 = vector.load %arg4[%c4, %c0_67, %c0_68] : memref<9x4x4xbf16, #tpu.memory_space<vmem>>, vector<1x4x4xbf16>
    %44 = vector.shape_cast %43 : vector<1x4x4xbf16> to vector<4x4xbf16>
    %cst_69 = arith.constant dense<0.000000e+00> : vector<64x4xf32>
    %45 = tpu.matmul %42, %44, %cst_69 {dimension_numbers = #tpu.dot_dimension_numbers<[1], [0], [0], [1], [0, 0, 1, 1], [], []>} : vector<64x4xbf16>, vector<4x4xbf16>, vector<64x4xf32> -> vector<64x4xf32>
    %c0_70 = arith.constant 0 : index
    %c0_71 = arith.constant 0 : index
    %46 = vector.load %arg7[%c0_70, %c0_71] : memref<64x4xf32, #tpu.memory_space<vmem>>, vector<64x4xf32>
    %47 = arith.addf %46, %45 : vector<64x4xf32>
    %c0_72 = arith.constant 0 : index
    %c0_73 = arith.constant 0 : index
    %48 = vector.load %arg7[%c0_72, %c0_73] : memref<64x4xf32, #tpu.memory_space<vmem>>, vector<64x4xf32>
    tpu.vector_store %arg7[%c0_72, %c0_73], %47 {strides = array<i32>} : memref<64x4xf32, #tpu.memory_space<vmem>>, vector<64x4xf32>,
    %c0_74 = arith.constant 0 : index
    %c2_75 = arith.constant 2 : index
    %c0_76 = arith.constant 0 : index
    %c1_77 = arith.constant 1 : index
    %c0_78 = arith.constant 0 : index
    %49 = vector.load %arg2[%c0_74, %c2_75, %c0_76, %c1_77, %c0_78] : memref<1x4x8x9x4xbf16, #tpu.memory_space<vmem>>, vector<1x1x8x8x4xbf16>
    %50 = vector.shape_cast %49 : vector<1x1x8x8x4xbf16> to vector<8x8x4xbf16>
    %51 = vector.shape_cast %50 : vector<8x8x4xbf16> to vector<64x4xbf16>
    %c5 = arith.constant 5 : index
    %c0_79 = arith.constant 0 : index
    %c0_80 = arith.constant 0 : index
    %52 = vector.load %arg4[%c5, %c0_79, %c0_80] : memref<9x4x4xbf16, #tpu.memory_space<vmem>>, vector<1x4x4xbf16>
    %53 = vector.shape_cast %52 : vector<1x4x4xbf16> to vector<4x4xbf16>
    %cst_81 = arith.constant dense<0.000000e+00> : vector<64x4xf32>
    %54 = tpu.matmul %51, %53, %cst_81 {dimension_numbers = #tpu.dot_dimension_numbers<[1], [0], [0], [1], [0, 0, 1, 1], [], []>} : vector<64x4xbf16>, vector<4x4xbf16>, vector<64x4xf32> -> vector<64x4xf32>
    %c0_82 = arith.constant 0 : index
    %c0_83 = arith.constant 0 : index
    %55 = vector.load %arg7[%c0_82, %c0_83] : memref<64x4xf32, #tpu.memory_space<vmem>>, vector<64x4xf32>
    %56 = arith.addf %55, %54 : vector<64x4xf32>
    %c0_84 = arith.constant 0 : index
    %c0_85 = arith.constant 0 : index
    %57 = vector.load %arg7[%c0_84, %c0_85] : memref<64x4xf32, #tpu.memory_space<vmem>>, vector<64x4xf32>
    tpu.vector_store %arg7[%c0_84, %c0_85], %56 {strides = array<i32>} : memref<64x4xf32, #tpu.memory_space<vmem>>, vector<64x4xf32>,
    %c0_86 = arith.constant 0 : index
    %c1_87 = arith.constant 1 : index
    %c0_88 = arith.constant 0 : index
    %c0_89 = arith.constant 0 : index
    %58 = vector.load %arg8[%c0_86, %c1_87, %c0_88, %c0_89] : memref<2x9x9x4xbf16, #tpu.memory_space<vmem>>, vector<1x8x8x4xbf16>
    %59 = vector.shape_cast %58 : vector<1x8x8x4xbf16> to vector<8x8x4xbf16>
    %60 = vector.shape_cast %59 : vector<8x8x4xbf16> to vector<64x4xbf16>
    %c6 = arith.constant 6 : index
    %c0_90 = arith.constant 0 : index
    %c0_91 = arith.constant 0 : index
    %61 = vector.load %arg4[%c6, %c0_90, %c0_91] : memref<9x4x4xbf16, #tpu.memory_space<vmem>>, vector<1x4x4xbf16>
    %62 = vector.shape_cast %61 : vector<1x4x4xbf16> to vector<4x4xbf16>
    %cst_92 = arith.constant dense<0.000000e+00> : vector<64x4xf32>
    %63 = tpu.matmul %60, %62, %cst_92 {dimension_numbers = #tpu.dot_dimension_numbers<[1], [0], [0], [1], [0, 0, 1, 1], [], []>} : vector<64x4xbf16>, vector<4x4xbf16>, vector<64x4xf32> -> vector<64x4xf32>
    %c0_93 = arith.constant 0 : index
    %c0_94 = arith.constant 0 : index
    %64 = vector.load %arg7[%c0_93, %c0_94] : memref<64x4xf32, #tpu.memory_space<vmem>>, vector<64x4xf32>
    %65 = arith.addf %64, %63 : vector<64x4xf32>
    %c0_95 = arith.constant 0 : index
    %c0_96 = arith.constant 0 : index
    %66 = vector.load %arg7[%c0_95, %c0_96] : memref<64x4xf32, #tpu.memory_space<vmem>>, vector<64x4xf32>
    tpu.vector_store %arg7[%c0_95, %c0_96], %65 {strides = array<i32>} : memref<64x4xf32, #tpu.memory_space<vmem>>, vector<64x4xf32>,
    %c1_97 = arith.constant 1 : index
    %c1_98 = arith.constant 1 : index
    %c0_99 = arith.constant 0 : index
    %c0_100 = arith.constant 0 : index
    %67 = vector.load %arg8[%c1_97, %c1_98, %c0_99, %c0_100] : memref<2x9x9x4xbf16, #tpu.memory_space<vmem>>, vector<1x8x8x4xbf16>
    %68 = vector.shape_cast %67 : vector<1x8x8x4xbf16> to vector<8x8x4xbf16>
    %69 = vector.shape_cast %68 : vector<8x8x4xbf16> to vector<64x4xbf16>
    %c7 = arith.constant 7 : index
    %c0_101 = arith.constant 0 : index
    %c0_102 = arith.constant 0 : index
    %70 = vector.load %arg4[%c7, %c0_101, %c0_102] : memref<9x4x4xbf16, #tpu.memory_space<vmem>>, vector<1x4x4xbf16>
    %71 = vector.shape_cast %70 : vector<1x4x4xbf16> to vector<4x4xbf16>
    %cst_103 = arith.constant dense<0.000000e+00> : vector<64x4xf32>
    %72 = tpu.matmul %69, %71, %cst_103 {dimension_numbers = #tpu.dot_dimension_numbers<[1], [0], [0], [1], [0, 0, 1, 1], [], []>} : vector<64x4xbf16>, vector<4x4xbf16>, vector<64x4xf32> -> vector<64x4xf32>
    %c0_104 = arith.constant 0 : index
    %c0_105 = arith.constant 0 : index
    %73 = vector.load %arg7[%c0_104, %c0_105] : memref<64x4xf32, #tpu.memory_space<vmem>>, vector<64x4xf32>
    %74 = arith.addf %73, %72 : vector<64x4xf32>
    %c0_106 = arith.constant 0 : index
    %c0_107 = arith.constant 0 : index
    %75 = vector.load %arg7[%c0_106, %c0_107] : memref<64x4xf32, #tpu.memory_space<vmem>>, vector<64x4xf32>
    tpu.vector_store %arg7[%c0_106, %c0_107], %74 {strides = array<i32>} : memref<64x4xf32, #tpu.memory_space<vmem>>, vector<64x4xf32>,
    %c0_108 = arith.constant 0 : index
    %c1_109 = arith.constant 1 : index
    %c1_110 = arith.constant 1 : index
    %c0_111 = arith.constant 0 : index
    %76 = vector.load %arg8[%c0_108, %c1_109, %c1_110, %c0_111] : memref<2x9x9x4xbf16, #tpu.memory_space<vmem>>, vector<1x8x8x4xbf16>
    %77 = vector.shape_cast %76 : vector<1x8x8x4xbf16> to vector<8x8x4xbf16>
    %78 = vector.shape_cast %77 : vector<8x8x4xbf16> to vector<64x4xbf16>
    %c8_112 = arith.constant 8 : index
    %c0_113 = arith.constant 0 : index
    %c0_114 = arith.constant 0 : index
    %79 = vector.load %arg4[%c8_112, %c0_113, %c0_114] : memref<9x4x4xbf16, #tpu.memory_space<vmem>>, vector<1x4x4xbf16>
    %80 = vector.shape_cast %79 : vector<1x4x4xbf16> to vector<4x4xbf16>
    %cst_115 = arith.constant dense<0.000000e+00> : vector<64x4xf32>
    %81 = tpu.matmul %78, %80, %cst_115 {dimension_numbers = #tpu.dot_dimension_numbers<[1], [0], [0], [1], [0, 0, 1, 1], [], []>} : vector<64x4xbf16>, vector<4x4xbf16>, vector<64x4xf32> -> vector<64x4xf32>
    %c0_116 = arith.constant 0 : index
    %c0_117 = arith.constant 0 : index
    %82 = vector.load %arg7[%c0_116, %c0_117] : memref<64x4xf32, #tpu.memory_space<vmem>>, vector<64x4xf32>
    %83 = arith.addf %82, %81 : vector<64x4xf32>
    %c0_118 = arith.constant 0 : index
    %c0_119 = arith.constant 0 : index
    %84 = vector.load %arg7[%c0_118, %c0_119] : memref<64x4xf32, #tpu.memory_space<vmem>>, vector<64x4xf32>
    tpu.vector_store %arg7[%c0_118, %c0_119], %83 {strides = array<i32>} : memref<64x4xf32, #tpu.memory_space<vmem>>, vector<64x4xf32>,
    %c0_120 = arith.constant 0 : index
    %c0_121 = arith.constant 0 : index
    %85 = vector.load %arg7[%c0_120, %c0_121] : memref<64x4xf32, #tpu.memory_space<vmem>>, vector<64x4xf32>
    %c0_122 = arith.constant 0 : index
    %c0_123 = arith.constant 0 : index
    %86 = vector.load %arg5[%c0_122, %c0_123] : memref<1x4xf32, #tpu.memory_space<vmem>>, vector<1x4xf32>
    %87 = vector.broadcast %86 : vector<1x4xf32> to vector<64x4xf32>
    %88 = arith.addf %85, %87 : vector<64x4xf32>
    %cst_124 = arith.constant 0.000000e+00 : f32
    %89 = vector.broadcast %cst_124 : f32 to vector<64x4xf32>
    %90 = arith.maximumf %88, %89 : vector<64x4xf32>
    %91 = tpu.transpose %90, [1, 0] : vector<64x4xf32> -> vector<4x64xf32>
    %92 = arith.truncf %91 : vector<4x64xf32> to vector<4x64xbf16>
    %c0_125 = arith.constant 0 : index
    %c0_126 = arith.constant 0 : index
    %c0_127 = arith.constant 0 : index
    %93 = vector.load %arg6[%c0_125, %c0_126, %c0_127] : memref<1x8x64xbf16, #tpu.memory_space<vmem>>, vector<1x4x64xbf16>
    %94 = vector.shape_cast %93 : vector<1x4x64xbf16> to vector<4x64xbf16>
    %95 = vector.shape_cast %92 : vector<4x64xbf16> to vector<1x4x64xbf16>
    tpu.vector_store %arg6[%c0_125, %c0_126, %c0_127], %95 {strides = array<i32>} : memref<1x8x64xbf16, #tpu.memory_space<vmem>>, vector<1x4x64xbf16>,
    %c0_128 = arith.constant 0 : index
    %c3_129 = arith.constant 3 : index
    %c0_130 = arith.constant 0 : index
    %c0_131 = arith.constant 0 : index
    %c0_132 = arith.constant 0 : index
    %96 = vector.load %arg2[%c0_128, %c3_129, %c0_130, %c0_131, %c0_132] : memref<1x4x8x9x4xbf16, #tpu.memory_space<vmem>>, vector<1x1x8x8x4xbf16>
    %97 = vector.shape_cast %96 : vector<1x1x8x8x4xbf16> to vector<8x8x4xbf16>
    %c0_133 = arith.constant 0 : index
    %c2_134 = arith.constant 2 : index
    %c0_135 = arith.constant 0 : index
    %c1_136 = arith.constant 1 : index
    %c0_137 = arith.constant 0 : index
    %98 = vector.load %arg2[%c0_133, %c2_134, %c0_135, %c1_136, %c0_137] : memref<1x4x8x9x4xbf16, #tpu.memory_space<vmem>>, vector<1x1x8x8x4xbf16>
    %99 = vector.shape_cast %98 : vector<1x1x8x8x4xbf16> to vector<8x8x4xbf16>
    %c1_138 = arith.constant 1 : index
    %c1_139 = arith.constant 1 : index
    %c0_140 = arith.constant 0 : index
    %c0_141 = arith.constant 0 : index
    %100 = vector.load %arg8[%c1_138, %c1_139, %c0_140, %c0_141] : memref<2x9x9x4xbf16, #tpu.memory_space<vmem>>, vector<1x8x8x4xbf16>
    %101 = vector.shape_cast %100 : vector<1x8x8x4xbf16> to vector<8x8x4xbf16>
    %c0_142 = arith.constant 0 : index
    %c1_143 = arith.constant 1 : index
    %c1_144 = arith.constant 1 : index
    %c0_145 = arith.constant 0 : index
    %102 = vector.load %arg8[%c0_142, %c1_143, %c1_144, %c0_145] : memref<2x9x9x4xbf16, #tpu.memory_space<vmem>>, vector<1x8x8x4xbf16>
    %103 = vector.shape_cast %102 : vector<1x8x8x4xbf16> to vector<8x8x4xbf16>
    %104 = arith.maximumf %97, %99 : vector<8x8x4xbf16>
    %105 = arith.maximumf %101, %103 : vector<8x8x4xbf16>
    %106 = arith.maximumf %104, %105 : vector<8x8x4xbf16>
    %107 = vector.shape_cast %106 : vector<8x8x4xbf16> to vector<64x4xbf16>
    %108 = arith.extf %107 : vector<64x4xbf16> to vector<64x4xf32>
    %109 = tpu.transpose %108, [1, 0] : vector<64x4xf32> -> vector<4x64xf32>
    %110 = arith.truncf %109 : vector<4x64xf32> to vector<4x64xbf16>
    %c0_146 = arith.constant 0 : index
    %c4_147 = arith.constant 4 : index
    %c0_148 = arith.constant 0 : index
    %111 = vector.load %arg6[%c0_146, %c4_147, %c0_148] : memref<1x8x64xbf16, #tpu.memory_space<vmem>>, vector<1x4x64xbf16>
    %112 = vector.shape_cast %111 : vector<1x4x64xbf16> to vector<4x64xbf16>
    %113 = vector.shape_cast %110 : vector<4x64xbf16> to vector<1x4x64xbf16>
    tpu.vector_store %arg6[%c0_146, %c4_147, %c0_148], %113 {strides = array<i32>} : memref<1x8x64xbf16, #tpu.memory_space<vmem>>, vector<1x4x64xbf16>,
    return
  }
  func.func @transform_0(%arg0: i32, %arg1: i32) -> (i32, i32, i32, i32, i32) {
    %c0_i32 = arith.constant 0 : i32
    %c0_i32_0 = arith.constant 0 : i32
    %c0_i32_1 = arith.constant 0 : i32
    %c0_i32_2 = arith.constant 0 : i32
    return %arg0, %c0_i32, %arg1, %c0_i32_0, %c0_i32_1 : i32, i32, i32, i32, i32
  }
  func.func @transform_1(%arg0: i32, %arg1: i32) -> (i32, i32, i32, i32, i32) {
    %c1_i32 = arith.constant 1 : i32
    %0 = arith.addi %arg1, %c1_i32 : i32
    %c8_i32 = arith.constant 8 : i32
    %1 = arith.muli %0, %c8_i32 : i32
    %c0_i32 = arith.constant 0 : i32
    %c0_i32_0 = arith.constant 0 : i32
    %c0_i32_1 = arith.constant 0 : i32
    %c0_i32_2 = arith.constant 0 : i32
    return %arg0, %c0_i32, %1, %c0_i32_0, %c0_i32_1 : i32, i32, i32, i32, i32
  }
  func.func @transform_2(%arg0: i32, %arg1: i32) -> (i32, i32, i32) {
    %c0_i32 = arith.constant 0 : i32
    %c0_i32_0 = arith.constant 0 : i32
    %c0_i32_1 = arith.constant 0 : i32
    %c0_i32_2 = arith.constant 0 : i32
    return %c0_i32, %c0_i32_0, %c0_i32_1 : i32, i32, i32
  }
  func.func @transform_3(%arg0: i32, %arg1: i32) -> (i32, i32) {
    %c0_i32 = arith.constant 0 : i32
    %c0_i32_0 = arith.constant 0 : i32
    %c0_i32_1 = arith.constant 0 : i32
    return %c0_i32, %c0_i32_0 : i32, i32
  }
  func.func @transform_4(%arg0: i32, %arg1: i32) -> (i32, i32, i32) {
    %c0_i32 = arith.constant 0 : i32
    %c0_i32_0 = arith.constant 0 : i32
    return %arg0, %c0_i32, %arg1 : i32, i32, i32
  }
}

</mosaic_0001>

<llo_original>
// kernel: _lambda_.1
$region0: #{_lambda_.1}
  #allocation0 [shape = 'u32[]', space=smem, size = 0x4, offset = 0x4, fixed_abs, tag = 'smem constant byte address 0x4 - core index']
  #allocation1 [shape = 'u32[144,128]{1,0:T(1,128)}', space=vmem, size = 0x12000, scoped, tag = 'internal scratch']
  #allocation2 [shape = 'f32[64,4]{1,0:T(8,128)}', space=vmem, size = 0x8000, scoped, tag = 'scratch operand']
  #allocation3 [shape = 'bf16[2,9,9,4]{3,2,1,0:T(8,128)(2,1)}', space=vmem, size = 0x12000, scoped, tag = 'scratch operand']
  %s0 = inlined_call_operand.vmem [shape: bf16[2,4,9,9,4], index: 0, kind: input, shape index: {}, may-alias: {0,1}]
  %s1 = inlined_call_operand.vmem [shape: bf16[2,4,9,9,4], index: 1, kind: input, shape index: {}, may-alias: {0,1}]
  %s2 = inlined_call_operand.vmem [shape: bf16[9,4,4], index: 2, kind: input, shape index: {}]
  %s3 = inlined_call_operand.vmem [shape: f32[1,4], index: 3, kind: input, shape index: {}]
  %s4 = inlined_call_operand.vmem [shape: bf16[2,8,64], index: 4, kind: output, shape index: {}]
  %s5 = sld [smem:[#allocation0]]
  $region152: #{_lambda_.1} parent=0
    _
  %s7 = ssub.s32 1, %s5
  %s8 = scalar_select 0, %s7, %s5
  $region1: #{_lambda_.1} parent=0
    #allocation4 [shape = 'u8[262144]{0}', space=vmem, size = 0x40000, scoped, tag = 'input window, operand 0']
    #allocation5 [shape = 'u8[16384]{0}', space=vmem, size = 0x4000, scoped, tag = 'input window, operand 1']
    loop: start=0, step=1, limit=4
    $region2: #{_lambda_.1} parent=1 // loop_pre_header
      _
    $region3: #{_lambda_.1} parent=1 // loop_header
      %s10 = sphi 0, %s14
      %p11 = scmp.ge.s32.totalorder %s10, 4
      %s17 = sphi 0, %s29
      %s18 = sphi 0, %s25
      %s19 = sphi 0, %s17
      %s20 = sphi 0, %s18
      %s21 = sphi 0, %s19
      %s22 = sphi 0, %s20
      %s34 = sphi 0, %s36
      %s37 = sphi 0, %s34
      %s38 = sphi 0, %s37
      %s54 = sphi 0, %s38
      %s66 = sphi 0, %s68
      %s69 = sphi 0, %s66
      %s70 = sphi 0, %s69
      %s86 = sphi 0, %s70
      %s90 = sphi 0, %s90
      %s92 = sphi 0, %s90
      %s93 = sphi 0, %s92
      %s107 = sphi 0, %s93
      %s111 = sphi 0, %s111
      %s113 = sphi 0, %s111
      %s114 = sphi 0, %s113
      %s128 = sphi 0, %s114
      %s136 = sphi 0, %s138
      %s139 = sphi 0, %s136
      %s140 = sphi 0, %s139
      %s156 = sphi 0, %s140
    $region4: #{_lambda_.1} parent=1 // loop_header_branch
      %13 = sbr.rel (%p11) target = $region8
    $region5: #{_lambda_.1} parent=1 // loop_body
      %s15 = ssub.s32 %s10, 1
      %s16 = ssub.s32 %s10, 2
      %s23 = sadd.s32 1, %s18
      %p24 = scmp.ge.s32.totalorder %s23, 1
      %s25 = scalar_select %p24, 0, %s23
      %s26 = sadd.s32 1, %s17
      %s27 = scalar_select %p24, %s26, %s17
      %p28 = scmp.ge.s32.totalorder %s27, 2
      %s29 = scalar_select %p28, 0, %s27
      %s30 = ssub.s32 %s17, %s29
      %s31 = ssub.s32 %s18, %s25
      %s32 = sor.u32 %s30, %s31
      %p33 = scmp.eq.s32.totalorder %s32, 0
      %s35 = sadd.s32 %s34, 1
      %s36 = scalar_select %p33, %s34, %s35
      %p39 = pneg %p33
      %p40 = scmp.eq.s32.totalorder %s10, 1
      %p41 = por %p39, %p40
      %p42 = scmp.ne.s32.totalorder %s34, %s37
      %p43 = scmp.eq.s32.totalorder %s10, 0
      %p44 = por %p42, %p43
      %p45 = scmp.ne.s32.totalorder %s34, %s37
      %p46 = scmp.eq.s32.totalorder %s15, 1
      %p47 = por %p45, %p46
      %p48 = scmp.ne.s32.totalorder %s37, %s38
      %p49 = scmp.eq.s32.totalorder %s15, 0
      %p50 = por %p48, %p49
      %p51 = scmp.ne.s32.totalorder %s37, %s38
      %p52 = scmp.eq.s32.totalorder %s16, 1
      %p53 = por %p51, %p52
      %p55 = scmp.ne.s32.totalorder %s38, %s54
      %p56 = scmp.eq.s32.totalorder %s16, 0
      %p57 = por %p55, %p56
      %s58 = sadd.s32 %s18, 1
      %s59 = smul.u32 %s58, 8
      %s60 = sadd.s32 %s25, 1
      %s61 = smul.u32 %s60, 8
      %s62 = ssub.s32 %s17, %s29
      %s63 = ssub.s32 %s59, %s61
      %s64 = sor.u32 %s62, %s63
      %p65 = scmp.eq.s32.totalorder %s64, 0
      %s67 = sadd.s32 %s66, 1
      %s68 = scalar_select %p65, %s66, %s67
      %p71 = pneg %p65
      %p72 = scmp.eq.s32.totalorder %s10, 1
      %p73 = por %p71, %p72
      %p74 = scmp.ne.s32.totalorder %s66, %s69
      %p75 = scmp.eq.s32.totalorder %s10, 0
      %p76 = por %p74, %p75
      %p77 = scmp.ne.s32.totalorder %s66, %s69
      %p78 = scmp.eq.s32.totalorder %s15, 1
      %p79 = por %p77, %p78
      %p80 = scmp.ne.s32.totalorder %s69, %s70
      %p81 = scmp.eq.s32.totalorder %s15, 0
      %p82 = por %p80, %p81
      %p83 = scmp.ne.s32.totalorder %s69, %s70
      %p84 = scmp.eq.s32.totalorder %s16, 1
      %p85 = por %p83, %p84
      %p87 = scmp.ne.s32.totalorder %s70, %s86
      %p88 = scmp.eq.s32.totalorder %s16, 0
      %p89 = por %p87, %p88
      %s91 = sadd.s32 %s90, 1
      %p94 = scmp.eq.s32.totalorder %s10, 1
      %p95 = scmp.ne.s32.totalorder %s90, %s92
      %p96 = scmp.eq.s32.totalorder %s10, 0
      %p97 = por %p95, %p96
      %p98 = scmp.ne.s32.totalorder %s90, %s92
      %p99 = scmp.eq.s32.totalorder %s15, 1
      %p100 = por %p98, %p99
      %p101 = scmp.ne.s32.totalorder %s92, %s93
      %p102 = scmp.eq.s32.totalorder %s15, 0
      %p103 = por %p101, %p102
      %p104 = scmp.ne.s32.totalorder %s92, %s93
      %p105 = scmp.eq.s32.totalorder %s16, 1
      %p106 = por %p104, %p105
      %p108 = scmp.ne.s32.totalorder %s93, %s107
      %p109 = scmp.eq.s32.totalorder %s16, 0
      %p110 = por %p108, %p109
      %s112 = sadd.s32 %s111, 1
      %p115 = scmp.eq.s32.totalorder %s10, 1
      %p116 = scmp.ne.s32.totalorder %s111, %s113
      %p117 = scmp.eq.s32.totalorder %s10, 0
      %p118 = por %p116, %p117
      %p119 = scmp.ne.s32.totalorder %s111, %s113
      %p120 = scmp.eq.s32.totalorder %s15, 1
      %p121 = por %p119, %p120
      %p122 = scmp.ne.s32.totalorder %s113, %s114
      %p123 = scmp.eq.s32.totalorder %s15, 0
      %p124 = por %p122, %p123
      %p125 = scmp.ne.s32.totalorder %s113, %s114
      %p126 = scmp.eq.s32.totalorder %s16, 1
      %p127 = por %p125, %p126
      %p129 = scmp.ne.s32.totalorder %s114, %s128
      %p130 = scmp.eq.s32.totalorder %s16, 0
      %p131 = por %p129, %p130
      %s132 = ssub.s32 %s17, %s29
      %s133 = ssub.s32 %s18, %s25
      %s134 = sor.u32 %s132, %s133
      %p135 = scmp.eq.s32.totalorder %s134, 0
      %s137 = sadd.s32 %s136, 1
      %s138 = scalar_select %p135, %s136, %s137
      %p141 = pneg %p135
      %p142 = scmp.eq.s32.totalorder %s10, 1
      %p143 = por %p141, %p142
      %p144 = scmp.ne.s32.totalorder %s136, %s139
      %p145 = scmp.eq.s32.totalorder %s10, 0
      %p146 = por %p144, %p145
      %p147 = scmp.ne.s32.totalorder %s136, %s139
      %p148 = scmp.eq.s32.totalorder %s15, 1
      %p149 = por %p147, %p148
      %p150 = scmp.ne.s32.totalorder %s139, %s140
      %p151 = scmp.eq.s32.totalorder %s15, 0
      %p152 = por %p150, %p151
      %p153 = scmp.ne.s32.totalorder %s139, %s140
      %p154 = scmp.eq.s32.totalorder %s16, 1
      %p155 = por %p153, %p154
      %p157 = scmp.ne.s32.totalorder %s140, %s156
      %p158 = scmp.eq.s32.totalorder %s16, 0
      %p159 = por %p157, %p158
      %p160 = scmp.le.s32.totalorder 1, %s10
      %p161 = scmp.lt.s32.totalorder %s10, 3
      %p162 = pnand %p160, %p161
      %p163 = pneg %p162
      // Predicated region
      $region9: #{_lambda_.1} parent=5 // pred_check
        _
      $region10: #{_lambda_.1} parent=5 // pred_check_branch
        %165 = sbr.rel (%p162) target = $region12
      $region11: #{_lambda_.1} parent=5 // pred_region
        %s166 = ssub.s32 %s10, 1
        // Predicated region
        $region13: #{_lambda_.1} parent=11 // pred_check
          %p167 = pneg %p103
        $region14: #{_lambda_.1} parent=11 // pred_check_branch
          %169 = sbr.rel (%p167) target = $region16
        $region15: #{_lambda_.1} parent=11 // pred_region
          _
        $region16: #{_lambda_.1} parent=11 // pred_fallthru
          _
        // Predicated region
        $region17: #{_lambda_.1} parent=11 // pred_check
          %p170 = pneg %p124
        $region18: #{_lambda_.1} parent=11 // pred_check_branch
          %172 = sbr.rel (%p170) target = $region20
        $region19: #{_lambda_.1} parent=11 // pred_region
          _
        $region20: #{_lambda_.1} parent=11 // pred_fallthru
          _
      $region12: #{_lambda_.1} parent=5 // pred_fallthru
        _
      %p173 = scmp.lt.s32.totalorder %s10, 2
      // Predicated region
      $region21: #{_lambda_.1} parent=5 // pred_check
        %p174 = pneg %p173
      $region22: #{_lambda_.1} parent=5 // pred_check_branch
        %176 = sbr.rel (%p174) target = $region24
      $region23: #{_lambda_.1} parent=5 // pred_region
        // Predicated region
        $region25: #{_lambda_.1} parent=23 // pred_check
          %p177 = pneg %p44
        $region26: #{_lambda_.1} parent=23 // pred_check_branch
          %179 = sbr.rel (%p177) target = $region28
        $region27: #{_lambda_.1} parent=23 // pred_region
          %s180 = sand.u32 %s34, 1
          %s181 = sand.u32 %s34, 1
          %s182 = smul.addr %s181, 256
          %s183 = scalar_lea.vmem [#allocation4], %s182
          %s184 = smul.u32 8, %s18
          %s185 = ssub.s32 9, %s184
          %p186 = scmp.lt.s32.totalorder %s185, 8
          %s187 = scalar_select %p186, %s185, 8
          %s188 = smul.u32 256, %s187
          %s189 = smul.u32 %s188, 2
          %p190 = scmp.ne.s32.totalorder 0, %s189
          %s191 = smul.addr %s184, 2
          %s192 = smul.addr %s17, 72
          %s193 = sadd.s32 %s191, %s192
          %s194 = smul.addr %s193, 4
          %s195 = scalar_lea.vmem %s0, %s194
          %s196 = smul.u32 %s187, 2
          // Predicated region
          $region29: #{_lambda_.1} parent=27 // pred_check
            %p197 = pneg %p190
          $region30: #{_lambda_.1} parent=27 // pred_check_branch
            %199 = sbr.rel (%p197) target = $region32
          $region31: #{_lambda_.1} parent=27 // pred_region
            // Predicated region
            $region33: #{_lambda_.1} parent=31 // pred_check
              _
            $region34: #{_lambda_.1} parent=31 // pred_check_branch
              %201 = sbr.rel target = $region36
            $region35: #{_lambda_.1} parent=31 // pred_region
              // Predicated region
              $region55: #{_lambda_.1} parent=35 // pred_check
                _
              $region56: #{_lambda_.1} parent=35 // pred_check_branch
                %382 = sbr.rel (0) target = $region58
              $region57: #{_lambda_.1} parent=35 // pred_region
                %s383 = sshrl.u32 %s196, 4
                // While loop
                $region59: #{_lambda_.1} parent=57 // loop_pre_header
                  _
                $region60: #{_lambda_.1} parent=57 // loop_header
                  %s385 = sphi 0, %s387
                  %p386 = scmp.ge.s32.totalorder %s385, %s383
                  %s390 = sphi 0, %s395
                  %s391 = sphi %s195, %s398
                  %s392 = sphi %s183, %s399
                $region61: #{_lambda_.1} parent=57 // loop_header_branch
                  %389 = sbr.rel (%p386) target = $region65
                $region62: #{_lambda_.1} parent=57 // loop_body
                  %s393 = sadd.s32 1, %s390
                  %p394 = scmp.ge.s32.totalorder %s393, %s383
                  %s395 = scalar_select %p394, 0, %s393
                  %s396 = smul.u32 %s395, 64
                  %s397 = smul.u32 %s395, 64
                  %s398 = scalar_lea.vmem %s195, %s396
                  %s399 = scalar_lea.vmem %s183, %s397 [#allocation4]
                $region63: #{_lambda_.1} parent=57 // loop_footer
                  %s387 = sadd.s32 %s385, 1
                $region64: #{_lambda_.1} parent=57 // loop_footer_branch
                  %384 = sbr.rel target = $region60
                $region65: #{_lambda_.1} parent=57 // loop_exit
                  _
                %s400 = sshrl.u32 %s196, 4
                %s401 = sand.u32 %s196, 15
                %s402 = smul.u32 %s400, 16
                %s403 = smul.u32 4, %s402
                %s404 = scalar_lea.vmem %s195, %s403
                %s405 = smul.u32 4, %s402
                %s406 = scalar_lea.vmem %s183, %s405 [#allocation4]
                // While loop
                $region66: #{_lambda_.1} parent=57 // loop_pre_header
                  _
                $region67: #{_lambda_.1} parent=57 // loop_header
                  %s408 = sphi 0, %s410
                  %p409 = scmp.ge.s32.totalorder %s408, %s401
                  %s413 = sphi 0, %s418
                  %s414 = sphi %s404, %s421
                  %s415 = sphi %s406, %s422
                $region68: #{_lambda_.1} parent=57 // loop_header_branch
                  %412 = sbr.rel (%p409) target = $region72
                $region69: #{_lambda_.1} parent=57 // loop_body
                  %s416 = sadd.s32 1, %s413
                  %p417 = scmp.ge.s32.totalorder %s416, %s401
                  %s418 = scalar_select %p417, 0, %s416
                  %s419 = smul.u32 %s418, 4
                  %s420 = smul.u32 %s418, 4
                  %s421 = scalar_lea.vmem %s404, %s419
                  %s422 = scalar_lea.vmem %s406, %s420 [#allocation4]
                $region70: #{_lambda_.1} parent=57 // loop_footer
                  %s410 = sadd.s32 %s408, 1
                $region71: #{_lambda_.1} parent=57 // loop_footer_branch
                  %407 = sbr.rel target = $region67
                $region72: #{_lambda_.1} parent=57 // loop_exit
                  _
                %s424 = sshrl.u32 %s196, 4
                // While loop
                $region73: #{_lambda_.1} parent=57 // loop_pre_header
                  _
                $region74: #{_lambda_.1} parent=57 // loop_header
                  %s426 = sphi 0, %s428
                  %p427 = scmp.ge.s32.totalorder %s426, %s424
                  %s431 = sphi 0, %s564
                  %s432 = sphi %s195, %s567
                  %s433 = sphi %s183, %s568
                $region75: #{_lambda_.1} parent=57 // loop_header_branch
                  %430 = sbr.rel (%p427) target = $region79
                $region76: #{_lambda_.1} parent=57 // loop_body
                  %v434 = vld [vmem:[%s432] sm:$0xf]
                  %435 = vst [vmem:[%s433] sm:$0xf] %v434
                  %v436 = vld [vmem:[%s432 + $0x4] sm:$0xf]
                  %437 = vst [vmem:[%s433 + $0x4] sm:$0xf] %v436
                  %v438 = vld [vmem:[%s432 + $0x8] sm:$0xf]
                  %439 = vst [vmem:[%s433 + $0x8] sm:$0xf] %v438
                  %v440 = vld [vmem:[%s432 + $0xc] sm:$0xf]
                  %441 = vst [vmem:[%s433 + $0xc] sm:$0xf] %v440
                  %v442 = vld [vmem:[%s432 + $0x10] sm:$0xf]
                  %443 = vst [vmem:[%s433 + $0x10] sm:$0xf] %v442
                  %v444 = vld [vmem:[%s432 + $0x14] sm:$0xf]
                  %445 = vst [vmem:[%s433 + $0x14] sm:$0xf] %v444
                  %v446 = vld [vmem:[%s432 + $0x18] sm:$0xf]
                  %447 = vst [vmem:[%s433 + $0x18] sm:$0xf] %v446
                  %v448 = vld [vmem:[%s432 + $0x1c] sm:$0xf]
                  %449 = vst [vmem:[%s433 + $0x1c] sm:$0xf] %v448
                  %v450 = vld [vmem:[%s432 + $0x20] sm:$0xf]
                  %451 = vst [vmem:[%s433 + $0x20] sm:$0xf] %v450
                  %v452 = vld [vmem:[%s432 + $0x24] sm:$0xf]
                  %453 = vst [vmem:[%s433 + $0x24] sm:$0xf] %v452
                  %v454 = vld [vmem:[%s432 + $0x28] sm:$0xf]
                  %455 = vst [vmem:[%s433 + $0x28] sm:$0xf] %v454
                  %v456 = vld [vmem:[%s432 + $0x2c] sm:$0xf]
                  %457 = vst [vmem:[%s433 + $0x2c] sm:$0xf] %v456
                  %v458 = vld [vmem:[%s432 + $0x30] sm:$0xf]
                  %459 = vst [vmem:[%s433 + $0x30] sm:$0xf] %v458
                  %v460 = vld [vmem:[%s432 + $0x34] sm:$0xf]
                  %461 = vst [vmem:[%s433 + $0x34] sm:$0xf] %v460
                  %v462 = vld [vmem:[%s432 + $0x38] sm:$0xf]
                  %463 = vst [vmem:[%s433 + $0x38] sm:$0xf] %v462
                  %v464 = vld [vmem:[%s432 + $0x3c] sm:$0xf]
                  %465 = vst [vmem:[%s433 + $0x3c] sm:$0xf] %v464
                  %v466 = vld [vmem:[%s432 + $0x48] sm:$0xf]
                  %467 = vst [vmem:[%s433 + $0x40] sm:$0xf] %v466
                  %v468 = vld [vmem:[%s432 + $0x4c] sm:$0xf]
                  %469 = vst [vmem:[%s433 + $0x44] sm:$0xf] %v468
                  %v470 = vld [vmem:[%s432 + $0x50] sm:$0xf]
                  %471 = vst [vmem:[%s433 + $0x48] sm:$0xf] %v470
                  %v472 = vld [vmem:[%s432 + $0x54] sm:$0xf]
                  %473 = vst [vmem:[%s433 + $0x4c] sm:$0xf] %v472
                  %v474 = vld [vmem:[%s432 + $0x58] sm:$0xf]
                  %475 = vst [vmem:[%s433 + $0x50] sm:$0xf] %v474
                  %v476 = vld [vmem:[%s432 + $0x5c] sm:$0xf]
                  %477 = vst [vmem:[%s433 + $0x54] sm:$0xf] %v476
                  %v478 = vld [vmem:[%s432 + $0x60] sm:$0xf]
                  %479 = vst [vmem:[%s433 + $0x58] sm:$0xf] %v478
                  %v480 = vld [vmem:[%s432 + $0x64] sm:$0xf]
                  %481 = vst [vmem:[%s433 + $0x5c] sm:$0xf] %v480
                  %v482 = vld [vmem:[%s432 + $0x68] sm:$0xf]
                  %483 = vst [vmem:[%s433 + $0x60] sm:$0xf] %v482
                  %v484 = vld [vmem:[%s432 + $0x6c] sm:$0xf]
                  %485 = vst [vmem:[%s433 + $0x64] sm:$0xf] %v484
                  %v486 = vld [vmem:[%s432 + $0x70] sm:$0xf]
                  %487 = vst [vmem:[%s433 + $0x68] sm:$0xf] %v486
                  %v488 = vld [vmem:[%s432 + $0x74] sm:$0xf]
                  %489 = vst [vmem:[%s433 + $0x6c] sm:$0xf] %v488
                  %v490 = vld [vmem:[%s432 + $0x78] sm:$0xf]
                  %491 = vst [vmem:[%s433 + $0x70] sm:$0xf] %v490
                  %v492 = vld [vmem:[%s432 + $0x7c] sm:$0xf]
                  %493 = vst [vmem:[%s433 + $0x74] sm:$0xf] %v492
                  %v494 = vld [vmem:[%s432 + $0x80] sm:$0xf]
                  %495 = vst [vmem:[%s433 + $0x78] sm:$0xf] %v494
                  %v496 = vld [vmem:[%s432 + $0x84] sm:$0xf]
                  %497 = vst [vmem:[%s433 + $0x7c] sm:$0xf] %v496
                  %v498 = vld [vmem:[%s432 + $0x90] sm:$0xf]
                  %499 = vst [vmem:[%s433 + $0x80] sm:$0xf] %v498
                  %v500 = vld [vmem:[%s432 + $0x94] sm:$0xf]
                  %501 = vst [vmem:[%s433 + $0x84] sm:$0xf] %v500
                  %v502 = vld [vmem:[%s432 + $0x98] sm:$0xf]
                  %503 = vst [vmem:[%s433 + $0x88] sm:$0xf] %v502
                  %v504 = vld [vmem:[%s432 + $0x9c] sm:$0xf]
                  %505 = vst [vmem:[%s433 + $0x8c] sm:$0xf] %v504
                  %v506 = vld [vmem:[%s432 + $0xa0] sm:$0xf]
                  %507 = vst [vmem:[%s433 + $0x90] sm:$0xf] %v506
                  %v508 = vld [vmem:[%s432 + $0xa4] sm:$0xf]
                  %509 = vst [vmem:[%s433 + $0x94] sm:$0xf] %v508
                  %v510 = vld [vmem:[%s432 + $0xa8] sm:$0xf]
                  %511 = vst [vmem:[%s433 + $0x98] sm:$0xf] %v510
                  %v512 = vld [vmem:[%s432 + $0xac] sm:$0xf]
                  %513 = vst [vmem:[%s433 + $0x9c] sm:$0xf] %v512
                  %v514 = vld [vmem:[%s432 + $0xb0] sm:$0xf]
                  %515 = vst [vmem:[%s433 + $0xa0] sm:$0xf] %v514
                  %v516 = vld [vmem:[%s432 + $0xb4] sm:$0xf]
                  %517 = vst [vmem:[%s433 + $0xa4] sm:$0xf] %v516
                  %v518 = vld [vmem:[%s432 + $0xb8] sm:$0xf]
                  %519 = vst [vmem:[%s433 + $0xa8] sm:$0xf] %v518
                  %v520 = vld [vmem:[%s432 + $0xbc] sm:$0xf]
                  %521 = vst [vmem:[%s433 + $0xac] sm:$0xf] %v520
                  %v522 = vld [vmem:[%s432 + $0xc0] sm:$0xf]
                  %523 = vst [vmem:[%s433 + $0xb0] sm:$0xf] %v522
                  %v524 = vld [vmem:[%s432 + $0xc4] sm:$0xf]
                  %525 = vst [vmem:[%s433 + $0xb4] sm:$0xf] %v524
                  %v526 = vld [vmem:[%s432 + $0xc8] sm:$0xf]
                  %527 = vst [vmem:[%s433 + $0xb8] sm:$0xf] %v526
                  %v528 = vld [vmem:[%s432 + $0xcc] sm:$0xf]
                  %529 = vst [vmem:[%s433 + $0xbc] sm:$0xf] %v528
                  %v530 = vld [vmem:[%s432 + $0xd8] sm:$0xf]
                  %531 = vst [vmem:[%s433 + $0xc0] sm:$0xf] %v530
                  %v532 = vld [vmem:[%s432 + $0xdc] sm:$0xf]
                  %533 = vst [vmem:[%s433 + $0xc4] sm:$0xf] %v532
                  %v534 = vld [vmem:[%s432 + $0xe0] sm:$0xf]
                  %535 = vst [vmem:[%s433 + $0xc8] sm:$0xf] %v534
                  %v536 = vld [vmem:[%s432 + $0xe4] sm:$0xf]
                  %537 = vst [vmem:[%s433 + $0xcc] sm:$0xf] %v536
                  %v538 = vld [vmem:[%s432 + $0xe8] sm:$0xf]
                  %539 = vst [vmem:[%s433 + $0xd0] sm:$0xf] %v538
                  %v540 = vld [vmem:[%s432 + $0xec] sm:$0xf]
                  %541 = vst [vmem:[%s433 + $0xd4] sm:$0xf] %v540
                  %v542 = vld [vmem:[%s432 + $0xf0] sm:$0xf]
                  %543 = vst [vmem:[%s433 + $0xd8] sm:$0xf] %v542
                  %v544 = vld [vmem:[%s432 + $0xf4] sm:$0xf]
                  %545 = vst [vmem:[%s433 + $0xdc] sm:$0xf] %v544
                  %v546 = vld [vmem:[%s432 + $0xf8] sm:$0xf]
                  %547 = vst [vmem:[%s433 + $0xe0] sm:$0xf] %v546
                  %v548 = vld [vmem:[%s432 + $0xfc] sm:$0xf]
                  %549 = vst [vmem:[%s433 + $0xe4] sm:$0xf] %v548
                  %v550 = vld [vmem:[%s432 + $0x100] sm:$0xf]
                  %551 = vst [vmem:[%s433 + $0xe8] sm:$0xf] %v550
                  %v552 = vld [vmem:[%s432 + $0x104] sm:$0xf]
                  %553 = vst [vmem:[%s433 + $0xec] sm:$0xf] %v552
                  %v554 = vld [vmem:[%s432 + $0x108] sm:$0xf]
                  %555 = vst [vmem:[%s433 + $0xf0] sm:$0xf] %v554
                  %v556 = vld [vmem:[%s432 + $0x10c] sm:$0xf]
                  %557 = vst [vmem:[%s433 + $0xf4] sm:$0xf] %v556
                  %v558 = vld [vmem:[%s432 + $0x110] sm:$0xf]
                  %559 = vst [vmem:[%s433 + $0xf8] sm:$0xf] %v558
                  %v560 = vld [vmem:[%s432 + $0x114] sm:$0xf]
                  %561 = vst [vmem:[%s433 + $0xfc] sm:$0xf] %v560
                  %s562 = sadd.s32 1, %s431
                  %p563 = scmp.ge.s32.totalorder %s562, %s424
                  %s564 = scalar_select %p563, 0, %s562
                  %s565 = smul.u32 %s564, 64
                  %s566 = smul.u32 %s564, 64
                  %s567 = scalar_lea.vmem %s195, %s565
                  %s568 = scalar_lea.vmem %s183, %s566 [#allocation4]
                $region77: #{_lambda_.1} parent=57 // loop_footer
                  %s428 = sadd.s32 %s426, 1
                $region78: #{_lambda_.1} parent=57 // loop_footer_branch
                  %425 = sbr.rel target = $region74
                $region79: #{_lambda_.1} parent=57 // loop_exit
                  _
                %s569 = sshrl.u32 %s196, 4
                %s570 = sand.u32 %s196, 15
                %s571 = smul.u32 %s569, 16
                %s572 = smul.u32 4, %s571
                %s573 = scalar_lea.vmem %s195, %s572
                %s574 = smul.u32 4, %s571
                %s575 = scalar_lea.vmem %s183, %s574 [#allocation4]
                // While loop
                $region80: #{_lambda_.1} parent=57 // loop_pre_header
                  _
                $region81: #{_lambda_.1} parent=57 // loop_header
                  %s577 = sphi 0, %s579
                  %p578 = scmp.ge.s32.totalorder %s577, %s570
                  %s582 = sphi 0, %s595
                  %s583 = sphi %s573, %s598
                  %s584 = sphi %s575, %s599
                $region82: #{_lambda_.1} parent=57 // loop_header_branch
                  %581 = sbr.rel (%p578) target = $region86
                $region83: #{_lambda_.1} parent=57 // loop_body
                  %v585 = vld [vmem:[%s583] sm:$0xf]
                  %586 = vst [vmem:[%s584] sm:$0xf] %v585
                  %v587 = vld [vmem:[%s583 + $0x48] sm:$0xf]
                  %588 = vst [vmem:[%s584 + $0x40] sm:$0xf] %v587
                  %v589 = vld [vmem:[%s583 + $0x90] sm:$0xf]
                  %590 = vst [vmem:[%s584 + $0x80] sm:$0xf] %v589
                  %v591 = vld [vmem:[%s583 + $0xd8] sm:$0xf]
                  %592 = vst [vmem:[%s584 + $0xc0] sm:$0xf] %v591
                  %s593 = sadd.s32 1, %s582
                  %p594 = scmp.ge.s32.totalorder %s593, %s570
                  %s595 = scalar_select %p594, 0, %s593
                  %s596 = smul.u32 %s595, 4
                  %s597 = smul.u32 %s595, 4
                  %s598 = scalar_lea.vmem %s573, %s596
                  %s599 = scalar_lea.vmem %s575, %s597 [#allocation4]
                $region84: #{_lambda_.1} parent=57 // loop_footer
                  %s579 = sadd.s32 %s577, 1
                $region85: #{_lambda_.1} parent=57 // loop_footer_branch
                  %576 = sbr.rel target = $region81
                $region86: #{_lambda_.1} parent=57 // loop_exit
                  _
              $region58: #{_lambda_.1} parent=35 // pred_fallthru
                _
            $region36: #{_lambda_.1} parent=31 // pred_fallthru
              _
            // Predicated region
            $region37: #{_lambda_.1} parent=31 // pred_check
              _
            $region38: #{_lambda_.1} parent=31 // pred_check_branch
              %203 = sbr.rel (0) target = $region40
            $region39: #{_lambda_.1} parent=31 // pred_region
              %s205 = sshrl.u32 %s196, 4
              // While loop
              $region41: #{_lambda_.1} parent=39 // loop_pre_header
                _
              $region42: #{_lambda_.1} parent=39 // loop_header
                %s207 = sphi 0, %s209
                %p208 = scmp.ge.s32.totalorder %s207, %s205
                %s212 = sphi 0, %s345
                %s213 = sphi %s195, %s348
                %s214 = sphi %s183, %s349
              $region43: #{_lambda_.1} parent=39 // loop_header_branch
                %211 = sbr.rel (%p208) target = $region47
              $region44: #{_lambda_.1} parent=39 // loop_body
                %v215 = vld [vmem:[%s213] sm:$0xf]
                %216 = vst [vmem:[%s214] sm:$0xf] %v215
                %v217 = vld [vmem:[%s213 + $0x4] sm:$0xf]
                %218 = vst [vmem:[%s214 + $0x4] sm:$0xf] %v217
                %v219 = vld [vmem:[%s213 + $0x8] sm:$0xf]
                %220 = vst [vmem:[%s214 + $0x8] sm:$0xf] %v219
                %v221 = vld [vmem:[%s213 + $0xc] sm:$0xf]
                %222 = vst [vmem:[%s214 + $0xc] sm:$0xf] %v221
                %v223 = vld [vmem:[%s213 + $0x10] sm:$0xf]
                %224 = vst [vmem:[%s214 + $0x10] sm:$0xf] %v223
                %v225 = vld [vmem:[%s213 + $0x14] sm:$0xf]
                %226 = vst [vmem:[%s214 + $0x14] sm:$0xf] %v225
                %v227 = vld [vmem:[%s213 + $0x18] sm:$0xf]
                %228 = vst [vmem:[%s214 + $0x18] sm:$0xf] %v227
                %v229 = vld [vmem:[%s213 + $0x1c] sm:$0xf]
                %230 = vst [vmem:[%s214 + $0x1c] sm:$0xf] %v229
                %v231 = vld [vmem:[%s213 + $0x20] sm:$0xf]
                %232 = vst [vmem:[%s214 + $0x20] sm:$0xf] %v231
                %v233 = vld [vmem:[%s213 + $0x24] sm:$0xf]
                %234 = vst [vmem:[%s214 + $0x24] sm:$0xf] %v233
                %v235 = vld [vmem:[%s213 + $0x28] sm:$0xf]
                %236 = vst [vmem:[%s214 + $0x28] sm:$0xf] %v235
                %v237 = vld [vmem:[%s213 + $0x2c] sm:$0xf]
                %238 = vst [vmem:[%s214 + $0x2c] sm:$0xf] %v237
                %v239 = vld [vmem:[%s213 + $0x30] sm:$0xf]
                %240 = vst [vmem:[%s214 + $0x30] sm:$0xf] %v239
                %v241 = vld [vmem:[%s213 + $0x34] sm:$0xf]
                %242 = vst [vmem:[%s214 + $0x34] sm:$0xf] %v241
                %v243 = vld [vmem:[%s213 + $0x38] sm:$0xf]
                %244 = vst [vmem:[%s214 + $0x38] sm:$0xf] %v243
                %v245 = vld [vmem:[%s213 + $0x3c] sm:$0xf]
                %246 = vst [vmem:[%s214 + $0x3c] sm:$0xf] %v245
                %v247 = vld [vmem:[%s213 + $0x48] sm:$0xf]
                %248 = vst [vmem:[%s214 + $0x40] sm:$0xf] %v247
                %v249 = vld [vmem:[%s213 + $0x4c] sm:$0xf]
                %250 = vst [vmem:[%s214 + $0x44] sm:$0xf] %v249
                %v251 = vld [vmem:[%s213 + $0x50] sm:$0xf]
                %252 = vst [vmem:[%s214 + $0x48] sm:$0xf] %v251
                %v253 = vld [vmem:[%s213 + $0x54] sm:$0xf]
                %254 = vst [vmem:[%s214 + $0x4c] sm:$0xf] %v253
                %v255 = vld [vmem:[%s213 + $0x58] sm:$0xf]
                %256 = vst [vmem:[%s214 + $0x50] sm:$0xf] %v255
                %v257 = vld [vmem:[%s213 + $0x5c] sm:$0xf]
                %258 = vst [vmem:[%s214 + $0x54] sm:$0xf] %v257
                %v259 = vld [vmem:[%s213 + $0x60] sm:$0xf]
                %260 = vst [vmem:[%s214 + $0x58] sm:$0xf] %v259
                %v261 = vld [vmem:[%s213 + $0x64] sm:$0xf]
                %262 = vst [vmem:[%s214 + $0x5c] sm:$0xf] %v261
                %v263 = vld [vmem:[%s213 + $0x68] sm:$0xf]
                %264 = vst [vmem:[%s214 + $0x60] sm:$0xf] %v263
                %v265 = vld [vmem:[%s213 + $0x6c] sm:$0xf]
                %266 = vst [vmem:[%s214 + $0x64] sm:$0xf] %v265
                %v267 = vld [vmem:[%s213 + $0x70] sm:$0xf]
                %268 = vst [vmem:[%s214 + $0x68] sm:$0xf] %v267
                %v269 = vld [vmem:[%s213 + $0x74] sm:$0xf]
                %270 = vst [vmem:[%s214 + $0x6c] sm:$0xf] %v269
                %v271 = vld [vmem:[%s213 + $0x78] sm:$0xf]
                %272 = vst [vmem:[%s214 + $0x70] sm:$0xf] %v271
                %v273 = vld [vmem:[%s213 + $0x7c] sm:$0xf]
                %274 = vst [vmem:[%s214 + $0x74] sm:$0xf] %v273
                %v275 = vld [vmem:[%s213 + $0x80] sm:$0xf]
                %276 = vst [vmem:[%s214 + $0x78] sm:$0xf] %v275
                %v277 = vld [vmem:[%s213 + $0x84] sm:$0xf]
                %278 = vst [vmem:[%s214 + $0x7c] sm:$0xf] %v277
                %v279 = vld [vmem:[%s213 + $0x90] sm:$0xf]
                %280 = vst [vmem:[%s214 + $0x80] sm:$0xf] %v279
                %v281 = vld [vmem:[%s213 + $0x94] sm:$0xf]
                %282 = vst [vmem:[%s214 + $0x84] sm:$0xf] %v281
                %v283 = vld [vmem:[%s213 + $0x98] sm:$0xf]
                %284 = vst [vmem:[%s214 + $0x88] sm:$0xf] %v283
                %v285 = vld [vmem:[%s213 + $0x9c] sm:$0xf]
                %286 = vst [vmem:[%s214 + $0x8c] sm:$0xf] %v285
                %v287 = vld [vmem:[%s213 + $0xa0] sm:$0xf]
                %288 = vst [vmem:[%s214 + $0x90] sm:$0xf] %v287
                %v289 = vld [vmem:[%s213 + $0xa4] sm:$0xf]
                %290 = vst [vmem:[%s214 + $0x94] sm:$0xf] %v289
                %v291 = vld [vmem:[%s213 + $0xa8] sm:$0xf]
                %292 = vst [vmem:[%s214 + $0x98] sm:$0xf] %v291
                %v293 = vld [vmem:[%s213 + $0xac] sm:$0xf]
                %294 = vst [vmem:[%s214 + $0x9c] sm:$0xf] %v293
                %v295 = vld [vmem:[%s213 + $0xb0] sm:$0xf]
                %296 = vst [vmem:[%s214 + $0xa0] sm:$0xf] %v295
                %v297 = vld [vmem:[%s213 + $0xb4] sm:$0xf]
                %298 = vst [vmem:[%s214 + $0xa4] sm:$0xf] %v297
                %v299 = vld [vmem:[%s213 + $0xb8] sm:$0xf]
                %300 = vst [vmem:[%s214 + $0xa8] sm:$0xf] %v299
                %v301 = vld [vmem:[%s213 + $0xbc] sm:$0xf]
                %302 = vst [vmem:[%s214 + $0xac] sm:$0xf] %v301
                %v303 = vld [vmem:[%s213 + $0xc0] sm:$0xf]
                %304 = vst [vmem:[%s214 + $0xb0] sm:$0xf] %v303
                %v305 = vld [vmem:[%s213 + $0xc4] sm:$0xf]
                %306 = vst [vmem:[%s214 + $0xb4] sm:$0xf] %v305
                %v307 = vld [vmem:[%s213 + $0xc8] sm:$0xf]
                %308 = vst [vmem:[%s214 + $0xb8] sm:$0xf] %v307
                %v309 = vld [vmem:[%s213 + $0xcc] sm:$0xf]
                %310 = vst [vmem:[%s214 + $0xbc] sm:$0xf] %v309
                %v311 = vld [vmem:[%s213 + $0xd8] sm:$0xf]
                %312 = vst [vmem:[%s214 + $0xc0] sm:$0xf] %v311
                %v313 = vld [vmem:[%s213 + $0xdc] sm:$0xf]
                %314 = vst [vmem:[%s214 + $0xc4] sm:$0xf] %v313
                %v315 = vld [vmem:[%s213 + $0xe0] sm:$0xf]
                %316 = vst [vmem:[%s214 + $0xc8] sm:$0xf] %v315
                %v317 = vld [vmem:[%s213 + $0xe4] sm:$0xf]
                %318 = vst [vmem:[%s214 + $0xcc] sm:$0xf] %v317
                %v319 = vld [vmem:[%s213 + $0xe8] sm:$0xf]
                %320 = vst [vmem:[%s214 + $0xd0] sm:$0xf] %v319
                %v321 = vld [vmem:[%s213 + $0xec] sm:$0xf]
                %322 = vst [vmem:[%s214 + $0xd4] sm:$0xf] %v321
                %v323 = vld [vmem:[%s213 + $0xf0] sm:$0xf]
                %324 = vst [vmem:[%s214 + $0xd8] sm:$0xf] %v323
                %v325 = vld [vmem:[%s213 + $0xf4] sm:$0xf]
                %326 = vst [vmem:[%s214 + $0xdc] sm:$0xf] %v325
                %v327 = vld [vmem:[%s213 + $0xf8] sm:$0xf]
                %328 = vst [vmem:[%s214 + $0xe0] sm:$0xf] %v327
                %v329 = vld [vmem:[%s213 + $0xfc] sm:$0xf]
                %330 = vst [vmem:[%s214 + $0xe4] sm:$0xf] %v329
                %v331 = vld [vmem:[%s213 + $0x100] sm:$0xf]
                %332 = vst [vmem:[%s214 + $0xe8] sm:$0xf] %v331
                %v333 = vld [vmem:[%s213 + $0x104] sm:$0xf]
                %334 = vst [vmem:[%s214 + $0xec] sm:$0xf] %v333
                %v335 = vld [vmem:[%s213 + $0x108] sm:$0xf]
                %336 = vst [vmem:[%s214 + $0xf0] sm:$0xf] %v335
                %v337 = vld [vmem:[%s213 + $0x10c] sm:$0xf]
                %338 = vst [vmem:[%s214 + $0xf4] sm:$0xf] %v337
                %v339 = vld [vmem:[%s213 + $0x110] sm:$0xf]
                %340 = vst [vmem:[%s214 + $0xf8] sm:$0xf] %v339
                %v341 = vld [vmem:[%s213 + $0x114] sm:$0xf]
                %342 = vst [vmem:[%s214 + $0xfc] sm:$0xf] %v341
                %s343 = sadd.s32 1, %s212
                %p344 = scmp.ge.s32.totalorder %s343, %s205
                %s345 = scalar_select %p344, 0, %s343
                %s346 = smul.u32 %s345, 64
                %s347 = smul.u32 %s345, 64
                %s348 = scalar_lea.vmem %s195, %s346
                %s349 = scalar_lea.vmem %s183, %s347 [#allocation4]
              $region45: #{_lambda_.1} parent=39 // loop_footer
                %s209 = sadd.s32 %s207, 1
              $region46: #{_lambda_.1} parent=39 // loop_footer_branch
                %206 = sbr.rel target = $region42
              $region47: #{_lambda_.1} parent=39 // loop_exit
                _
              %s350 = sshrl.u32 %s196, 4
              %s351 = sand.u32 %s196, 15
              %s352 = smul.u32 %s350, 16
              %s353 = smul.u32 4, %s352
              %s354 = scalar_lea.vmem %s195, %s353
              %s355 = smul.u32 4, %s352
              %s356 = scalar_lea.vmem %s183, %s355 [#allocation4]
              // While loop
              $region48: #{_lambda_.1} parent=39 // loop_pre_header
                _
              $region49: #{_lambda_.1} parent=39 // loop_header
                %s358 = sphi 0, %s360
                %p359 = scmp.ge.s32.totalorder %s358, %s351
                %s363 = sphi 0, %s376
                %s364 = sphi %s354, %s379
                %s365 = sphi %s356, %s380
              $region50: #{_lambda_.1} parent=39 // loop_header_branch
                %362 = sbr.rel (%p359) target = $region54
              $region51: #{_lambda_.1} parent=39 // loop_body
                %v366 = vld [vmem:[%s364] sm:$0xf]
                %367 = vst [vmem:[%s365] sm:$0xf] %v366
                %v368 = vld [vmem:[%s364 + $0x48] sm:$0xf]
                %369 = vst [vmem:[%s365 + $0x40] sm:$0xf] %v368
                %v370 = vld [vmem:[%s364 + $0x90] sm:$0xf]
                %371 = vst [vmem:[%s365 + $0x80] sm:$0xf] %v370
                %v372 = vld [vmem:[%s364 + $0xd8] sm:$0xf]
                %373 = vst [vmem:[%s365 + $0xc0] sm:$0xf] %v372
                %s374 = sadd.s32 1, %s363
                %p375 = scmp.ge.s32.totalorder %s374, %s351
                %s376 = scalar_select %p375, 0, %s374
                %s377 = smul.u32 %s376, 4
                %s378 = smul.u32 %s376, 4
                %s379 = scalar_lea.vmem %s354, %s377
                %s380 = scalar_lea.vmem %s356, %s378 [#allocation4]
              $region52: #{_lambda_.1} parent=39 // loop_footer
                %s360 = sadd.s32 %s358, 1
              $region53: #{_lambda_.1} parent=39 // loop_footer_branch
                %357 = sbr.rel target = $region49
              $region54: #{_lambda_.1} parent=39 // loop_exit
                _
            $region40: #{_lambda_.1} parent=31 // pred_fallthru
              _
          $region32: #{_lambda_.1} parent=27 // pred_fallthru
            _
          %600 = vnop
        $region28: #{_lambda_.1} parent=23 // pred_fallthru
          _
        // Predicated region
        $region87: #{_lambda_.1} parent=23 // pred_check
          %p601 = pneg %p76
        $region88: #{_lambda_.1} parent=23 // pred_check_branch
          %603 = sbr.rel (%p601) target = $region90
        $region89: #{_lambda_.1} parent=23 // pred_region
          %s604 = sand.u32 %s66, 1
          %s605 = sand.u32 %s66, 1
          %s606 = smul.addr %s605, 16
          %s607 = scalar_lea.vmem [#allocation5], %s606
          %s608 = sadd.s32 %s18, 1
          %s609 = smul.u32 %s608, 8
          %s610 = smul.addr %s609, 2
          %s611 = smul.addr %s17, 72
          %s612 = sadd.s32 %s610, %s611
          %s613 = smul.addr %s612, 4
          %s614 = scalar_lea.vmem %s1, %s613
          // Predicated region
          $region91: #{_lambda_.1} parent=89 // pred_check
            _
          $region92: #{_lambda_.1} parent=89 // pred_check_branch
            %616 = sbr.rel (0) target = $region94
          $region93: #{_lambda_.1} parent=89 // pred_region
            // Predicated region
            $region95: #{_lambda_.1} parent=93 // pred_check
              _
            $region96: #{_lambda_.1} parent=93 // pred_check_branch
              %618 = sbr.rel target = $region98
            $region97: #{_lambda_.1} parent=93 // pred_region
              // Predicated region
              $region110: #{_lambda_.1} parent=97 // pred_check
                _
              $region111: #{_lambda_.1} parent=97 // pred_check_branch
                %639 = sbr.rel (0) target = $region113
              $region112: #{_lambda_.1} parent=97 // pred_region
                loop: start=0, step=1, limit=1
                $region114: #{_lambda_.1} parent=112 // loop_pre_header
                  _
                $region115: #{_lambda_.1} parent=112 // loop_header
                  %s641 = sphi 0, %s645
                  %p642 = scmp.ge.s32.totalorder %s641, 1
                  %s646 = sphi %s614, %s614
                  %s647 = sphi %s607, %s607
                $region116: #{_lambda_.1} parent=112 // loop_header_branch
                  %644 = sbr.rel (%p642) target = $region120
                $region117: #{_lambda_.1} parent=112 // loop_body
                  _
                $region118: #{_lambda_.1} parent=112 // loop_footer
                  %s645 = sadd.s32 1, %s641
                $region119: #{_lambda_.1} parent=112 // loop_footer_branch
                  %640 = sbr.rel target = $region115
                $region120: #{_lambda_.1} parent=112 // loop_exit
                  _
                loop: start=0, step=1, limit=1
                $region121: #{_lambda_.1} parent=112 // loop_pre_header
                  _
                $region122: #{_lambda_.1} parent=112 // loop_header
                  %s650 = sphi 0, %s654
                  %p651 = scmp.ge.s32.totalorder %s650, 1
                  %s655 = sphi %s614, %s614
                  %s656 = sphi %s607, %s607
                $region123: #{_lambda_.1} parent=112 // loop_header_branch
                  %653 = sbr.rel (%p651) target = $region127
                $region124: #{_lambda_.1} parent=112 // loop_body
                  %v657 = vld [vmem:[%s655] sm:$0xf]
                  %658 = vst [vmem:[%s656] sm:$0xf] %v657
                  %v659 = vld [vmem:[%s655 + $0x4] sm:$0xf]
                  %660 = vst [vmem:[%s656 + $0x4] sm:$0xf] %v659
                  %v661 = vld [vmem:[%s655 + $0x48] sm:$0xf]
                  %662 = vst [vmem:[%s656 + $0x8] sm:$0xf] %v661
                  %v663 = vld [vmem:[%s655 + $0x4c] sm:$0xf]
                  %664 = vst [vmem:[%s656 + $0xc] sm:$0xf] %v663
                $region125: #{_lambda_.1} parent=112 // loop_footer
                  %s654 = sadd.s32 1, %s650
                $region126: #{_lambda_.1} parent=112 // loop_footer_branch
                  %649 = sbr.rel target = $region122
                $region127: #{_lambda_.1} parent=112 // loop_exit
                  _
              $region113: #{_lambda_.1} parent=97 // pred_fallthru
                _
            $region98: #{_lambda_.1} parent=93 // pred_fallthru
              _
            // Predicated region
            $region99: #{_lambda_.1} parent=93 // pred_check
              _
            $region100: #{_lambda_.1} parent=93 // pred_check_branch
              %620 = sbr.rel (0) target = $region102
            $region101: #{_lambda_.1} parent=93 // pred_region
              loop: start=0, step=1, limit=1
              $region103: #{_lambda_.1} parent=101 // loop_pre_header
                _
              $region104: #{_lambda_.1} parent=101 // loop_header
                %s623 = sphi 0, %s627
                %p624 = scmp.ge.s32.totalorder %s623, 1
                %s628 = sphi %s614, %s614
                %s629 = sphi %s607, %s607
              $region105: #{_lambda_.1} parent=101 // loop_header_branch
                %626 = sbr.rel (%p624) target = $region109
              $region106: #{_lambda_.1} parent=101 // loop_body
                %v630 = vld [vmem:[%s628] sm:$0xf]
                %631 = vst [vmem:[%s629] sm:$0xf] %v630
                %v632 = vld [vmem:[%s628 + $0x4] sm:$0xf]
                %633 = vst [vmem:[%s629 + $0x4] sm:$0xf] %v632
                %v634 = vld [vmem:[%s628 + $0x48] sm:$0xf]
                %635 = vst [vmem:[%s629 + $0x8] sm:$0xf] %v634
                %v636 = vld [vmem:[%s628 + $0x4c] sm:$0xf]
                %637 = vst [vmem:[%s629 + $0xc] sm:$0xf] %v636
              $region107: #{_lambda_.1} parent=101 // loop_footer
                %s627 = sadd.s32 1, %s623
              $region108: #{_lambda_.1} parent=101 // loop_footer_branch
                %622 = sbr.rel target = $region104
              $region109: #{_lambda_.1} parent=101 // loop_exit
                _
            $region102: #{_lambda_.1} parent=93 // pred_fallthru
              _
          $region94: #{_lambda_.1} parent=89 // pred_fallthru
            _
          %665 = vnop
        $region90: #{_lambda_.1} parent=23 // pred_fallthru
          _
      $region24: #{_lambda_.1} parent=5 // pred_fallthru
        _
      %p666 = scmp.le.s32.totalorder 1, %s10
      %p667 = scmp.lt.s32.totalorder %s10, 3
      %p668 = pnand %p666, %p667
      %p669 = pneg %p668
      // Predicated region
      $region128: #{_lambda_.1} parent=5 // pred_check
        _
      $region129: #{_lambda_.1} parent=5 // pred_check_branch
        %671 = sbr.rel (%p668) target = $region131
      $region130: #{_lambda_.1} parent=5 // pred_region
        %s672 = ssub.s32 %s10, 1
        %s673 = sand.u32 %s37, 1
        %s674 = sand.u32 %s37, 1
        %s675 = smul.addr %s674, 256
        %s676 = scalar_lea.vmem [#allocation4], %s675
        // Predicated region
        $region132: #{_lambda_.1} parent=130 // pred_check
          %p677 = pneg %p50
        $region133: #{_lambda_.1} parent=130 // pred_check_branch
          %679 = sbr.rel (%p677) target = $region135
        $region134: #{_lambda_.1} parent=130 // pred_region
          _
        $region135: #{_lambda_.1} parent=130 // pred_fallthru
          _
        %s680 = sand.u32 %s69, 1
        %s681 = sand.u32 %s69, 1
        %s682 = smul.addr %s681, 16
        %s683 = scalar_lea.vmem [#allocation5], %s682
        // Predicated region
        $region136: #{_lambda_.1} parent=130 // pred_check
          %p684 = pneg %p82
        $region137: #{_lambda_.1} parent=130 // pred_check_branch
          %686 = sbr.rel (%p684) target = $region139
        $region138: #{_lambda_.1} parent=130 // pred_region
          _
        $region139: #{_lambda_.1} parent=130 // pred_fallthru
          _
        %s687 = sand.u32 %s37, 1
        %s688 = sand.u32 %s37, 1
        %s689 = smul.addr %s688, 256
        %s690 = scalar_lea.vmem [#allocation4], %s689
        %p691 = pneg %p50
        %p692 = pneg %p47
        %s693 = sand.u32 %s69, 1
        %s694 = sand.u32 %s69, 1
        %s695 = smul.addr %s694, 16
        %s696 = scalar_lea.vmem [#allocation5], %s695
        %p697 = pneg %p82
        %p698 = pneg %p79
        %p699 = pneg %p103
        %p700 = pneg %p100
        %p701 = pneg %p124
        %p702 = pneg %p121
        %p703 = pneg %p152
        %p704 = pneg %p149
        %p705 = scmp.lt.s32.totalorder %s19, 1
        %s706 = scalar_select %p705, %s19, 1
        %p707 = scmp.lt.s32.totalorder %s20, 0
        %s708 = scalar_select %p707, %s20, 0
        %s709 = sadd.s32 %s708, %s706
        %s710 = smul.addr %s709, 4
        %s711 = scalar_lea.vmem %s4, %s710
        %s712 = smul.u32 8, %s20
        %s713 = ssub.s32 9, %s712
        %p714 = scmp.lt.s32.totalorder %s713, 8
        %s715 = scalar_select %p714, %s713, 8
        %s716 = smul.u32 256, %s715
        %s717 = smul.u32 %s716, 2
        %s718 = sadd.s32 %s20, 1
        %s719 = smul.u32 %s718, 8
        %p720 = scmp.lt.s32.totalorder %s19, 1
        %s721 = scalar_select %p720, %s19, 1
        %p722 = scmp.lt.s32.totalorder %s20, 0
        %s723 = scalar_select %p722, %s20, 0
        %s724 = sadd.s32 %s723, %s721
        %s725 = smul.addr %s724, 4
        %s726 = scalar_lea.vmem %s4, %s725
        %v728 = vld [vmem:[%s676] sm:$0xf]
        %v729 = vld [vmem:[%s676 + $0x4] sm:$0x1]
        %v730 = vld [vmem:[%s676 + $0x8] sm:$0xf]
        %v731 = vld [vmem:[%s676 + $0xc] sm:$0x1]
        %v732 = vld [vmem:[%s676 + $0x10] sm:$0xf]
        %v733 = vld [vmem:[%s676 + $0x14] sm:$0x1]
        %v734 = vld [vmem:[%s676 + $0x18] sm:$0xf]
        %v735 = vld [vmem:[%s676 + $0x1c] sm:$0x1]
        %v736 = vld [vmem:[%s676 + $0x20] sm:$0xf]
        %v737 = vld [vmem:[%s676 + $0x24] sm:$0x1]
        %v738 = vld [vmem:[%s676 + $0x28] sm:$0xf]
        %v739 = vld [vmem:[%s676 + $0x2c] sm:$0x1]
        %v740 = vld [vmem:[%s676 + $0x30] sm:$0xf]
        %v741 = vld [vmem:[%s676 + $0x34] sm:$0x1]
        %v742 = vld [vmem:[%s676 + $0x38] sm:$0xf]
        %v743 = vld [vmem:[%s676 + $0x3c] sm:$0x1]
        %v744 = vld [vmem:[%s676 + $0x40] sm:$0xf]
        %v745 = vld [vmem:[%s676 + $0x44] sm:$0x1]
        %v746 = vld [vmem:[%s676 + $0x48] sm:$0xf]
        %v747 = vld [vmem:[%s676 + $0x4c] sm:$0x1]
        %v748 = vld [vmem:[%s676 + $0x50] sm:$0xf]
        %v749 = vld [vmem:[%s676 + $0x54] sm:$0x1]
        %v750 = vld [vmem:[%s676 + $0x58] sm:$0xf]
        %v751 = vld [vmem:[%s676 + $0x5c] sm:$0x1]
        %v752 = vld [vmem:[%s676 + $0x60] sm:$0xf]
        %v753 = vld [vmem:[%s676 + $0x64] sm:$0x1]
        %v754 = vld [vmem:[%s676 + $0x68] sm:$0xf]
        %v755 = vld [vmem:[%s676 + $0x6c] sm:$0x1]
        %v756 = vld [vmem:[%s676 + $0x70] sm:$0xf]
        %v757 = vld [vmem:[%s676 + $0x74] sm:$0x1]
        %v758 = vld [vmem:[%s676 + $0x78] sm:$0xf]
        %v759 = vld [vmem:[%s676 + $0x7c] sm:$0x1]
        %vm760 = vcmask 27648
        %761 = vst.msk [vmem:[#allocation3] sm:$0xf] %vm760, %v728
        %vm762 = vcmask 24576
        %vm763 = vsmask.f32 256
        %vm764 = vmand %vm762, %vm763
        %v765 = vld [vmem:[#allocation3 + $0x4] sm:$0x1]
        %v766 = vsel %vm764, %v729, %v765
        %767 = vst [vmem:[#allocation3 + $0x4] sm:$0x1] %v766
        %768 = vst.msk [vmem:[#allocation3 + $0x8] sm:$0xf] %vm760, %v730
        %v769 = vld [vmem:[#allocation3 + $0xc] sm:$0x1]
        %v770 = vsel %vm764, %v731, %v769
        %771 = vst [vmem:[#allocation3 + $0xc] sm:$0x1] %v770
        %772 = vst.msk [vmem:[#allocation3 + $0x10] sm:$0xf] %vm760, %v732
        %v773 = vld [vmem:[#allocation3 + $0x14] sm:$0x1]
        %v774 = vsel %vm764, %v733, %v773
        %775 = vst [vmem:[#allocation3 + $0x14] sm:$0x1] %v774
        %776 = vst.msk [vmem:[#allocation3 + $0x18] sm:$0xf] %vm760, %v734
        %v777 = vld [vmem:[#allocation3 + $0x1c] sm:$0x1]
        %v778 = vsel %vm764, %v735, %v777
        %779 = vst [vmem:[#allocation3 + $0x1c] sm:$0x1] %v778
        %780 = vst.msk [vmem:[#allocation3 + $0x20] sm:$0xf] %vm760, %v736
        %v781 = vld [vmem:[#allocation3 + $0x24] sm:$0x1]
        %v782 = vsel %vm764, %v737, %v781
        %783 = vst [vmem:[#allocation3 + $0x24] sm:$0x1] %v782
        %784 = vst.msk [vmem:[#allocation3 + $0x28] sm:$0xf] %vm760, %v738
        %v785 = vld [vmem:[#allocation3 + $0x2c] sm:$0x1]
        %v786 = vsel %vm764, %v739, %v785
        %787 = vst [vmem:[#allocation3 + $0x2c] sm:$0x1] %v786
        %788 = vst.msk [vmem:[#allocation3 + $0x30] sm:$0xf] %vm760, %v740
        %v789 = vld [vmem:[#allocation3 + $0x34] sm:$0x1]
        %v790 = vsel %vm764, %v741, %v789
        %791 = vst [vmem:[#allocation3 + $0x34] sm:$0x1] %v790
        %792 = vst.msk [vmem:[#allocation3 + $0x38] sm:$0xf] %vm760, %v742
        %v793 = vld [vmem:[#allocation3 + $0x3c] sm:$0x1]
        %v794 = vsel %vm764, %v743, %v793
        %795 = vst [vmem:[#allocation3 + $0x3c] sm:$0x1] %v794
        %796 = vst.msk [vmem:[#allocation3 + $0x48] sm:$0xf] %vm760, %v744
        %v797 = vld [vmem:[#allocation3 + $0x4c] sm:$0x1]
        %v798 = vsel %vm764, %v745, %v797
        %799 = vst [vmem:[#allocation3 + $0x4c] sm:$0x1] %v798
        %800 = vst.msk [vmem:[#allocation3 + $0x50] sm:$0xf] %vm760, %v746
        %v801 = vld [vmem:[#allocation3 + $0x54] sm:$0x1]
        %v802 = vsel %vm764, %v747, %v801
        %803 = vst [vmem:[#allocation3 + $0x54] sm:$0x1] %v802
        %804 = vst.msk [vmem:[#allocation3 + $0x58] sm:$0xf] %vm760, %v748
        %v805 = vld [vmem:[#allocation3 + $0x5c] sm:$0x1]
        %v806 = vsel %vm764, %v749, %v805
        %807 = vst [vmem:[#allocation3 + $0x5c] sm:$0x1] %v806
        %808 = vst.msk [vmem:[#allocation3 + $0x60] sm:$0xf] %vm760, %v750
        %v809 = vld [vmem:[#allocation3 + $0x64] sm:$0x1]
        %v810 = vsel %vm764, %v751, %v809
        %811 = vst [vmem:[#allocation3 + $0x64] sm:$0x1] %v810
        %812 = vst.msk [vmem:[#allocation3 + $0x68] sm:$0xf] %vm760, %v752
        %v813 = vld [vmem:[#allocation3 + $0x6c] sm:$0x1]
        %v814 = vsel %vm764, %v753, %v813
        %815 = vst [vmem:[#allocation3 + $0x6c] sm:$0x1] %v814
        %816 = vst.msk [vmem:[#allocation3 + $0x70] sm:$0xf] %vm760, %v754
        %v817 = vld [vmem:[#allocation3 + $0x74] sm:$0x1]
        %v818 = vsel %vm764, %v755, %v817
        %819 = vst [vmem:[#allocation3 + $0x74] sm:$0x1] %v818
        %820 = vst.msk [vmem:[#allocation3 + $0x78] sm:$0xf] %vm760, %v756
        %v821 = vld [vmem:[#allocation3 + $0x7c] sm:$0x1]
        %v822 = vsel %vm764, %v757, %v821
        %823 = vst [vmem:[#allocation3 + $0x7c] sm:$0x1] %v822
        %824 = vst.msk [vmem:[#allocation3 + $0x80] sm:$0xf] %vm760, %v758
        %v825 = vld [vmem:[#allocation3 + $0x84] sm:$0x1]
        %v826 = vsel %vm764, %v759, %v825
        %827 = vst [vmem:[#allocation3 + $0x84] sm:$0x1] %v826
        %v828 = vld [vmem:[%s683] sm:$0xf]
        %v829 = vld [vmem:[%s683 + $0x4] sm:$0x1]
        %v830 = vld [vmem:[%s683 + $0x8] sm:$0xf]
        %v831 = vld [vmem:[%s683 + $0xc] sm:$0x1]
        %s832 = scalar_lea.vmem [#allocation3], 64
        %833 = vst.msk [vmem:[%s832] sm:$0xf] %vm760, %v828
        %v834 = vld [vmem:[%s832 + $0x4] sm:$0x1]
        %v835 = vsel %vm764, %v829, %v834
        %836 = vst [vmem:[%s832 + $0x4] sm:$0x1] %v835
        %837 = vst.msk [vmem:[%s832 + $0x48] sm:$0xf] %vm760, %v830
        %v838 = vld [vmem:[%s832 + $0x4c] sm:$0x1]
        %v839 = vsel %vm764, %v831, %v838
        %840 = vst [vmem:[%s832 + $0x4c] sm:$0x1] %v839
        %v841 = vld [vmem:[%s676] sm:$0xf]
        %v842 = vld [vmem:[%s676 + $0x8] sm:$0xf]
        %v843 = vld [vmem:[%s676 + $0x10] sm:$0xf]
        %v844 = vld [vmem:[%s676 + $0x18] sm:$0xf]
        %v845 = vld [vmem:[%s676 + $0x20] sm:$0xf]
        %v846 = vld [vmem:[%s676 + $0x28] sm:$0xf]
        %v847 = vld [vmem:[%s676 + $0x30] sm:$0xf]
        %v848 = vld [vmem:[%s676 + $0x38] sm:$0xf]
        %v849 = vld [vmem:[%s2] sm:$0x3]
        %v858 = vunpack.c.l.b16 %v841
        %v859 = vunpack.c.l.b16 %v842
        %v860 = vunpack.c.l.b16 %v843
        %v861 = vunpack.c.l.b16 %v844
        %v862 = vunpack.c.l.b16 %v845
        %v863 = vunpack.c.l.b16 %v846
        %v864 = vunpack.c.l.b16 %v847
        %v865 = vunpack.c.l.b16 %v848
        %v866 = vpack.c.b16 %v859, %v858
        %v867 = vpack.c.b16 %v861, %v860
        %v868 = vpack.c.b16 %v863, %v862
        %v869 = vpack.c.b16 %v865, %v864
        %vm870 = vcmask 31744
        %v872 = vsel %vm870, %v866, 0
        %v875 = vsel %vm870, %v867, 0
        %v878 = vsel %vm870, %v868, 0
        %v881 = vsel %vm870, %v869, 0
        %vm883 = vcmask 1041408
        %v885 = vsel %vm883, %v849, 0
        %887 = vmatprep.subr.bf16.mxu0 0
        %888 = vmatpush1.bf16.msra.mxu0 %v885
        %889 = vmatprep.subr.bf16.mxu0 0
        %890 = vmatpush1.bf16.msra.mxu0 0
        %891 = vmatprep.subr.bf16.mxu0 0
        %892 = vmatpush1.bf16.msra.mxu0 0
        %893 = vmatprep.subr.bf16.mxu0 0
        %894 = vmatpush1.bf16.msra.mxu0 0
        %895 = vmatprep.subr.bf16.mxu0 0
        %896 = vmatpush1.bf16.msra.mxu0 0
        %897 = vmatprep.subr.bf16.mxu0 0
        %898 = vmatpush1.bf16.msra.mxu0 0
        %899 = vmatprep.subr.bf16.mxu0 0
        %900 = vmatpush1.bf16.msra.mxu0 0
        %901 = vmatprep.subr.bf16.mxu0 0
        %902 = vmatpush1.bf16.msra.mxu0 0
        %903 = vmatprep.subr.bf16.mxu0 0
        %904 = vmatpush1.bf16.msra.mxu0 0
        %905 = vmatprep.subr.bf16.mxu0 0
        %906 = vmatpush1.bf16.msra.mxu0 0
        %907 = vmatprep.subr.bf16.mxu0 0
        %908 = vmatpush1.bf16.msra.mxu0 0
        %909 = vmatprep.subr.bf16.mxu0 0
        %910 = vmatpush1.bf16.msra.mxu0 0
        %911 = vmatprep.subr.bf16.mxu0 0
        %912 = vmatpush1.bf16.msra.mxu0 0
        %913 = vmatprep.subr.bf16.mxu0 0
        %914 = vmatpush1.bf16.msra.mxu0 0
        %915 = vmatprep.subr.bf16.mxu0 0
        %916 = vmatpush1.bf16.msra.mxu0 0
        %917 = vmatprep.subr.bf16.mxu0 0
        %918 = vmatpush1.bf16.msra.mxu0 0
        %919 = vmatprep.mubr.bf16.mxu0 0
        %920 = vmatmul.mubr.bf16.gmra.mrb[0].mxu0 %v872
        %v921 = vpop.f32.mrb[0].mxu0
        %v922 = vadd.f32 0.0, %v921
        %v923 = vpop.f32.mrb[0].mxu0
        %v924 = vpop.f32.mrb[0].mxu0
        %v925 = vadd.f32 0.0, %v924
        %v926 = vpop.f32.mrb[0].mxu0
        %927 = vmatprep.mubr.bf16.mxu0 0
        %928 = vmatmul.mubr.bf16.gmra.mrb[0].mxu0 %v875
        %v929 = vpop.f32.mrb[0].mxu0
        %v930 = vadd.f32 0.0, %v929
        %v931 = vpop.f32.mrb[0].mxu0
        %v932 = vpop.f32.mrb[0].mxu0
        %v933 = vadd.f32 0.0, %v932
        %v934 = vpop.f32.mrb[0].mxu0
        %935 = vmatprep.mubr.bf16.mxu0 0
        %936 = vmatmul.mubr.bf16.gmra.mrb[0].mxu0 %v878
        %v937 = vpop.f32.mrb[0].mxu0
        %v938 = vadd.f32 0.0, %v937
        %v939 = vpop.f32.mrb[0].mxu0
        %v940 = vpop.f32.mrb[0].mxu0
        %v941 = vadd.f32 0.0, %v940
        %v942 = vpop.f32.mrb[0].mxu0
        %943 = vmatprep.mubr.bf16.mxu0 0
        %944 = vmatmul.mubr.bf16.gmra.mrb[0].mxu0 %v881
        %v945 = vpop.f32.mrb[0].mxu0
        %v946 = vadd.f32 0.0, %v945
        %v947 = vpop.f32.mrb[0].mxu0
        %v948 = vpop.f32.mrb[0].mxu0
        %v949 = vadd.f32 0.0, %v948
        %v950 = vpop.f32.mrb[0].mxu0
        %951 = vdwg.mxu0
        %952 = vst.msk [vmem:[#allocation2] sm:$0xff] %vm870, %v922
        %953 = vst.msk [vmem:[#allocation2 + $0x8] sm:$0xff] %vm870, %v925
        %954 = vst.msk [vmem:[#allocation2 + $0x10] sm:$0xff] %vm870, %v930
        %955 = vst.msk [vmem:[#allocation2 + $0x18] sm:$0xff] %vm870, %v933
        %956 = vst.msk [vmem:[#allocation2 + $0x20] sm:$0xff] %vm870, %v938
        %957 = vst.msk [vmem:[#allocation2 + $0x28] sm:$0xff] %vm870, %v941
        %958 = vst.msk [vmem:[#allocation2 + $0x30] sm:$0xff] %vm870, %v946
        %959 = vst.msk [vmem:[#allocation2 + $0x38] sm:$0xff] %vm870, %v949
        %s960 = scalar_lea.vmem %s676, 64 [#allocation4]
        %v961 = vld [vmem:[%s960] sm:$0xf]
        %v962 = vld [vmem:[%s960 + $0x8] sm:$0xf]
        %v963 = vld [vmem:[%s960 + $0x10] sm:$0xf]
        %v964 = vld [vmem:[%s960 + $0x18] sm:$0xf]
        %v965 = vld [vmem:[%s960 + $0x20] sm:$0xf]
        %v966 = vld [vmem:[%s960 + $0x28] sm:$0xf]
        %v967 = vld [vmem:[%s960 + $0x30] sm:$0xf]
        %v968 = vld [vmem:[%s960 + $0x38] sm:$0xf]
        %s969 = scalar_lea.vmem %s2, 2
        %v970 = vld [vmem:[%s969] sm:$0x3]
        %v979 = vunpack.c.l.b16 %v961
        %v980 = vunpack.c.l.b16 %v962
        %v981 = vunpack.c.l.b16 %v963
        %v982 = vunpack.c.l.b16 %v964
        %v983 = vunpack.c.l.b16 %v965
        %v984 = vunpack.c.l.b16 %v966
        %v985 = vunpack.c.l.b16 %v967
        %v986 = vunpack.c.l.b16 %v968
        %v987 = vpack.c.b16 %v980, %v979
        %v988 = vpack.c.b16 %v982, %v981
        %v989 = vpack.c.b16 %v984, %v983
        %v990 = vpack.c.b16 %v986, %v985
        %v992 = vsel %vm870, %v987, 0
        %v995 = vsel %vm870, %v988, 0
        %v998 = vsel %vm870, %v989, 0
        %v1001 = vsel %vm870, %v990, 0
        %v1004 = vsel %vm883, %v970, 0
        %1006 = vmatprep.subr.bf16.mxu0 0
        %1007 = vmatpush1.bf16.msra.mxu0 %v1004
        %1008 = vmatprep.subr.bf16.mxu0 0
        %1009 = vmatpush1.bf16.msra.mxu0 0
        %1010 = vmatprep.subr.bf16.mxu0 0
        %1011 = vmatpush1.bf16.msra.mxu0 0
        %1012 = vmatprep.subr.bf16.mxu0 0
        %1013 = vmatpush1.bf16.msra.mxu0 0
        %1014 = vmatprep.subr.bf16.mxu0 0
        %1015 = vmatpush1.bf16.msra.mxu0 0
        %1016 = vmatprep.subr.bf16.mxu0 0
        %1017 = vmatpush1.bf16.msra.mxu0 0
        %1018 = vmatprep.subr.bf16.mxu0 0
        %1019 = vmatpush1.bf16.msra.mxu0 0
        %1020 = vmatprep.subr.bf16.mxu0 0
        %1021 = vmatpush1.bf16.msra.mxu0 0
        %1022 = vmatprep.subr.bf16.mxu0 0
        %1023 = vmatpush1.bf16.msra.mxu0 0
        %1024 = vmatprep.subr.bf16.mxu0 0
        %1025 = vmatpush1.bf16.msra.mxu0 0
        %1026 = vmatprep.subr.bf16.mxu0 0
        %1027 = vmatpush1.bf16.msra.mxu0 0
        %1028 = vmatprep.subr.bf16.mxu0 0
        %1029 = vmatpush1.bf16.msra.mxu0 0
        %1030 = vmatprep.subr.bf16.mxu0 0
        %1031 = vmatpush1.bf16.msra.mxu0 0
        %1032 = vmatprep.subr.bf16.mxu0 0
        %1033 = vmatpush1.bf16.msra.mxu0 0
        %1034 = vmatprep.subr.bf16.mxu0 0
        %1035 = vmatpush1.bf16.msra.mxu0 0
        %1036 = vmatprep.subr.bf16.mxu0 0
        %1037 = vmatpush1.bf16.msra.mxu0 0
        %1038 = vmatprep.mubr.bf16.mxu0 0
        %1039 = vmatmul.mubr.bf16.gmra.mrb[0].mxu0 %v992
        %v1040 = vpop.f32.mrb[0].mxu0
        %v1041 = vadd.f32 0.0, %v1040
        %v1042 = vpop.f32.mrb[0].mxu0
        %v1043 = vpop.f32.mrb[0].mxu0
        %v1044 = vadd.f32 0.0, %v1043
        %v1045 = vpop.f32.mrb[0].mxu0
        %1046 = vmatprep.mubr.bf16.mxu0 0
        %1047 = vmatmul.mubr.bf16.gmra.mrb[0].mxu0 %v995
        %v1048 = vpop.f32.mrb[0].mxu0
        %v1049 = vadd.f32 0.0, %v1048
        %v1050 = vpop.f32.mrb[0].mxu0
        %v1051 = vpop.f32.mrb[0].mxu0
        %v1052 = vadd.f32 0.0, %v1051
        %v1053 = vpop.f32.mrb[0].mxu0
        %1054 = vmatprep.mubr.bf16.mxu0 0
        %1055 = vmatmul.mubr.bf16.gmra.mrb[0].mxu0 %v998
        %v1056 = vpop.f32.mrb[0].mxu0
        %v1057 = vadd.f32 0.0, %v1056
        %v1058 = vpop.f32.mrb[0].mxu0
        %v1059 = vpop.f32.mrb[0].mxu0
        %v1060 = vadd.f32 0.0, %v1059
        %v1061 = vpop.f32.mrb[0].mxu0
        %1062 = vmatprep.mubr.bf16.mxu0 0
        %1063 = vmatmul.mubr.bf16.gmra.mrb[0].mxu0 %v1001
        %v1064 = vpop.f32.mrb[0].mxu0
        %v1065 = vadd.f32 0.0, %v1064
        %v1066 = vpop.f32.mrb[0].mxu0
        %v1067 = vpop.f32.mrb[0].mxu0
        %v1068 = vadd.f32 0.0, %v1067
        %v1069 = vpop.f32.mrb[0].mxu0
        %1070 = vdwg.mxu0
        %v1071 = vld [vmem:[#allocation2] sm:$0xff]
        %v1072 = vld [vmem:[#allocation2 + $0x8] sm:$0xff]
        %v1073 = vld [vmem:[#allocation2 + $0x10] sm:$0xff]
        %v1074 = vld [vmem:[#allocation2 + $0x18] sm:$0xff]
        %v1075 = vld [vmem:[#allocation2 + $0x20] sm:$0xff]
        %v1076 = vld [vmem:[#allocation2 + $0x28] sm:$0xff]
        %v1077 = vld [vmem:[#allocation2 + $0x30] sm:$0xff]
        %v1078 = vld [vmem:[#allocation2 + $0x38] sm:$0xff]
        %v1079 = vadd.f32 %v1071, %v1041
        %v1080 = vadd.f32 %v1072, %v1044
        %v1081 = vadd.f32 %v1073, %v1049
        %v1082 = vadd.f32 %v1074, %v1052
        %v1083 = vadd.f32 %v1075, %v1057
        %v1084 = vadd.f32 %v1076, %v1060
        %v1085 = vadd.f32 %v1077, %v1065
        %v1086 = vadd.f32 %v1078, %v1068
        %1087 = vst.msk [vmem:[#allocation2] sm:$0xff] %vm870, %v1079
        %1088 = vst.msk [vmem:[#allocation2 + $0x8] sm:$0xff] %vm870, %v1080
        %1089 = vst.msk [vmem:[#allocation2 + $0x10] sm:$0xff] %vm870, %v1081
        %1090 = vst.msk [vmem:[#allocation2 + $0x18] sm:$0xff] %vm870, %v1082
        %1091 = vst.msk [vmem:[#allocation2 + $0x20] sm:$0xff] %vm870, %v1083
        %1092 = vst.msk [vmem:[#allocation2 + $0x28] sm:$0xff] %vm870, %v1084
        %1093 = vst.msk [vmem:[#allocation2 + $0x30] sm:$0xff] %vm870, %v1085
        %1094 = vst.msk [vmem:[#allocation2 + $0x38] sm:$0xff] %vm870, %v1086
        %v1095 = vld [vmem:[%s676] sm:$0xf]
        %v1096 = vld [vmem:[%s676 + $0x4] sm:$0x1]
        %v1097 = vld [vmem:[%s676 + $0x8] sm:$0xf]
        %v1098 = vld [vmem:[%s676 + $0xc] sm:$0x1]
        %v1099 = vld [vmem:[%s676 + $0x10] sm:$0xf]
        %v1100 = vld [vmem:[%s676 + $0x14] sm:$0x1]
        %v1101 = vld [vmem:[%s676 + $0x18] sm:$0xf]
        %v1102 = vld [vmem:[%s676 + $0x1c] sm:$0x1]
        %v1103 = vld [vmem:[%s676 + $0x20] sm:$0xf]
        %v1104 = vld [vmem:[%s676 + $0x24] sm:$0x1]
        %v1105 = vld [vmem:[%s676 + $0x28] sm:$0xf]
        %v1106 = vld [vmem:[%s676 + $0x2c] sm:$0x1]
        %v1107 = vld [vmem:[%s676 + $0x30] sm:$0xf]
        %v1108 = vld [vmem:[%s676 + $0x34] sm:$0x1]
        %v1109 = vld [vmem:[%s676 + $0x38] sm:$0xf]
        %v1110 = vld [vmem:[%s676 + $0x3c] sm:$0x1]
        %vm1111 = vsmask.f32 3328
        %vm1112 = vsmask.f32 7440
        %vm1113 = vmor %vm1111, %vm1112
        %v1115 = vshrl.u32 %v1095, 16
        %v1117 = vrot.slane %v1115, 4
        %v1118 = vshll.u32 %v1095, 16
        %v1120 = vrot.slane %v1118, 5
        %v1121 = vor.u32 %v1117, %v1120
        %v1122 = vrot.slane %v1121, 4
        %v1124 = vshll.u32 %v1096, 16
        %v1126 = vrot.slane %v1124, 5
        %v1127 = vsel %vm1113, %v1122, %v1126
        %v1129 = vshrl.u32 %v1097, 16
        %v1131 = vrot.slane %v1129, 4
        %v1132 = vshll.u32 %v1097, 16
        %v1134 = vrot.slane %v1132, 5
        %v1135 = vor.u32 %v1131, %v1134
        %v1136 = vrot.slane %v1135, 4
        %v1138 = vshll.u32 %v1098, 16
        %v1140 = vrot.slane %v1138, 5
        %v1141 = vsel %vm1113, %v1136, %v1140
        %v1143 = vshrl.u32 %v1099, 16
        %v1145 = vrot.slane %v1143, 4
        %v1146 = vshll.u32 %v1099, 16
        %v1148 = vrot.slane %v1146, 5
        %v1149 = vor.u32 %v1145, %v1148
        %v1150 = vrot.slane %v1149, 4
        %v1152 = vshll.u32 %v1100, 16
        %v1154 = vrot.slane %v1152, 5
        %v1155 = vsel %vm1113, %v1150, %v1154
        %v1157 = vshrl.u32 %v1101, 16
        %v1159 = vrot.slane %v1157, 4
        %v1160 = vshll.u32 %v1101, 16
        %v1162 = vrot.slane %v1160, 5
        %v1163 = vor.u32 %v1159, %v1162
        %v1164 = vrot.slane %v1163, 4
        %v1166 = vshll.u32 %v1102, 16
        %v1168 = vrot.slane %v1166, 5
        %v1169 = vsel %vm1113, %v1164, %v1168
        %v1171 = vshrl.u32 %v1103, 16
        %v1173 = vrot.slane %v1171, 4
        %v1174 = vshll.u32 %v1103, 16
        %v1176 = vrot.slane %v1174, 5
        %v1177 = vor.u32 %v1173, %v1176
        %v1178 = vrot.slane %v1177, 4
        %v1180 = vshll.u32 %v1104, 16
        %v1182 = vrot.slane %v1180, 5
        %v1183 = vsel %vm1113, %v1178, %v1182
        %v1185 = vshrl.u32 %v1105, 16
        %v1187 = vrot.slane %v1185, 4
        %v1188 = vshll.u32 %v1105, 16
        %v1190 = vrot.slane %v1188, 5
        %v1191 = vor.u32 %v1187, %v1190
        %v1192 = vrot.slane %v1191, 4
        %v1194 = vshll.u32 %v1106, 16
        %v1196 = vrot.slane %v1194, 5
        %v1197 = vsel %vm1113, %v1192, %v1196
        %v1199 = vshrl.u32 %v1107, 16
        %v1201 = vrot.slane %v1199, 4
        %v1202 = vshll.u32 %v1107, 16
        %v1204 = vrot.slane %v1202, 5
        %v1205 = vor.u32 %v1201, %v1204
        %v1206 = vrot.slane %v1205, 4
        %v1208 = vshll.u32 %v1108, 16
        %v1210 = vrot.slane %v1208, 5
        %v1211 = vsel %vm1113, %v1206, %v1210
        %v1213 = vshrl.u32 %v1109, 16
        %v1215 = vrot.slane %v1213, 4
        %v1216 = vshll.u32 %v1109, 16
        %v1218 = vrot.slane %v1216, 5
        %v1219 = vor.u32 %v1215, %v1218
        %v1220 = vrot.slane %v1219, 4
        %v1222 = vshll.u32 %v1110, 16
        %v1224 = vrot.slane %v1222, 5
        %v1225 = vsel %vm1113, %v1220, %v1224
        %s1226 = scalar_lea.vmem %s2, 4
        %v1227 = vld [vmem:[%s1226] sm:$0x3]
        %v1228 = vunpack.c.l.b16 %v1127
        %v1229 = vunpack.c.l.b16 %v1141
        %v1230 = vunpack.c.l.b16 %v1155
        %v1231 = vunpack.c.l.b16 %v1169
        %v1232 = vunpack.c.l.b16 %v1183
        %v1233 = vunpack.c.l.b16 %v1197
        %v1234 = vunpack.c.l.b16 %v1211
        %v1235 = vunpack.c.l.b16 %v1225
        %v1236 = vpack.c.b16 %v1229, %v1228
        %v1237 = vpack.c.b16 %v1231, %v1230
        %v1238 = vpack.c.b16 %v1233, %v1232
        %v1239 = vpack.c.b16 %v1235, %v1234
        %v1241 = vsel %vm870, %v1236, 0
        %v1244 = vsel %vm870, %v1237, 0
        %v1247 = vsel %vm870, %v1238, 0
        %v1250 = vsel %vm870, %v1239, 0
        %v1253 = vsel %vm883, %v1227, 0
        %1255 = vmatprep.subr.bf16.mxu0 0
        %1256 = vmatpush1.bf16.msra.mxu0 %v1253
        %1257 = vmatprep.subr.bf16.mxu0 0
        %1258 = vmatpush1.bf16.msra.mxu0 0
        %1259 = vmatprep.subr.bf16.mxu0 0
        %1260 = vmatpush1.bf16.msra.mxu0 0
        %1261 = vmatprep.subr.bf16.mxu0 0
        %1262 = vmatpush1.bf16.msra.mxu0 0
        %1263 = vmatprep.subr.bf16.mxu0 0
        %1264 = vmatpush1.bf16.msra.mxu0 0
        %1265 = vmatprep.subr.bf16.mxu0 0
        %1266 = vmatpush1.bf16.msra.mxu0 0
        %1267 = vmatprep.subr.bf16.mxu0 0
        %1268 = vmatpush1.bf16.msra.mxu0 0
        %1269 = vmatprep.subr.bf16.mxu0 0
        %1270 = vmatpush1.bf16.msra.mxu0 0
        %1271 = vmatprep.subr.bf16.mxu0 0
        %1272 = vmatpush1.bf16.msra.mxu0 0
        %1273 = vmatprep.subr.bf16.mxu0 0
        %1274 = vmatpush1.bf16.msra.mxu0 0
        %1275 = vmatprep.subr.bf16.mxu0 0
        %1276 = vmatpush1.bf16.msra.mxu0 0
        %1277 = vmatprep.subr.bf16.mxu0 0
        %1278 = vmatpush1.bf16.msra.mxu0 0
        %1279 = vmatprep.subr.bf16.mxu0 0
        %1280 = vmatpush1.bf16.msra.mxu0 0
        %1281 = vmatprep.subr.bf16.mxu0 0
        %1282 = vmatpush1.bf16.msra.mxu0 0
        %1283 = vmatprep.subr.bf16.mxu0 0
        %1284 = vmatpush1.bf16.msra.mxu0 0
        %1285 = vmatprep.subr.bf16.mxu0 0
        %1286 = vmatpush1.bf16.msra.mxu0 0
        %1287 = vmatprep.mubr.bf16.mxu0 0
        %1288 = vmatmul.mubr.bf16.gmra.mrb[0].mxu0 %v1241
        %v1289 = vpop.f32.mrb[0].mxu0
        %v1290 = vadd.f32 0.0, %v1289
        %v1291 = vpop.f32.mrb[0].mxu0
        %v1292 = vpop.f32.mrb[0].mxu0
        %v1293 = vadd.f32 0.0, %v1292
        %v1294 = vpop.f32.mrb[0].mxu0
        %1295 = vmatprep.mubr.bf16.mxu0 0
        %1296 = vmatmul.mubr.bf16.gmra.mrb[0].mxu0 %v1244
        %v1297 = vpop.f32.mrb[0].mxu0
        %v1298 = vadd.f32 0.0, %v1297
        %v1299 = vpop.f32.mrb[0].mxu0
        %v1300 = vpop.f32.mrb[0].mxu0
        %v1301 = vadd.f32 0.0, %v1300
        %v1302 = vpop.f32.mrb[0].mxu0
        %1303 = vmatprep.mubr.bf16.mxu0 0
        %1304 = vmatmul.mubr.bf16.gmra.mrb[0].mxu0 %v1247
        %v1305 = vpop.f32.mrb[0].mxu0
        %v1306 = vadd.f32 0.0, %v1305
        %v1307 = vpop.f32.mrb[0].mxu0
        %v1308 = vpop.f32.mrb[0].mxu0
        %v1309 = vadd.f32 0.0, %v1308
        %v1310 = vpop.f32.mrb[0].mxu0
        %1311 = vmatprep.mubr.bf16.mxu0 0
        %1312 = vmatmul.mubr.bf16.gmra.mrb[0].mxu0 %v1250
        %v1313 = vpop.f32.mrb[0].mxu0
        %v1314 = vadd.f32 0.0, %v1313
        %v1315 = vpop.f32.mrb[0].mxu0
        %v1316 = vpop.f32.mrb[0].mxu0
        %v1317 = vadd.f32 0.0, %v1316
        %v1318 = vpop.f32.mrb[0].mxu0
        %1319 = vdwg.mxu0
        %v1320 = vld [vmem:[#allocation2] sm:$0xff]
        %v1321 = vld [vmem:[#allocation2 + $0x8] sm:$0xff]
        %v1322 = vld [vmem:[#allocation2 + $0x10] sm:$0xff]
        %v1323 = vld [vmem:[#allocation2 + $0x18] sm:$0xff]
        %v1324 = vld [vmem:[#allocation2 + $0x20] sm:$0xff]
        %v1325 = vld [vmem:[#allocation2 + $0x28] sm:$0xff]
        %v1326 = vld [vmem:[#allocation2 + $0x30] sm:$0xff]
        %v1327 = vld [vmem:[#allocation2 + $0x38] sm:$0xff]
        %v1328 = vadd.f32 %v1320, %v1290
        %v1329 = vadd.f32 %v1321, %v1293
        %v1330 = vadd.f32 %v1322, %v1298
        %v1331 = vadd.f32 %v1323, %v1301
        %v1332 = vadd.f32 %v1324, %v1306
        %v1333 = vadd.f32 %v1325, %v1309
        %v1334 = vadd.f32 %v1326, %v1314
        %v1335 = vadd.f32 %v1327, %v1317
        %1336 = vst.msk [vmem:[#allocation2] sm:$0xff] %vm870, %v1328
        %1337 = vst.msk [vmem:[#allocation2 + $0x8] sm:$0xff] %vm870, %v1329
        %1338 = vst.msk [vmem:[#allocation2 + $0x10] sm:$0xff] %vm870, %v1330
        %1339 = vst.msk [vmem:[#allocation2 + $0x18] sm:$0xff] %vm870, %v1331
        %1340 = vst.msk [vmem:[#allocation2 + $0x20] sm:$0xff] %vm870, %v1332
        %1341 = vst.msk [vmem:[#allocation2 + $0x28] sm:$0xff] %vm870, %v1333
        %1342 = vst.msk [vmem:[#allocation2 + $0x30] sm:$0xff] %vm870, %v1334
        %1343 = vst.msk [vmem:[#allocation2 + $0x38] sm:$0xff] %vm870, %v1335
        %s1344 = scalar_lea.vmem %s676, 128 [#allocation4]
        %v1345 = vld [vmem:[%s1344] sm:$0xf]
        %v1346 = vld [vmem:[%s1344 + $0x8] sm:$0xf]
        %v1347 = vld [vmem:[%s1344 + $0x10] sm:$0xf]
        %v1348 = vld [vmem:[%s1344 + $0x18] sm:$0xf]
        %v1349 = vld [vmem:[%s1344 + $0x20] sm:$0xf]
        %v1350 = vld [vmem:[%s1344 + $0x28] sm:$0xf]
        %v1351 = vld [vmem:[%s1344 + $0x30] sm:$0xf]
        %v1352 = vld [vmem:[%s1344 + $0x38] sm:$0xf]
        %s1353 = scalar_lea.vmem %s2, 6
        %v1354 = vld [vmem:[%s1353] sm:$0x3]
        %v1363 = vunpack.c.l.b16 %v1345
        %v1364 = vunpack.c.l.b16 %v1346
        %v1365 = vunpack.c.l.b16 %v1347
        %v1366 = vunpack.c.l.b16 %v1348
        %v1367 = vunpack.c.l.b16 %v1349
        %v1368 = vunpack.c.l.b16 %v1350
        %v1369 = vunpack.c.l.b16 %v1351
        %v1370 = vunpack.c.l.b16 %v1352
        %v1371 = vpack.c.b16 %v1364, %v1363
        %v1372 = vpack.c.b16 %v1366, %v1365
        %v1373 = vpack.c.b16 %v1368, %v1367
        %v1374 = vpack.c.b16 %v1370, %v1369
        %v1376 = vsel %vm870, %v1371, 0
        %v1379 = vsel %vm870, %v1372, 0
        %v1382 = vsel %vm870, %v1373, 0
        %v1385 = vsel %vm870, %v1374, 0
        %v1388 = vsel %vm883, %v1354, 0
        %1390 = vmatprep.subr.bf16.mxu0 0
        %1391 = vmatpush1.bf16.msra.mxu0 %v1388
        %1392 = vmatprep.subr.bf16.mxu0 0
        %1393 = vmatpush1.bf16.msra.mxu0 0
        %1394 = vmatprep.subr.bf16.mxu0 0
        %1395 = vmatpush1.bf16.msra.mxu0 0
        %1396 = vmatprep.subr.bf16.mxu0 0
        %1397 = vmatpush1.bf16.msra.mxu0 0
        %1398 = vmatprep.subr.bf16.mxu0 0
        %1399 = vmatpush1.bf16.msra.mxu0 0
        %1400 = vmatprep.subr.bf16.mxu0 0
        %1401 = vmatpush1.bf16.msra.mxu0 0
        %1402 = vmatprep.subr.bf16.mxu0 0
        %1403 = vmatpush1.bf16.msra.mxu0 0
        %1404 = vmatprep.subr.bf16.mxu0 0
        %1405 = vmatpush1.bf16.msra.mxu0 0
        %1406 = vmatprep.subr.bf16.mxu0 0
        %1407 = vmatpush1.bf16.msra.mxu0 0
        %1408 = vmatprep.subr.bf16.mxu0 0
        %1409 = vmatpush1.bf16.msra.mxu0 0
        %1410 = vmatprep.subr.bf16.mxu0 0
        %1411 = vmatpush1.bf16.msra.mxu0 0
        %1412 = vmatprep.subr.bf16.mxu0 0
        %1413 = vmatpush1.bf16.msra.mxu0 0
        %1414 = vmatprep.subr.bf16.mxu0 0
        %1415 = vmatpush1.bf16.msra.mxu0 0
        %1416 = vmatprep.subr.bf16.mxu0 0
        %1417 = vmatpush1.bf16.msra.mxu0 0
        %1418 = vmatprep.subr.bf16.mxu0 0
        %1419 = vmatpush1.bf16.msra.mxu0 0
        %1420 = vmatprep.subr.bf16.mxu0 0
        %1421 = vmatpush1.bf16.msra.mxu0 0
        %1422 = vmatprep.mubr.bf16.mxu0 0
        %1423 = vmatmul.mubr.bf16.gmra.mrb[0].mxu0 %v1376
        %v1424 = vpop.f32.mrb[0].mxu0
        %v1425 = vadd.f32 0.0, %v1424
        %v1426 = vpop.f32.mrb[0].mxu0
        %v1427 = vpop.f32.mrb[0].mxu0
        %v1428 = vadd.f32 0.0, %v1427
        %v1429 = vpop.f32.mrb[0].mxu0
        %1430 = vmatprep.mubr.bf16.mxu0 0
        %1431 = vmatmul.mubr.bf16.gmra.mrb[0].mxu0 %v1379
        %v1432 = vpop.f32.mrb[0].mxu0
        %v1433 = vadd.f32 0.0, %v1432
        %v1434 = vpop.f32.mrb[0].mxu0
        %v1435 = vpop.f32.mrb[0].mxu0
        %v1436 = vadd.f32 0.0, %v1435
        %v1437 = vpop.f32.mrb[0].mxu0
        %1438 = vmatprep.mubr.bf16.mxu0 0
        %1439 = vmatmul.mubr.bf16.gmra.mrb[0].mxu0 %v1382
        %v1440 = vpop.f32.mrb[0].mxu0
        %v1441 = vadd.f32 0.0, %v1440
        %v1442 = vpop.f32.mrb[0].mxu0
        %v1443 = vpop.f32.mrb[0].mxu0
        %v1444 = vadd.f32 0.0, %v1443
        %v1445 = vpop.f32.mrb[0].mxu0
        %1446 = vmatprep.mubr.bf16.mxu0 0
        %1447 = vmatmul.mubr.bf16.gmra.mrb[0].mxu0 %v1385
        %v1448 = vpop.f32.mrb[0].mxu0
        %v1449 = vadd.f32 0.0, %v1448
        %v1450 = vpop.f32.mrb[0].mxu0
        %v1451 = vpop.f32.mrb[0].mxu0
        %v1452 = vadd.f32 0.0, %v1451
        %v1453 = vpop.f32.mrb[0].mxu0
        %1454 = vdwg.mxu0
        %v1455 = vld [vmem:[#allocation2] sm:$0xff]
        %v1456 = vld [vmem:[#allocation2 + $0x8] sm:$0xff]
        %v1457 = vld [vmem:[#allocation2 + $0x10] sm:$0xff]
        %v1458 = vld [vmem:[#allocation2 + $0x18] sm:$0xff]
        %v1459 = vld [vmem:[#allocation2 + $0x20] sm:$0xff]
        %v1460 = vld [vmem:[#allocation2 + $0x28] sm:$0xff]
        %v1461 = vld [vmem:[#allocation2 + $0x30] sm:$0xff]
        %v1462 = vld [vmem:[#allocation2 + $0x38] sm:$0xff]
        %v1463 = vadd.f32 %v1455, %v1425
        %v1464 = vadd.f32 %v1456, %v1428
        %v1465 = vadd.f32 %v1457, %v1433
        %v1466 = vadd.f32 %v1458, %v1436
        %v1467 = vadd.f32 %v1459, %v1441
        %v1468 = vadd.f32 %v1460, %v1444
        %v1469 = vadd.f32 %v1461, %v1449
        %v1470 = vadd.f32 %v1462, %v1452
        %1471 = vst.msk [vmem:[#allocation2] sm:$0xff] %vm870, %v1463
        %1472 = vst.msk [vmem:[#allocation2 + $0x8] sm:$0xff] %vm870, %v1464
        %1473 = vst.msk [vmem:[#allocation2 + $0x10] sm:$0xff] %vm870, %v1465
        %1474 = vst.msk [vmem:[#allocation2 + $0x18] sm:$0xff] %vm870, %v1466
        %1475 = vst.msk [vmem:[#allocation2 + $0x20] sm:$0xff] %vm870, %v1467
        %1476 = vst.msk [vmem:[#allocation2 + $0x28] sm:$0xff] %vm870, %v1468
        %1477 = vst.msk [vmem:[#allocation2 + $0x30] sm:$0xff] %vm870, %v1469
        %1478 = vst.msk [vmem:[#allocation2 + $0x38] sm:$0xff] %vm870, %v1470
        %s1479 = scalar_lea.vmem %s676, 192 [#allocation4]
        %v1480 = vld [vmem:[%s1479] sm:$0xf]
        %v1481 = vld [vmem:[%s1479 + $0x8] sm:$0xf]
        %v1482 = vld [vmem:[%s1479 + $0x10] sm:$0xf]
        %v1483 = vld [vmem:[%s1479 + $0x18] sm:$0xf]
        %v1484 = vld [vmem:[%s1479 + $0x20] sm:$0xf]
        %v1485 = vld [vmem:[%s1479 + $0x28] sm:$0xf]
        %v1486 = vld [vmem:[%s1479 + $0x30] sm:$0xf]
        %v1487 = vld [vmem:[%s1479 + $0x38] sm:$0xf]
        %s1488 = scalar_lea.vmem %s2, 8
        %v1489 = vld [vmem:[%s1488] sm:$0x3]
        %v1498 = vunpack.c.l.b16 %v1480
        %v1499 = vunpack.c.l.b16 %v1481
        %v1500 = vunpack.c.l.b16 %v1482
        %v1501 = vunpack.c.l.b16 %v1483
        %v1502 = vunpack.c.l.b16 %v1484
        %v1503 = vunpack.c.l.b16 %v1485
        %v1504 = vunpack.c.l.b16 %v1486
        %v1505 = vunpack.c.l.b16 %v1487
        %v1506 = vpack.c.b16 %v1499, %v1498
        %v1507 = vpack.c.b16 %v1501, %v1500
        %v1508 = vpack.c.b16 %v1503, %v1502
        %v1509 = vpack.c.b16 %v1505, %v1504
        %v1511 = vsel %vm870, %v1506, 0
        %v1514 = vsel %vm870, %v1507, 0
        %v1517 = vsel %vm870, %v1508, 0
        %v1520 = vsel %vm870, %v1509, 0
        %v1523 = vsel %vm883, %v1489, 0
        %1525 = vmatprep.subr.bf16.mxu0 0
        %1526 = vmatpush1.bf16.msra.mxu0 %v1523
        %1527 = vmatprep.subr.bf16.mxu0 0
        %1528 = vmatpush1.bf16.msra.mxu0 0
        %1529 = vmatprep.subr.bf16.mxu0 0
        %1530 = vmatpush1.bf16.msra.mxu0 0
        %1531 = vmatprep.subr.bf16.mxu0 0
        %1532 = vmatpush1.bf16.msra.mxu0 0
        %1533 = vmatprep.subr.bf16.mxu0 0
        %1534 = vmatpush1.bf16.msra.mxu0 0
        %1535 = vmatprep.subr.bf16.mxu0 0
        %1536 = vmatpush1.bf16.msra.mxu0 0
        %1537 = vmatprep.subr.bf16.mxu0 0
        %1538 = vmatpush1.bf16.msra.mxu0 0
        %1539 = vmatprep.subr.bf16.mxu0 0
        %1540 = vmatpush1.bf16.msra.mxu0 0
        %1541 = vmatprep.subr.bf16.mxu0 0
        %1542 = vmatpush1.bf16.msra.mxu0 0
        %1543 = vmatprep.subr.bf16.mxu0 0
        %1544 = vmatpush1.bf16.msra.mxu0 0
        %1545 = vmatprep.subr.bf16.mxu0 0
        %1546 = vmatpush1.bf16.msra.mxu0 0
        %1547 = vmatprep.subr.bf16.mxu0 0
        %1548 = vmatpush1.bf16.msra.mxu0 0
        %1549 = vmatprep.subr.bf16.mxu0 0
        %1550 = vmatpush1.bf16.msra.mxu0 0
        %1551 = vmatprep.subr.bf16.mxu0 0
        %1552 = vmatpush1.bf16.msra.mxu0 0
        %1553 = vmatprep.subr.bf16.mxu0 0
        %1554 = vmatpush1.bf16.msra.mxu0 0
        %1555 = vmatprep.subr.bf16.mxu0 0
        %1556 = vmatpush1.bf16.msra.mxu0 0
        %1557 = vmatprep.mubr.bf16.mxu0 0
        %1558 = vmatmul.mubr.bf16.gmra.mrb[0].mxu0 %v1511
        %v1559 = vpop.f32.mrb[0].mxu0
        %v1560 = vadd.f32 0.0, %v1559
        %v1561 = vpop.f32.mrb[0].mxu0
        %v1562 = vpop.f32.mrb[0].mxu0
        %v1563 = vadd.f32 0.0, %v1562
        %v1564 = vpop.f32.mrb[0].mxu0
        %1565 = vmatprep.mubr.bf16.mxu0 0
        %1566 = vmatmul.mubr.bf16.gmra.mrb[0].mxu0 %v1514
        %v1567 = vpop.f32.mrb[0].mxu0
        %v1568 = vadd.f32 0.0, %v1567
        %v1569 = vpop.f32.mrb[0].mxu0
        %v1570 = vpop.f32.mrb[0].mxu0
        %v1571 = vadd.f32 0.0, %v1570
        %v1572 = vpop.f32.mrb[0].mxu0
        %1573 = vmatprep.mubr.bf16.mxu0 0
        %1574 = vmatmul.mubr.bf16.gmra.mrb[0].mxu0 %v1517
        %v1575 = vpop.f32.mrb[0].mxu0
        %v1576 = vadd.f32 0.0, %v1575
        %v1577 = vpop.f32.mrb[0].mxu0
        %v1578 = vpop.f32.mrb[0].mxu0
        %v1579 = vadd.f32 0.0, %v1578
        %v1580 = vpop.f32.mrb[0].mxu0
        %1581 = vmatprep.mubr.bf16.mxu0 0
        %1582 = vmatmul.mubr.bf16.gmra.mrb[0].mxu0 %v1520
        %v1583 = vpop.f32.mrb[0].mxu0
        %v1584 = vadd.f32 0.0, %v1583
        %v1585 = vpop.f32.mrb[0].mxu0
        %v1586 = vpop.f32.mrb[0].mxu0
        %v1587 = vadd.f32 0.0, %v1586
        %v1588 = vpop.f32.mrb[0].mxu0
        %1589 = vdwg.mxu0
        %v1590 = vld [vmem:[#allocation2] sm:$0xff]
        %v1591 = vld [vmem:[#allocation2 + $0x8] sm:$0xff]
        %v1592 = vld [vmem:[#allocation2 + $0x10] sm:$0xff]
        %v1593 = vld [vmem:[#allocation2 + $0x18] sm:$0xff]
        %v1594 = vld [vmem:[#allocation2 + $0x20] sm:$0xff]
        %v1595 = vld [vmem:[#allocation2 + $0x28] sm:$0xff]
        %v1596 = vld [vmem:[#allocation2 + $0x30] sm:$0xff]
        %v1597 = vld [vmem:[#allocation2 + $0x38] sm:$0xff]
        %v1598 = vadd.f32 %v1590, %v1560
        %v1599 = vadd.f32 %v1591, %v1563
        %v1600 = vadd.f32 %v1592, %v1568
        %v1601 = vadd.f32 %v1593, %v1571
        %v1602 = vadd.f32 %v1594, %v1576
        %v1603 = vadd.f32 %v1595, %v1579
        %v1604 = vadd.f32 %v1596, %v1584
        %v1605 = vadd.f32 %v1597, %v1587
        %1606 = vst.msk [vmem:[#allocation2] sm:$0xff] %vm870, %v1598
        %1607 = vst.msk [vmem:[#allocation2 + $0x8] sm:$0xff] %vm870, %v1599
        %1608 = vst.msk [vmem:[#allocation2 + $0x10] sm:$0xff] %vm870, %v1600
        %1609 = vst.msk [vmem:[#allocation2 + $0x18] sm:$0xff] %vm870, %v1601
        %1610 = vst.msk [vmem:[#allocation2 + $0x20] sm:$0xff] %vm870, %v1602
        %1611 = vst.msk [vmem:[#allocation2 + $0x28] sm:$0xff] %vm870, %v1603
        %1612 = vst.msk [vmem:[#allocation2 + $0x30] sm:$0xff] %vm870, %v1604
        %1613 = vst.msk [vmem:[#allocation2 + $0x38] sm:$0xff] %vm870, %v1605
        %v1614 = vld [vmem:[%s1344] sm:$0xf]
        %v1615 = vld [vmem:[%s1344 + $0x4] sm:$0x1]
        %v1616 = vld [vmem:[%s1344 + $0x8] sm:$0xf]
        %v1617 = vld [vmem:[%s1344 + $0xc] sm:$0x1]
        %v1618 = vld [vmem:[%s1344 + $0x10] sm:$0xf]
        %v1619 = vld [vmem:[%s1344 + $0x14] sm:$0x1]
        %v1620 = vld [vmem:[%s1344 + $0x18] sm:$0xf]
        %v1621 = vld [vmem:[%s1344 + $0x1c] sm:$0x1]
        %v1622 = vld [vmem:[%s1344 + $0x20] sm:$0xf]
        %v1623 = vld [vmem:[%s1344 + $0x24] sm:$0x1]
        %v1624 = vld [vmem:[%s1344 + $0x28] sm:$0xf]
        %v1625 = vld [vmem:[%s1344 + $0x2c] sm:$0x1]
        %v1626 = vld [vmem:[%s1344 + $0x30] sm:$0xf]
        %v1627 = vld [vmem:[%s1344 + $0x34] sm:$0x1]
        %v1628 = vld [vmem:[%s1344 + $0x38] sm:$0xf]
        %v1629 = vld [vmem:[%s1344 + $0x3c] sm:$0x1]
        %v1631 = vshrl.u32 %v1614, 16
        %v1633 = vrot.slane %v1631, 4
        %v1634 = vshll.u32 %v1614, 16
        %v1636 = vrot.slane %v1634, 5
        %v1637 = vor.u32 %v1633, %v1636
        %v1638 = vrot.slane %v1637, 4
        %v1640 = vshll.u32 %v1615, 16
        %v1642 = vrot.slane %v1640, 5
        %v1643 = vsel %vm1113, %v1638, %v1642
        %v1645 = vshrl.u32 %v1616, 16
        %v1647 = vrot.slane %v1645, 4
        %v1648 = vshll.u32 %v1616, 16
        %v1650 = vrot.slane %v1648, 5
        %v1651 = vor.u32 %v1647, %v1650
        %v1652 = vrot.slane %v1651, 4
        %v1654 = vshll.u32 %v1617, 16
        %v1656 = vrot.slane %v1654, 5
        %v1657 = vsel %vm1113, %v1652, %v1656
        %v1659 = vshrl.u32 %v1618, 16
        %v1661 = vrot.slane %v1659, 4
        %v1662 = vshll.u32 %v1618, 16
        %v1664 = vrot.slane %v1662, 5
        %v1665 = vor.u32 %v1661, %v1664
        %v1666 = vrot.slane %v1665, 4
        %v1668 = vshll.u32 %v1619, 16
        %v1670 = vrot.slane %v1668, 5
        %v1671 = vsel %vm1113, %v1666, %v1670
        %v1673 = vshrl.u32 %v1620, 16
        %v1675 = vrot.slane %v1673, 4
        %v1676 = vshll.u32 %v1620, 16
        %v1678 = vrot.slane %v1676, 5
        %v1679 = vor.u32 %v1675, %v1678
        %v1680 = vrot.slane %v1679, 4
        %v1682 = vshll.u32 %v1621, 16
        %v1684 = vrot.slane %v1682, 5
        %v1685 = vsel %vm1113, %v1680, %v1684
        %v1687 = vshrl.u32 %v1622, 16
        %v1689 = vrot.slane %v1687, 4
        %v1690 = vshll.u32 %v1622, 16
        %v1692 = vrot.slane %v1690, 5
        %v1693 = vor.u32 %v1689, %v1692
        %v1694 = vrot.slane %v1693, 4
        %v1696 = vshll.u32 %v1623, 16
        %v1698 = vrot.slane %v1696, 5
        %v1699 = vsel %vm1113, %v1694, %v1698
        %v1701 = vshrl.u32 %v1624, 16
        %v1703 = vrot.slane %v1701, 4
        %v1704 = vshll.u32 %v1624, 16
        %v1706 = vrot.slane %v1704, 5
        %v1707 = vor.u32 %v1703, %v1706
        %v1708 = vrot.slane %v1707, 4
        %v1710 = vshll.u32 %v1625, 16
        %v1712 = vrot.slane %v1710, 5
        %v1713 = vsel %vm1113, %v1708, %v1712
        %v1715 = vshrl.u32 %v1626, 16
        %v1717 = vrot.slane %v1715, 4
        %v1718 = vshll.u32 %v1626, 16
        %v1720 = vrot.slane %v1718, 5
        %v1721 = vor.u32 %v1717, %v1720
        %v1722 = vrot.slane %v1721, 4
        %v1724 = vshll.u32 %v1627, 16
        %v1726 = vrot.slane %v1724, 5
        %v1727 = vsel %vm1113, %v1722, %v1726
        %v1729 = vshrl.u32 %v1628, 16
        %v1731 = vrot.slane %v1729, 4
        %v1732 = vshll.u32 %v1628, 16
        %v1734 = vrot.slane %v1732, 5
        %v1735 = vor.u32 %v1731, %v1734
        %v1736 = vrot.slane %v1735, 4
        %v1738 = vshll.u32 %v1629, 16
        %v1740 = vrot.slane %v1738, 5
        %v1741 = vsel %vm1113, %v1736, %v1740
        %s1742 = scalar_lea.vmem %s2, 10
        %v1743 = vld [vmem:[%s1742] sm:$0x3]
        %v1744 = vunpack.c.l.b16 %v1643
        %v1745 = vunpack.c.l.b16 %v1657
        %v1746 = vunpack.c.l.b16 %v1671
        %v1747 = vunpack.c.l.b16 %v1685
        %v1748 = vunpack.c.l.b16 %v1699
        %v1749 = vunpack.c.l.b16 %v1713
        %v1750 = vunpack.c.l.b16 %v1727
        %v1751 = vunpack.c.l.b16 %v1741
        %v1752 = vpack.c.b16 %v1745, %v1744
        %v1753 = vpack.c.b16 %v1747, %v1746
        %v1754 = vpack.c.b16 %v1749, %v1748
        %v1755 = vpack.c.b16 %v1751, %v1750
        %v1757 = vsel %vm870, %v1752, 0
        %v1760 = vsel %vm870, %v1753, 0
        %v1763 = vsel %vm870, %v1754, 0
        %v1766 = vsel %vm870, %v1755, 0
        %v1769 = vsel %vm883, %v1743, 0
        %1771 = vmatprep.subr.bf16.mxu0 0
        %1772 = vmatpush1.bf16.msra.mxu0 %v1769
        %1773 = vmatprep.subr.bf16.mxu0 0
        %1774 = vmatpush1.bf16.msra.mxu0 0
        %1775 = vmatprep.subr.bf16.mxu0 0
        %1776 = vmatpush1.bf16.msra.mxu0 0
        %1777 = vmatprep.subr.bf16.mxu0 0
        %1778 = vmatpush1.bf16.msra.mxu0 0
        %1779 = vmatprep.subr.bf16.mxu0 0
        %1780 = vmatpush1.bf16.msra.mxu0 0
        %1781 = vmatprep.subr.bf16.mxu0 0
        %1782 = vmatpush1.bf16.msra.mxu0 0
        %1783 = vmatprep.subr.bf16.mxu0 0
        %1784 = vmatpush1.bf16.msra.mxu0 0
        %1785 = vmatprep.subr.bf16.mxu0 0
        %1786 = vmatpush1.bf16.msra.mxu0 0
        %1787 = vmatprep.subr.bf16.mxu0 0
        %1788 = vmatpush1.bf16.msra.mxu0 0
        %1789 = vmatprep.subr.bf16.mxu0 0
        %1790 = vmatpush1.bf16.msra.mxu0 0
        %1791 = vmatprep.subr.bf16.mxu0 0
        %1792 = vmatpush1.bf16.msra.mxu0 0
        %1793 = vmatprep.subr.bf16.mxu0 0
        %1794 = vmatpush1.bf16.msra.mxu0 0
        %1795 = vmatprep.subr.bf16.mxu0 0
        %1796 = vmatpush1.bf16.msra.mxu0 0
        %1797 = vmatprep.subr.bf16.mxu0 0
        %1798 = vmatpush1.bf16.msra.mxu0 0
        %1799 = vmatprep.subr.bf16.mxu0 0
        %1800 = vmatpush1.bf16.msra.mxu0 0
        %1801 = vmatprep.subr.bf16.mxu0 0
        %1802 = vmatpush1.bf16.msra.mxu0 0
        %1803 = vmatprep.mubr.bf16.mxu0 0
        %1804 = vmatmul.mubr.bf16.gmra.mrb[0].mxu0 %v1757
        %v1805 = vpop.f32.mrb[0].mxu0
        %v1806 = vadd.f32 0.0, %v1805
        %v1807 = vpop.f32.mrb[0].mxu0
        %v1808 = vpop.f32.mrb[0].mxu0
        %v1809 = vadd.f32 0.0, %v1808
        %v1810 = vpop.f32.mrb[0].mxu0
        %1811 = vmatprep.mubr.bf16.mxu0 0
        %1812 = vmatmul.mubr.bf16.gmra.mrb[0].mxu0 %v1760
        %v1813 = vpop.f32.mrb[0].mxu0
        %v1814 = vadd.f32 0.0, %v1813
        %v1815 = vpop.f32.mrb[0].mxu0
        %v1816 = vpop.f32.mrb[0].mxu0
        %v1817 = vadd.f32 0.0, %v1816
        %v1818 = vpop.f32.mrb[0].mxu0
        %1819 = vmatprep.mubr.bf16.mxu0 0
        %1820 = vmatmul.mubr.bf16.gmra.mrb[0].mxu0 %v1763
        %v1821 = vpop.f32.mrb[0].mxu0
        %v1822 = vadd.f32 0.0, %v1821
        %v1823 = vpop.f32.mrb[0].mxu0
        %v1824 = vpop.f32.mrb[0].mxu0
        %v1825 = vadd.f32 0.0, %v1824
        %v1826 = vpop.f32.mrb[0].mxu0
        %1827 = vmatprep.mubr.bf16.mxu0 0
        %1828 = vmatmul.mubr.bf16.gmra.mrb[0].mxu0 %v1766
        %v1829 = vpop.f32.mrb[0].mxu0
        %v1830 = vadd.f32 0.0, %v1829
        %v1831 = vpop.f32.mrb[0].mxu0
        %v1832 = vpop.f32.mrb[0].mxu0
        %v1833 = vadd.f32 0.0, %v1832
        %v1834 = vpop.f32.mrb[0].mxu0
        %1835 = vdwg.mxu0
        %v1836 = vld [vmem:[#allocation2] sm:$0xff]
        %v1837 = vld [vmem:[#allocation2 + $0x8] sm:$0xff]
        %v1838 = vld [vmem:[#allocation2 + $0x10] sm:$0xff]
        %v1839 = vld [vmem:[#allocation2 + $0x18] sm:$0xff]
        %v1840 = vld [vmem:[#allocation2 + $0x20] sm:$0xff]
        %v1841 = vld [vmem:[#allocation2 + $0x28] sm:$0xff]
        %v1842 = vld [vmem:[#allocation2 + $0x30] sm:$0xff]
        %v1843 = vld [vmem:[#allocation2 + $0x38] sm:$0xff]
        %v1844 = vadd.f32 %v1836, %v1806
        %v1845 = vadd.f32 %v1837, %v1809
        %v1846 = vadd.f32 %v1838, %v1814
        %v1847 = vadd.f32 %v1839, %v1817
        %v1848 = vadd.f32 %v1840, %v1822
        %v1849 = vadd.f32 %v1841, %v1825
        %v1850 = vadd.f32 %v1842, %v1830
        %v1851 = vadd.f32 %v1843, %v1833
        %1852 = vst.msk [vmem:[#allocation2] sm:$0xff] %vm870, %v1844
        %1853 = vst.msk [vmem:[#allocation2 + $0x8] sm:$0xff] %vm870, %v1845
        %1854 = vst.msk [vmem:[#allocation2 + $0x10] sm:$0xff] %vm870, %v1846
        %1855 = vst.msk [vmem:[#allocation2 + $0x18] sm:$0xff] %vm870, %v1847
        %1856 = vst.msk [vmem:[#allocation2 + $0x20] sm:$0xff] %vm870, %v1848
        %1857 = vst.msk [vmem:[#allocation2 + $0x28] sm:$0xff] %vm870, %v1849
        %1858 = vst.msk [vmem:[#allocation2 + $0x30] sm:$0xff] %vm870, %v1850
        %1859 = vst.msk [vmem:[#allocation2 + $0x38] sm:$0xff] %vm870, %v1851
        %s1860 = scalar_lea.vmem [#allocation3], 8
        %v1861 = vld [vmem:[%s1860] sm:$0xf]
        %v1862 = vld [vmem:[%s1860 + $0x8] sm:$0xf]
        %v1863 = vld [vmem:[%s1860 + $0x10] sm:$0xf]
        %v1864 = vld [vmem:[%s1860 + $0x18] sm:$0xf]
        %v1865 = vld [vmem:[%s1860 + $0x20] sm:$0xf]
        %v1866 = vld [vmem:[%s1860 + $0x28] sm:$0xf]
        %v1867 = vld [vmem:[%s1860 + $0x30] sm:$0xf]
        %v1868 = vld [vmem:[%s1860 + $0x38] sm:$0xf]
        %s1869 = scalar_lea.vmem %s2, 12
        %v1870 = vld [vmem:[%s1869] sm:$0x3]
        %v1879 = vunpack.c.l.b16 %v1861
        %v1880 = vunpack.c.l.b16 %v1862
        %v1881 = vunpack.c.l.b16 %v1863
        %v1882 = vunpack.c.l.b16 %v1864
        %v1883 = vunpack.c.l.b16 %v1865
        %v1884 = vunpack.c.l.b16 %v1866
        %v1885 = vunpack.c.l.b16 %v1867
        %v1886 = vunpack.c.l.b16 %v1868
        %v1887 = vpack.c.b16 %v1880, %v1879
        %v1888 = vpack.c.b16 %v1882, %v1881
        %v1889 = vpack.c.b16 %v1884, %v1883
        %v1890 = vpack.c.b16 %v1886, %v1885
        %v1892 = vsel %vm870, %v1887, 0
        %v1895 = vsel %vm870, %v1888, 0
        %v1898 = vsel %vm870, %v1889, 0
        %v1901 = vsel %vm870, %v1890, 0
        %v1904 = vsel %vm883, %v1870, 0
        %1906 = vmatprep.subr.bf16.mxu0 0
        %1907 = vmatpush1.bf16.msra.mxu0 %v1904
        %1908 = vmatprep.subr.bf16.mxu0 0
        %1909 = vmatpush1.bf16.msra.mxu0 0
        %1910 = vmatprep.subr.bf16.mxu0 0
        %1911 = vmatpush1.bf16.msra.mxu0 0
        %1912 = vmatprep.subr.bf16.mxu0 0
        %1913 = vmatpush1.bf16.msra.mxu0 0
        %1914 = vmatprep.subr.bf16.mxu0 0
        %1915 = vmatpush1.bf16.msra.mxu0 0
        %1916 = vmatprep.subr.bf16.mxu0 0
        %1917 = vmatpush1.bf16.msra.mxu0 0
        %1918 = vmatprep.subr.bf16.mxu0 0
        %1919 = vmatpush1.bf16.msra.mxu0 0
        %1920 = vmatprep.subr.bf16.mxu0 0
        %1921 = vmatpush1.bf16.msra.mxu0 0
        %1922 = vmatprep.subr.bf16.mxu0 0
        %1923 = vmatpush1.bf16.msra.mxu0 0
        %1924 = vmatprep.subr.bf16.mxu0 0
        %1925 = vmatpush1.bf16.msra.mxu0 0
        %1926 = vmatprep.subr.bf16.mxu0 0
        %1927 = vmatpush1.bf16.msra.mxu0 0
        %1928 = vmatprep.subr.bf16.mxu0 0
        %1929 = vmatpush1.bf16.msra.mxu0 0
        %1930 = vmatprep.subr.bf16.mxu0 0
        %1931 = vmatpush1.bf16.msra.mxu0 0
        %1932 = vmatprep.subr.bf16.mxu0 0
        %1933 = vmatpush1.bf16.msra.mxu0 0
        %1934 = vmatprep.subr.bf16.mxu0 0
        %1935 = vmatpush1.bf16.msra.mxu0 0
        %1936 = vmatprep.subr.bf16.mxu0 0
        %1937 = vmatpush1.bf16.msra.mxu0 0
        %1938 = vmatprep.mubr.bf16.mxu0 0
        %1939 = vmatmul.mubr.bf16.gmra.mrb[0].mxu0 %v1892
        %v1940 = vpop.f32.mrb[0].mxu0
        %v1941 = vadd.f32 0.0, %v1940
        %v1942 = vpop.f32.mrb[0].mxu0
        %v1943 = vpop.f32.mrb[0].mxu0
        %v1944 = vadd.f32 0.0, %v1943
        %v1945 = vpop.f32.mrb[0].mxu0
        %1946 = vmatprep.mubr.bf16.mxu0 0
        %1947 = vmatmul.mubr.bf16.gmra.mrb[0].mxu0 %v1895
        %v1948 = vpop.f32.mrb[0].mxu0
        %v1949 = vadd.f32 0.0, %v1948
        %v1950 = vpop.f32.mrb[0].mxu0
        %v1951 = vpop.f32.mrb[0].mxu0
        %v1952 = vadd.f32 0.0, %v1951
        %v1953 = vpop.f32.mrb[0].mxu0
        %1954 = vmatprep.mubr.bf16.mxu0 0
        %1955 = vmatmul.mubr.bf16.gmra.mrb[0].mxu0 %v1898
        %v1956 = vpop.f32.mrb[0].mxu0
        %v1957 = vadd.f32 0.0, %v1956
        %v1958 = vpop.f32.mrb[0].mxu0
        %v1959 = vpop.f32.mrb[0].mxu0
        %v1960 = vadd.f32 0.0, %v1959
        %v1961 = vpop.f32.mrb[0].mxu0
        %1962 = vmatprep.mubr.bf16.mxu0 0
        %1963 = vmatmul.mubr.bf16.gmra.mrb[0].mxu0 %v1901
        %v1964 = vpop.f32.mrb[0].mxu0
        %v1965 = vadd.f32 0.0, %v1964
        %v1966 = vpop.f32.mrb[0].mxu0
        %v1967 = vpop.f32.mrb[0].mxu0
        %v1968 = vadd.f32 0.0, %v1967
        %v1969 = vpop.f32.mrb[0].mxu0
        %1970 = vdwg.mxu0
        %v1971 = vld [vmem:[#allocation2] sm:$0xff]
        %v1972 = vld [vmem:[#allocation2 + $0x8] sm:$0xff]
        %v1973 = vld [vmem:[#allocation2 + $0x10] sm:$0xff]
        %v1974 = vld [vmem:[#allocation2 + $0x18] sm:$0xff]
        %v1975 = vld [vmem:[#allocation2 + $0x20] sm:$0xff]
        %v1976 = vld [vmem:[#allocation2 + $0x28] sm:$0xff]
        %v1977 = vld [vmem:[#allocation2 + $0x30] sm:$0xff]
        %v1978 = vld [vmem:[#allocation2 + $0x38] sm:$0xff]
        %v1979 = vadd.f32 %v1971, %v1941
        %v1980 = vadd.f32 %v1972, %v1944
        %v1981 = vadd.f32 %v1973, %v1949
        %v1982 = vadd.f32 %v1974, %v1952
        %v1983 = vadd.f32 %v1975, %v1957
        %v1984 = vadd.f32 %v1976, %v1960
        %v1985 = vadd.f32 %v1977, %v1965
        %v1986 = vadd.f32 %v1978, %v1968
        %1987 = vst.msk [vmem:[#allocation2] sm:$0xff] %vm870, %v1979
        %1988 = vst.msk [vmem:[#allocation2 + $0x8] sm:$0xff] %vm870, %v1980
        %1989 = vst.msk [vmem:[#allocation2 + $0x10] sm:$0xff] %vm870, %v1981
        %1990 = vst.msk [vmem:[#allocation2 + $0x18] sm:$0xff] %vm870, %v1982
        %1991 = vst.msk [vmem:[#allocation2 + $0x20] sm:$0xff] %vm870, %v1983
        %1992 = vst.msk [vmem:[#allocation2 + $0x28] sm:$0xff] %vm870, %v1984
        %1993 = vst.msk [vmem:[#allocation2 + $0x30] sm:$0xff] %vm870, %v1985
        %1994 = vst.msk [vmem:[#allocation2 + $0x38] sm:$0xff] %vm870, %v1986
        %s1995 = scalar_lea.vmem [#allocation3], 80
        %v1996 = vld [vmem:[%s1995] sm:$0xf]
        %v1997 = vld [vmem:[%s1995 + $0x8] sm:$0xf]
        %v1998 = vld [vmem:[%s1995 + $0x10] sm:$0xf]
        %v1999 = vld [vmem:[%s1995 + $0x18] sm:$0xf]
        %v2000 = vld [vmem:[%s1995 + $0x20] sm:$0xf]
        %v2001 = vld [vmem:[%s1995 + $0x28] sm:$0xf]
        %v2002 = vld [vmem:[%s1995 + $0x30] sm:$0xf]
        %v2003 = vld [vmem:[%s1995 + $0x38] sm:$0xf]
        %s2004 = scalar_lea.vmem %s2, 14
        %v2005 = vld [vmem:[%s2004] sm:$0x3]
        %v2014 = vunpack.c.l.b16 %v1996
        %v2015 = vunpack.c.l.b16 %v1997
        %v2016 = vunpack.c.l.b16 %v1998
        %v2017 = vunpack.c.l.b16 %v1999
        %v2018 = vunpack.c.l.b16 %v2000
        %v2019 = vunpack.c.l.b16 %v2001
        %v2020 = vunpack.c.l.b16 %v2002
        %v2021 = vunpack.c.l.b16 %v2003
        %v2022 = vpack.c.b16 %v2015, %v2014
        %v2023 = vpack.c.b16 %v2017, %v2016
        %v2024 = vpack.c.b16 %v2019, %v2018
        %v2025 = vpack.c.b16 %v2021, %v2020
        %v2027 = vsel %vm870, %v2022, 0
        %v2030 = vsel %vm870, %v2023, 0
        %v2033 = vsel %vm870, %v2024, 0
        %v2036 = vsel %vm870, %v2025, 0
        %v2039 = vsel %vm883, %v2005, 0
        %2041 = vmatprep.subr.bf16.mxu0 0
        %2042 = vmatpush1.bf16.msra.mxu0 %v2039
        %2043 = vmatprep.subr.bf16.mxu0 0
        %2044 = vmatpush1.bf16.msra.mxu0 0
        %2045 = vmatprep.subr.bf16.mxu0 0
        %2046 = vmatpush1.bf16.msra.mxu0 0
        %2047 = vmatprep.subr.bf16.mxu0 0
        %2048 = vmatpush1.bf16.msra.mxu0 0
        %2049 = vmatprep.subr.bf16.mxu0 0
        %2050 = vmatpush1.bf16.msra.mxu0 0
        %2051 = vmatprep.subr.bf16.mxu0 0
        %2052 = vmatpush1.bf16.msra.mxu0 0
        %2053 = vmatprep.subr.bf16.mxu0 0
        %2054 = vmatpush1.bf16.msra.mxu0 0
        %2055 = vmatprep.subr.bf16.mxu0 0
        %2056 = vmatpush1.bf16.msra.mxu0 0
        %2057 = vmatprep.subr.bf16.mxu0 0
        %2058 = vmatpush1.bf16.msra.mxu0 0
        %2059 = vmatprep.subr.bf16.mxu0 0
        %2060 = vmatpush1.bf16.msra.mxu0 0
        %2061 = vmatprep.subr.bf16.mxu0 0
        %2062 = vmatpush1.bf16.msra.mxu0 0
        %2063 = vmatprep.subr.bf16.mxu0 0
        %2064 = vmatpush1.bf16.msra.mxu0 0
        %2065 = vmatprep.subr.bf16.mxu0 0
        %2066 = vmatpush1.bf16.msra.mxu0 0
        %2067 = vmatprep.subr.bf16.mxu0 0
        %2068 = vmatpush1.bf16.msra.mxu0 0
        %2069 = vmatprep.subr.bf16.mxu0 0
        %2070 = vmatpush1.bf16.msra.mxu0 0
        %2071 = vmatprep.subr.bf16.mxu0 0
        %2072 = vmatpush1.bf16.msra.mxu0 0
        %2073 = vmatprep.mubr.bf16.mxu0 0
        %2074 = vmatmul.mubr.bf16.gmra.mrb[0].mxu0 %v2027
        %v2075 = vpop.f32.mrb[0].mxu0
        %v2076 = vadd.f32 0.0, %v2075
        %v2077 = vpop.f32.mrb[0].mxu0
        %v2078 = vpop.f32.mrb[0].mxu0
        %v2079 = vadd.f32 0.0, %v2078
        %v2080 = vpop.f32.mrb[0].mxu0
        %2081 = vmatprep.mubr.bf16.mxu0 0
        %2082 = vmatmul.mubr.bf16.gmra.mrb[0].mxu0 %v2030
        %v2083 = vpop.f32.mrb[0].mxu0
        %v2084 = vadd.f32 0.0, %v2083
        %v2085 = vpop.f32.mrb[0].mxu0
        %v2086 = vpop.f32.mrb[0].mxu0
        %v2087 = vadd.f32 0.0, %v2086
        %v2088 = vpop.f32.mrb[0].mxu0
        %2089 = vmatprep.mubr.bf16.mxu0 0
        %2090 = vmatmul.mubr.bf16.gmra.mrb[0].mxu0 %v2033
        %v2091 = vpop.f32.mrb[0].mxu0
        %v2092 = vadd.f32 0.0, %v2091
        %v2093 = vpop.f32.mrb[0].mxu0
        %v2094 = vpop.f32.mrb[0].mxu0
        %v2095 = vadd.f32 0.0, %v2094
        %v2096 = vpop.f32.mrb[0].mxu0
        %2097 = vmatprep.mubr.bf16.mxu0 0
        %2098 = vmatmul.mubr.bf16.gmra.mrb[0].mxu0 %v2036
        %v2099 = vpop.f32.mrb[0].mxu0
        %v2100 = vadd.f32 0.0, %v2099
        %v2101 = vpop.f32.mrb[0].mxu0
        %v2102 = vpop.f32.mrb[0].mxu0
        %v2103 = vadd.f32 0.0, %v2102
        %v2104 = vpop.f32.mrb[0].mxu0
        %2105 = vdwg.mxu0
        %v2106 = vld [vmem:[#allocation2] sm:$0xff]
        %v2107 = vld [vmem:[#allocation2 + $0x8] sm:$0xff]
        %v2108 = vld [vmem:[#allocation2 + $0x10] sm:$0xff]
        %v2109 = vld [vmem:[#allocation2 + $0x18] sm:$0xff]
        %v2110 = vld [vmem:[#allocation2 + $0x20] sm:$0xff]
        %v2111 = vld [vmem:[#allocation2 + $0x28] sm:$0xff]
        %v2112 = vld [vmem:[#allocation2 + $0x30] sm:$0xff]
        %v2113 = vld [vmem:[#allocation2 + $0x38] sm:$0xff]
        %v2114 = vadd.f32 %v2106, %v2076
        %v2115 = vadd.f32 %v2107, %v2079
        %v2116 = vadd.f32 %v2108, %v2084
        %v2117 = vadd.f32 %v2109, %v2087
        %v2118 = vadd.f32 %v2110, %v2092
        %v2119 = vadd.f32 %v2111, %v2095
        %v2120 = vadd.f32 %v2112, %v2100
        %v2121 = vadd.f32 %v2113, %v2103
        %2122 = vst.msk [vmem:[#allocation2] sm:$0xff] %vm870, %v2114
        %2123 = vst.msk [vmem:[#allocation2 + $0x8] sm:$0xff] %vm870, %v2115
        %2124 = vst.msk [vmem:[#allocation2 + $0x10] sm:$0xff] %vm870, %v2116
        %2125 = vst.msk [vmem:[#allocation2 + $0x18] sm:$0xff] %vm870, %v2117
        %2126 = vst.msk [vmem:[#allocation2 + $0x20] sm:$0xff] %vm870, %v2118
        %2127 = vst.msk [vmem:[#allocation2 + $0x28] sm:$0xff] %vm870, %v2119
        %2128 = vst.msk [vmem:[#allocation2 + $0x30] sm:$0xff] %vm870, %v2120
        %2129 = vst.msk [vmem:[#allocation2 + $0x38] sm:$0xff] %vm870, %v2121
        %v2130 = vld [vmem:[%s1860] sm:$0xf]
        %v2131 = vld [vmem:[%s1860 + $0x4] sm:$0x1]
        %v2132 = vld [vmem:[%s1860 + $0x8] sm:$0xf]
        %v2133 = vld [vmem:[%s1860 + $0xc] sm:$0x1]
        %v2134 = vld [vmem:[%s1860 + $0x10] sm:$0xf]
        %v2135 = vld [vmem:[%s1860 + $0x14] sm:$0x1]
        %v2136 = vld [vmem:[%s1860 + $0x18] sm:$0xf]
        %v2137 = vld [vmem:[%s1860 + $0x1c] sm:$0x1]
        %v2138 = vld [vmem:[%s1860 + $0x20] sm:$0xf]
        %v2139 = vld [vmem:[%s1860 + $0x24] sm:$0x1]
        %v2140 = vld [vmem:[%s1860 + $0x28] sm:$0xf]
        %v2141 = vld [vmem:[%s1860 + $0x2c] sm:$0x1]
        %v2142 = vld [vmem:[%s1860 + $0x30] sm:$0xf]
        %v2143 = vld [vmem:[%s1860 + $0x34] sm:$0x1]
        %v2144 = vld [vmem:[%s1860 + $0x38] sm:$0xf]
        %v2145 = vld [vmem:[%s1860 + $0x3c] sm:$0x1]
        %v2147 = vshrl.u32 %v2130, 16
        %v2149 = vrot.slane %v2147, 4
        %v2150 = vshll.u32 %v2130, 16
        %v2152 = vrot.slane %v2150, 5
        %v2153 = vor.u32 %v2149, %v2152
        %v2154 = vrot.slane %v2153, 4
        %v2156 = vshll.u32 %v2131, 16
        %v2158 = vrot.slane %v2156, 5
        %v2159 = vsel %vm1113, %v2154, %v2158
        %v2161 = vshrl.u32 %v2132, 16
        %v2163 = vrot.slane %v2161, 4
        %v2164 = vshll.u32 %v2132, 16
        %v2166 = vrot.slane %v2164, 5
        %v2167 = vor.u32 %v2163, %v2166
        %v2168 = vrot.slane %v2167, 4
        %v2170 = vshll.u32 %v2133, 16
        %v2172 = vrot.slane %v2170, 5
        %v2173 = vsel %vm1113, %v2168, %v2172
        %v2175 = vshrl.u32 %v2134, 16
        %v2177 = vrot.slane %v2175, 4
        %v2178 = vshll.u32 %v2134, 16
        %v2180 = vrot.slane %v2178, 5
        %v2181 = vor.u32 %v2177, %v2180
        %v2182 = vrot.slane %v2181, 4
        %v2184 = vshll.u32 %v2135, 16
        %v2186 = vrot.slane %v2184, 5
        %v2187 = vsel %vm1113, %v2182, %v2186
        %v2189 = vshrl.u32 %v2136, 16
        %v2191 = vrot.slane %v2189, 4
        %v2192 = vshll.u32 %v2136, 16
        %v2194 = vrot.slane %v2192, 5
        %v2195 = vor.u32 %v2191, %v2194
        %v2196 = vrot.slane %v2195, 4
        %v2198 = vshll.u32 %v2137, 16
        %v2200 = vrot.slane %v2198, 5
        %v2201 = vsel %vm1113, %v2196, %v2200
        %v2203 = vshrl.u32 %v2138, 16
        %v2205 = vrot.slane %v2203, 4
        %v2206 = vshll.u32 %v2138, 16
        %v2208 = vrot.slane %v2206, 5
        %v2209 = vor.u32 %v2205, %v2208
        %v2210 = vrot.slane %v2209, 4
        %v2212 = vshll.u32 %v2139, 16
        %v2214 = vrot.slane %v2212, 5
        %v2215 = vsel %vm1113, %v2210, %v2214
        %v2217 = vshrl.u32 %v2140, 16
        %v2219 = vrot.slane %v2217, 4
        %v2220 = vshll.u32 %v2140, 16
        %v2222 = vrot.slane %v2220, 5
        %v2223 = vor.u32 %v2219, %v2222
        %v2224 = vrot.slane %v2223, 4
        %v2226 = vshll.u32 %v2141, 16
        %v2228 = vrot.slane %v2226, 5
        %v2229 = vsel %vm1113, %v2224, %v2228
        %v2231 = vshrl.u32 %v2142, 16
        %v2233 = vrot.slane %v2231, 4
        %v2234 = vshll.u32 %v2142, 16
        %v2236 = vrot.slane %v2234, 5
        %v2237 = vor.u32 %v2233, %v2236
        %v2238 = vrot.slane %v2237, 4
        %v2240 = vshll.u32 %v2143, 16
        %v2242 = vrot.slane %v2240, 5
        %v2243 = vsel %vm1113, %v2238, %v2242
        %v2245 = vshrl.u32 %v2144, 16
        %v2247 = vrot.slane %v2245, 4
        %v2248 = vshll.u32 %v2144, 16
        %v2250 = vrot.slane %v2248, 5
        %v2251 = vor.u32 %v2247, %v2250
        %v2252 = vrot.slane %v2251, 4
        %v2254 = vshll.u32 %v2145, 16
        %v2256 = vrot.slane %v2254, 5
        %v2257 = vsel %vm1113, %v2252, %v2256
        %s2258 = scalar_lea.vmem %s2, 16
        %v2259 = vld [vmem:[%s2258] sm:$0x3]
        %v2260 = vunpack.c.l.b16 %v2159
        %v2261 = vunpack.c.l.b16 %v2173
        %v2262 = vunpack.c.l.b16 %v2187
        %v2263 = vunpack.c.l.b16 %v2201
        %v2264 = vunpack.c.l.b16 %v2215
        %v2265 = vunpack.c.l.b16 %v2229
        %v2266 = vunpack.c.l.b16 %v2243
        %v2267 = vunpack.c.l.b16 %v2257
        %v2268 = vpack.c.b16 %v2261, %v2260
        %v2269 = vpack.c.b16 %v2263, %v2262
        %v2270 = vpack.c.b16 %v2265, %v2264
        %v2271 = vpack.c.b16 %v2267, %v2266
        %v2273 = vsel %vm870, %v2268, 0
        %v2276 = vsel %vm870, %v2269, 0
        %v2279 = vsel %vm870, %v2270, 0
        %v2282 = vsel %vm870, %v2271, 0
        %v2285 = vsel %vm883, %v2259, 0
        %2287 = vmatprep.subr.bf16.mxu0 0
        %2288 = vmatpush1.bf16.msra.mxu0 %v2285
        %2289 = vmatprep.subr.bf16.mxu0 0
        %2290 = vmatpush1.bf16.msra.mxu0 0
        %2291 = vmatprep.subr.bf16.mxu0 0
        %2292 = vmatpush1.bf16.msra.mxu0 0
        %2293 = vmatprep.subr.bf16.mxu0 0
        %2294 = vmatpush1.bf16.msra.mxu0 0
        %2295 = vmatprep.subr.bf16.mxu0 0
        %2296 = vmatpush1.bf16.msra.mxu0 0
        %2297 = vmatprep.subr.bf16.mxu0 0
        %2298 = vmatpush1.bf16.msra.mxu0 0
        %2299 = vmatprep.subr.bf16.mxu0 0
        %2300 = vmatpush1.bf16.msra.mxu0 0
        %2301 = vmatprep.subr.bf16.mxu0 0
        %2302 = vmatpush1.bf16.msra.mxu0 0
        %2303 = vmatprep.subr.bf16.mxu0 0
        %2304 = vmatpush1.bf16.msra.mxu0 0
        %2305 = vmatprep.subr.bf16.mxu0 0
        %2306 = vmatpush1.bf16.msra.mxu0 0
        %2307 = vmatprep.subr.bf16.mxu0 0
        %2308 = vmatpush1.bf16.msra.mxu0 0
        %2309 = vmatprep.subr.bf16.mxu0 0
        %2310 = vmatpush1.bf16.msra.mxu0 0
        %2311 = vmatprep.subr.bf16.mxu0 0
        %2312 = vmatpush1.bf16.msra.mxu0 0
        %2313 = vmatprep.subr.bf16.mxu0 0
        %2314 = vmatpush1.bf16.msra.mxu0 0
        %2315 = vmatprep.subr.bf16.mxu0 0
        %2316 = vmatpush1.bf16.msra.mxu0 0
        %2317 = vmatprep.subr.bf16.mxu0 0
        %2318 = vmatpush1.bf16.msra.mxu0 0
        %2319 = vmatprep.mubr.bf16.mxu0 0
        %2320 = vmatmul.mubr.bf16.gmra.mrb[0].mxu0 %v2273
        %v2321 = vpop.f32.mrb[0].mxu0
        %v2322 = vadd.f32 0.0, %v2321
        %v2323 = vpop.f32.mrb[0].mxu0
        %v2324 = vpop.f32.mrb[0].mxu0
        %v2325 = vadd.f32 0.0, %v2324
        %v2326 = vpop.f32.mrb[0].mxu0
        %2327 = vmatprep.mubr.bf16.mxu0 0
        %2328 = vmatmul.mubr.bf16.gmra.mrb[0].mxu0 %v2276
        %v2329 = vpop.f32.mrb[0].mxu0
        %v2330 = vadd.f32 0.0, %v2329
        %v2331 = vpop.f32.mrb[0].mxu0
        %v2332 = vpop.f32.mrb[0].mxu0
        %v2333 = vadd.f32 0.0, %v2332
        %v2334 = vpop.f32.mrb[0].mxu0
        %2335 = vmatprep.mubr.bf16.mxu0 0
        %2336 = vmatmul.mubr.bf16.gmra.mrb[0].mxu0 %v2279
        %v2337 = vpop.f32.mrb[0].mxu0
        %v2338 = vadd.f32 0.0, %v2337
        %v2339 = vpop.f32.mrb[0].mxu0
        %v2340 = vpop.f32.mrb[0].mxu0
        %v2341 = vadd.f32 0.0, %v2340
        %v2342 = vpop.f32.mrb[0].mxu0
        %2343 = vmatprep.mubr.bf16.mxu0 0
        %2344 = vmatmul.mubr.bf16.gmra.mrb[0].mxu0 %v2282
        %v2345 = vpop.f32.mrb[0].mxu0
        %v2346 = vadd.f32 0.0, %v2345
        %v2347 = vpop.f32.mrb[0].mxu0
        %v2348 = vpop.f32.mrb[0].mxu0
        %v2349 = vadd.f32 0.0, %v2348
        %v2350 = vpop.f32.mrb[0].mxu0
        %2351 = vdwg.mxu0
        %v2352 = vld [vmem:[#allocation2] sm:$0xff]
        %v2353 = vld [vmem:[#allocation2 + $0x8] sm:$0xff]
        %v2354 = vld [vmem:[#allocation2 + $0x10] sm:$0xff]
        %v2355 = vld [vmem:[#allocation2 + $0x18] sm:$0xff]
        %v2356 = vld [vmem:[#allocation2 + $0x20] sm:$0xff]
        %v2357 = vld [vmem:[#allocation2 + $0x28] sm:$0xff]
        %v2358 = vld [vmem:[#allocation2 + $0x30] sm:$0xff]
        %v2359 = vld [vmem:[#allocation2 + $0x38] sm:$0xff]
        %v2360 = vadd.f32 %v2352, %v2322
        %v2361 = vadd.f32 %v2353, %v2325
        %v2362 = vadd.f32 %v2354, %v2330
        %v2363 = vadd.f32 %v2355, %v2333
        %v2364 = vadd.f32 %v2356, %v2338
        %v2365 = vadd.f32 %v2357, %v2341
        %v2366 = vadd.f32 %v2358, %v2346
        %v2367 = vadd.f32 %v2359, %v2349
        %2368 = vst.msk [vmem:[#allocation2] sm:$0xff] %vm870, %v2360
        %2369 = vst.msk [vmem:[#allocation2 + $0x8] sm:$0xff] %vm870, %v2361
        %2370 = vst.msk [vmem:[#allocation2 + $0x10] sm:$0xff] %vm870, %v2362
        %2371 = vst.msk [vmem:[#allocation2 + $0x18] sm:$0xff] %vm870, %v2363
        %2372 = vst.msk [vmem:[#allocation2 + $0x20] sm:$0xff] %vm870, %v2364
        %2373 = vst.msk [vmem:[#allocation2 + $0x28] sm:$0xff] %vm870, %v2365
        %2374 = vst.msk [vmem:[#allocation2 + $0x30] sm:$0xff] %vm870, %v2366
        %2375 = vst.msk [vmem:[#allocation2 + $0x38] sm:$0xff] %vm870, %v2367
        %v2376 = vld [vmem:[#allocation2] sm:$0xff]
        %v2377 = vld [vmem:[#allocation2 + $0x8] sm:$0xff]
        %v2378 = vld [vmem:[#allocation2 + $0x10] sm:$0xff]
        %v2379 = vld [vmem:[#allocation2 + $0x18] sm:$0xff]
        %v2380 = vld [vmem:[#allocation2 + $0x20] sm:$0xff]
        %v2381 = vld [vmem:[#allocation2 + $0x28] sm:$0xff]
        %v2382 = vld [vmem:[#allocation2 + $0x30] sm:$0xff]
        %v2383 = vld [vmem:[#allocation2 + $0x38] sm:$0xff]
        %v2384 = vld [vmem:[%s3] sm:$0x1]
        %v2386 = vlaneseq
        %v2387 = vshrl.u32 %v2386, 7
        %v2388 = vsub.s32 0, %v2387
        %v2389 = vrot.slane %v2384, %v2388
        %v2391 = vadd.f32 %v2376, %v2389
        %v2392 = vadd.f32 %v2377, %v2389
        %v2393 = vadd.f32 %v2378, %v2389
        %v2394 = vadd.f32 %v2379, %v2389
        %v2395 = vadd.f32 %v2380, %v2389
        %v2396 = vadd.f32 %v2381, %v2389
        %v2397 = vadd.f32 %v2382, %v2389
        %v2398 = vadd.f32 %v2383, %v2389
        %v2399 = vmax.f32 %v2391, 0.0
        %v2400 = vmax.f32 %v2392, 0.0
        %v2401 = vmax.f32 %v2393, 0.0
        %v2402 = vmax.f32 %v2394, 0.0
        %v2403 = vmax.f32 %v2395, 0.0
        %v2404 = vmax.f32 %v2396, 0.0
        %v2405 = vmax.f32 %v2397, 0.0
        %v2406 = vmax.f32 %v2398, 0.0
        %2407 = vxpose.xlu0.b32.start [1/16] %v2399, 128
        %2408 = vxpose.xlu0.b32.cont [2/16] %v2400, 128
        %2409 = vxpose.xlu0.b32.cont [3/16] %v2401, 128
        %2410 = vxpose.xlu0.b32.cont [4/16] %v2402, 128
        %2411 = vxpose.xlu0.b32.cont [5/16] %v2403, 128
        %2412 = vxpose.xlu0.b32.cont [6/16] %v2404, 128
        %2413 = vxpose.xlu0.b32.cont [7/16] %v2405, 128
        %2414 = vxpose.xlu0.b32.cont [8/16] %v2406, 128
        %2415 = vxpose.xlu0.b32.cont [9/16] 0.0, 128
        %2416 = vxpose.xlu0.b32.cont [10/16] 0.0, 128
        %2417 = vxpose.xlu0.b32.cont [11/16] 0.0, 128
        %2418 = vxpose.xlu0.b32.cont [12/16] 0.0, 128
        %2419 = vxpose.xlu0.b32.cont [13/16] 0.0, 128
        %2420 = vxpose.xlu0.b32.cont [14/16] 0.0, 128
        %2421 = vxpose.xlu0.b32.cont [15/16] 0.0, 128
        %2422 = vxpose.xlu0.b32.end [16/16] 0.0, 128
        %v2423 = vpop.trf.xlu0
        %v2424 = vpop.trf.xlu0
        %v2425 = vpop.trf.xlu0
        %v2426 = vpop.trf.xlu0
        %v2427 = vpop.trf.xlu0
        %v2428 = vpop.trf.xlu0
        %v2429 = vpop.trf.xlu0
        %v2430 = vpop.trf.xlu0
        %v2431 = vpop.trf.xlu0
        %v2432 = vpop.trf.xlu0
        %v2433 = vpop.trf.xlu0
        %v2434 = vpop.trf.xlu0
        %v2435 = vpop.trf.xlu0
        %v2436 = vpop.trf.xlu0
        %v2437 = vpop.trf.xlu0
        %v2438 = vpop.trf.xlu0
        %v2439 = vpack.c.bf16 %v2423, %v2423
        %vm2440 = vcmask 517120
        %2441 = vst.msk [vmem:[%s726] sm:$0x3] %vm2440, %v2439
        %v2442 = vld [vmem:[%s1479] sm:$0xf]
        %v2443 = vld [vmem:[%s1479 + $0x8] sm:$0xf]
        %v2444 = vld [vmem:[%s1479 + $0x10] sm:$0xf]
        %v2445 = vld [vmem:[%s1479 + $0x18] sm:$0xf]
        %v2446 = vld [vmem:[%s1479 + $0x20] sm:$0xf]
        %v2447 = vld [vmem:[%s1479 + $0x28] sm:$0xf]
        %v2448 = vld [vmem:[%s1479 + $0x30] sm:$0xf]
        %v2449 = vld [vmem:[%s1479 + $0x38] sm:$0xf]
        %v2450 = vld [vmem:[%s1344] sm:$0xf]
        %v2451 = vld [vmem:[%s1344 + $0x4] sm:$0x1]
        %v2452 = vld [vmem:[%s1344 + $0x8] sm:$0xf]
        %v2453 = vld [vmem:[%s1344 + $0xc] sm:$0x1]
        %v2454 = vld [vmem:[%s1344 + $0x10] sm:$0xf]
        %v2455 = vld [vmem:[%s1344 + $0x14] sm:$0x1]
        %v2456 = vld [vmem:[%s1344 + $0x18] sm:$0xf]
        %v2457 = vld [vmem:[%s1344 + $0x1c] sm:$0x1]
        %v2458 = vld [vmem:[%s1344 + $0x20] sm:$0xf]
        %v2459 = vld [vmem:[%s1344 + $0x24] sm:$0x1]
        %v2460 = vld [vmem:[%s1344 + $0x28] sm:$0xf]
        %v2461 = vld [vmem:[%s1344 + $0x2c] sm:$0x1]
        %v2462 = vld [vmem:[%s1344 + $0x30] sm:$0xf]
        %v2463 = vld [vmem:[%s1344 + $0x34] sm:$0x1]
        %v2464 = vld [vmem:[%s1344 + $0x38] sm:$0xf]
        %v2465 = vld [vmem:[%s1344 + $0x3c] sm:$0x1]
        %v2466 = vld [vmem:[%s1995] sm:$0xf]
        %v2467 = vld [vmem:[%s1995 + $0x8] sm:$0xf]
        %v2468 = vld [vmem:[%s1995 + $0x10] sm:$0xf]
        %v2469 = vld [vmem:[%s1995 + $0x18] sm:$0xf]
        %v2470 = vld [vmem:[%s1995 + $0x20] sm:$0xf]
        %v2471 = vld [vmem:[%s1995 + $0x28] sm:$0xf]
        %v2472 = vld [vmem:[%s1995 + $0x30] sm:$0xf]
        %v2473 = vld [vmem:[%s1995 + $0x38] sm:$0xf]
        %v2474 = vld [vmem:[%s1860] sm:$0xf]
        %v2475 = vld [vmem:[%s1860 + $0x4] sm:$0x1]
        %v2476 = vld [vmem:[%s1860 + $0x8] sm:$0xf]
        %v2477 = vld [vmem:[%s1860 + $0xc] sm:$0x1]
        %v2478 = vld [vmem:[%s1860 + $0x10] sm:$0xf]
        %v2479 = vld [vmem:[%s1860 + $0x14] sm:$0x1]
        %v2480 = vld [vmem:[%s1860 + $0x18] sm:$0xf]
        %v2481 = vld [vmem:[%s1860 + $0x1c] sm:$0x1]
        %v2482 = vld [vmem:[%s1860 + $0x20] sm:$0xf]
        %v2483 = vld [vmem:[%s1860 + $0x24] sm:$0x1]
        %v2484 = vld [vmem:[%s1860 + $0x28] sm:$0xf]
        %v2485 = vld [vmem:[%s1860 + $0x2c] sm:$0x1]
        %v2486 = vld [vmem:[%s1860 + $0x30] sm:$0xf]
        %v2487 = vld [vmem:[%s1860 + $0x34] sm:$0x1]
        %v2488 = vld [vmem:[%s1860 + $0x38] sm:$0xf]
        %v2489 = vld [vmem:[%s1860 + $0x3c] sm:$0x1]
        %v2491 = vshrl.u32 %v2450, 16
        %v2493 = vrot.slane %v2491, 4
        %v2494 = vshll.u32 %v2450, 16
        %v2496 = vrot.slane %v2494, 5
        %v2497 = vor.u32 %v2493, %v2496
        %v2498 = vrot.slane %v2497, 4
        %v2500 = vshll.u32 %v2451, 16
        %v2502 = vrot.slane %v2500, 5
        %v2503 = vsel %vm1113, %v2498, %v2502
        %v2505 = vshrl.u32 %v2452, 16
        %v2507 = vrot.slane %v2505, 4
        %v2508 = vshll.u32 %v2452, 16
        %v2510 = vrot.slane %v2508, 5
        %v2511 = vor.u32 %v2507, %v2510
        %v2512 = vrot.slane %v2511, 4
        %v2514 = vshll.u32 %v2453, 16
        %v2516 = vrot.slane %v2514, 5
        %v2517 = vsel %vm1113, %v2512, %v2516
        %v2519 = vshrl.u32 %v2454, 16
        %v2521 = vrot.slane %v2519, 4
        %v2522 = vshll.u32 %v2454, 16
        %v2524 = vrot.slane %v2522, 5
        %v2525 = vor.u32 %v2521, %v2524
        %v2526 = vrot.slane %v2525, 4
        %v2528 = vshll.u32 %v2455, 16
        %v2530 = vrot.slane %v2528, 5
        %v2531 = vsel %vm1113, %v2526, %v2530
        %v2533 = vshrl.u32 %v2456, 16
        %v2535 = vrot.slane %v2533, 4
        %v2536 = vshll.u32 %v2456, 16
        %v2538 = vrot.slane %v2536, 5
        %v2539 = vor.u32 %v2535, %v2538
        %v2540 = vrot.slane %v2539, 4
        %v2542 = vshll.u32 %v2457, 16
        %v2544 = vrot.slane %v2542, 5
        %v2545 = vsel %vm1113, %v2540, %v2544
        %v2547 = vshrl.u32 %v2458, 16
        %v2549 = vrot.slane %v2547, 4
        %v2550 = vshll.u32 %v2458, 16
        %v2552 = vrot.slane %v2550, 5
        %v2553 = vor.u32 %v2549, %v2552
        %v2554 = vrot.slane %v2553, 4
        %v2556 = vshll.u32 %v2459, 16
        %v2558 = vrot.slane %v2556, 5
        %v2559 = vsel %vm1113, %v2554, %v2558
        %v2561 = vshrl.u32 %v2460, 16
        %v2563 = vrot.slane %v2561, 4
        %v2564 = vshll.u32 %v2460, 16
        %v2566 = vrot.slane %v2564, 5
        %v2567 = vor.u32 %v2563, %v2566
        %v2568 = vrot.slane %v2567, 4
        %v2570 = vshll.u32 %v2461, 16
        %v2572 = vrot.slane %v2570, 5
        %v2573 = vsel %vm1113, %v2568, %v2572
        %v2575 = vshrl.u32 %v2462, 16
        %v2577 = vrot.slane %v2575, 4
        %v2578 = vshll.u32 %v2462, 16
        %v2580 = vrot.slane %v2578, 5
        %v2581 = vor.u32 %v2577, %v2580
        %v2582 = vrot.slane %v2581, 4
        %v2584 = vshll.u32 %v2463, 16
        %v2586 = vrot.slane %v2584, 5
        %v2587 = vsel %vm1113, %v2582, %v2586
        %v2589 = vshrl.u32 %v2464, 16
        %v2591 = vrot.slane %v2589, 4
        %v2592 = vshll.u32 %v2464, 16
        %v2594 = vrot.slane %v2592, 5
        %v2595 = vor.u32 %v2591, %v2594
        %v2596 = vrot.slane %v2595, 4
        %v2598 = vshll.u32 %v2465, 16
        %v2600 = vrot.slane %v2598, 5
        %v2601 = vsel %vm1113, %v2596, %v2600
        %v2610 = vmax.bf16 %v2442, %v2503
        %v2611 = vmax.bf16 %v2443, %v2517
        %v2612 = vmax.bf16 %v2444, %v2531
        %v2613 = vmax.bf16 %v2445, %v2545
        %v2614 = vmax.bf16 %v2446, %v2559
        %v2615 = vmax.bf16 %v2447, %v2573
        %v2616 = vmax.bf16 %v2448, %v2587
        %v2617 = vmax.bf16 %v2449, %v2601
        %v2619 = vshrl.u32 %v2474, 16
        %v2621 = vrot.slane %v2619, 4
        %v2622 = vshll.u32 %v2474, 16
        %v2624 = vrot.slane %v2622, 5
        %v2625 = vor.u32 %v2621, %v2624
        %v2626 = vrot.slane %v2625, 4
        %v2628 = vshll.u32 %v2475, 16
        %v2630 = vrot.slane %v2628, 5
        %v2631 = vsel %vm1113, %v2626, %v2630
        %v2633 = vshrl.u32 %v2476, 16
        %v2635 = vrot.slane %v2633, 4
        %v2636 = vshll.u32 %v2476, 16
        %v2638 = vrot.slane %v2636, 5
        %v2639 = vor.u32 %v2635, %v2638
        %v2640 = vrot.slane %v2639, 4
        %v2642 = vshll.u32 %v2477, 16
        %v2644 = vrot.slane %v2642, 5
        %v2645 = vsel %vm1113, %v2640, %v2644
        %v2647 = vshrl.u32 %v2478, 16
        %v2649 = vrot.slane %v2647, 4
        %v2650 = vshll.u32 %v2478, 16
        %v2652 = vrot.slane %v2650, 5
        %v2653 = vor.u32 %v2649, %v2652
        %v2654 = vrot.slane %v2653, 4
        %v2656 = vshll.u32 %v2479, 16
        %v2658 = vrot.slane %v2656, 5
        %v2659 = vsel %vm1113, %v2654, %v2658
        %v2661 = vshrl.u32 %v2480, 16
        %v2663 = vrot.slane %v2661, 4
        %v2664 = vshll.u32 %v2480, 16
        %v2666 = vrot.slane %v2664, 5
        %v2667 = vor.u32 %v2663, %v2666
        %v2668 = vrot.slane %v2667, 4
        %v2670 = vshll.u32 %v2481, 16
        %v2672 = vrot.slane %v2670, 5
        %v2673 = vsel %vm1113, %v2668, %v2672
        %v2675 = vshrl.u32 %v2482, 16
        %v2677 = vrot.slane %v2675, 4
        %v2678 = vshll.u32 %v2482, 16
        %v2680 = vrot.slane %v2678, 5
        %v2681 = vor.u32 %v2677, %v2680
        %v2682 = vrot.slane %v2681, 4
        %v2684 = vshll.u32 %v2483, 16
        %v2686 = vrot.slane %v2684, 5
        %v2687 = vsel %vm1113, %v2682, %v2686
        %v2689 = vshrl.u32 %v2484, 16
        %v2691 = vrot.slane %v2689, 4
        %v2692 = vshll.u32 %v2484, 16
        %v2694 = vrot.slane %v2692, 5
        %v2695 = vor.u32 %v2691, %v2694
        %v2696 = vrot.slane %v2695, 4
        %v2698 = vshll.u32 %v2485, 16
        %v2700 = vrot.slane %v2698, 5
        %v2701 = vsel %vm1113, %v2696, %v2700
        %v2703 = vshrl.u32 %v2486, 16
        %v2705 = vrot.slane %v2703, 4
        %v2706 = vshll.u32 %v2486, 16
        %v2708 = vrot.slane %v2706, 5
        %v2709 = vor.u32 %v2705, %v2708
        %v2710 = vrot.slane %v2709, 4
        %v2712 = vshll.u32 %v2487, 16
        %v2714 = vrot.slane %v2712, 5
        %v2715 = vsel %vm1113, %v2710, %v2714
        %v2717 = vshrl.u32 %v2488, 16
        %v2719 = vrot.slane %v2717, 4
        %v2720 = vshll.u32 %v2488, 16
        %v2722 = vrot.slane %v2720, 5
        %v2723 = vor.u32 %v2719, %v2722
        %v2724 = vrot.slane %v2723, 4
        %v2726 = vshll.u32 %v2489, 16
        %v2728 = vrot.slane %v2726, 5
        %v2729 = vsel %vm1113, %v2724, %v2728
        %v2738 = vmax.bf16 %v2466, %v2631
        %v2739 = vmax.bf16 %v2467, %v2645
        %v2740 = vmax.bf16 %v2468, %v2659
        %v2741 = vmax.bf16 %v2469, %v2673
        %v2742 = vmax.bf16 %v2470, %v2687
        %v2743 = vmax.bf16 %v2471, %v2701
        %v2744 = vmax.bf16 %v2472, %v2715
        %v2745 = vmax.bf16 %v2473, %v2729
        %v2746 = vmax.bf16 %v2610, %v2738
        %v2747 = vmax.bf16 %v2611, %v2739
        %v2748 = vmax.bf16 %v2612, %v2740
        %v2749 = vmax.bf16 %v2613, %v2741
        %v2750 = vmax.bf16 %v2614, %v2742
        %v2751 = vmax.bf16 %v2615, %v2743
        %v2752 = vmax.bf16 %v2616, %v2744
        %v2753 = vmax.bf16 %v2617, %v2745
        %v2754 = vunpack.c.l.bf16 %v2746
        %v2755 = vunpack.c.l.bf16 %v2747
        %v2756 = vunpack.c.l.bf16 %v2748
        %v2757 = vunpack.c.l.bf16 %v2749
        %v2758 = vunpack.c.l.bf16 %v2750
        %v2759 = vunpack.c.l.bf16 %v2751
        %v2760 = vunpack.c.l.bf16 %v2752
        %v2761 = vunpack.c.l.bf16 %v2753
        %2762 = vxpose.xlu0.b32.start [1/16] %v2754, 128
        %2763 = vxpose.xlu0.b32.cont [2/16] %v2755, 128
        %2764 = vxpose.xlu0.b32.cont [3/16] %v2756, 128
        %2765 = vxpose.xlu0.b32.cont [4/16] %v2757, 128
        %2766 = vxpose.xlu0.b32.cont [5/16] %v2758, 128
        %2767 = vxpose.xlu0.b32.cont [6/16] %v2759, 128
        %2768 = vxpose.xlu0.b32.cont [7/16] %v2760, 128
        %2769 = vxpose.xlu0.b32.cont [8/16] %v2761, 128
        %2770 = vxpose.xlu0.b32.cont [9/16] 0.0, 128
        %2771 = vxpose.xlu0.b32.cont [10/16] 0.0, 128
        %2772 = vxpose.xlu0.b32.cont [11/16] 0.0, 128
        %2773 = vxpose.xlu0.b32.cont [12/16] 0.0, 128
        %2774 = vxpose.xlu0.b32.cont [13/16] 0.0, 128
        %2775 = vxpose.xlu0.b32.cont [14/16] 0.0, 128
        %2776 = vxpose.xlu0.b32.cont [15/16] 0.0, 128
        %2777 = vxpose.xlu0.b32.end [16/16] 0.0, 128
        %v2778 = vpop.trf.xlu0
        %v2779 = vpop.trf.xlu0
        %v2780 = vpop.trf.xlu0
        %v2781 = vpop.trf.xlu0
        %v2782 = vpop.trf.xlu0
        %v2783 = vpop.trf.xlu0
        %v2784 = vpop.trf.xlu0
        %v2785 = vpop.trf.xlu0
        %v2786 = vpop.trf.xlu0
        %v2787 = vpop.trf.xlu0
        %v2788 = vpop.trf.xlu0
        %v2789 = vpop.trf.xlu0
        %v2790 = vpop.trf.xlu0
        %v2791 = vpop.trf.xlu0
        %v2792 = vpop.trf.xlu0
        %v2793 = vpop.trf.xlu0
        %v2794 = vpack.c.bf16 %v2778, %v2778
        %v2796 = vunpack.c.l.b16 %v2794
        %v2797 = vpack.c.b16 %v2796, %v2796
        %v2798 = vrot.slane %v2797, 6
        %vm2800 = vcmask 519170
        %2801 = vst.msk [vmem:[%s726] sm:$0xc] %vm2800, %v2798
        %p2802 = scmp.lt.s32.totalorder %s19, 1
        %s2803 = scalar_select %p2802, %s19, 1
        %p2804 = scmp.lt.s32.totalorder %s20, 0
        %s2805 = scalar_select %p2804, %s20, 0
        %s2806 = sadd.s32 %s2805, %s2803
        %s2807 = smul.addr %s2806, 4
        %s2808 = scalar_lea.vmem %s4, %s2807
        // Predicated region
        $region140: #{_lambda_.1} parent=130 // pred_check
          %p2809 = pneg %p149
        $region141: #{_lambda_.1} parent=130 // pred_check_branch
          %2811 = sbr.rel (%p2809) target = $region143
        $region142: #{_lambda_.1} parent=130 // pred_region
          _
        $region143: #{_lambda_.1} parent=130 // pred_fallthru
          _
      $region131: #{_lambda_.1} parent=5 // pred_fallthru
        _
      %p2812 = scmp.le.s32.totalorder 2, %s10
      // Predicated region
      $region144: #{_lambda_.1} parent=5 // pred_check
        %p2813 = pneg %p2812
      $region145: #{_lambda_.1} parent=5 // pred_check_branch
        %2815 = sbr.rel (%p2813) target = $region147
      $region146: #{_lambda_.1} parent=5 // pred_region
        %s2816 = ssub.s32 %s10, 2
        // Predicated region
        $region148: #{_lambda_.1} parent=146 // pred_check
          %p2817 = pneg %p155
        $region149: #{_lambda_.1} parent=146 // pred_check_branch
          %2819 = sbr.rel (%p2817) target = $region151
        $region150: #{_lambda_.1} parent=146 // pred_region
          %p2820 = scmp.lt.s32.totalorder %s21, 1
          %s2821 = scalar_select %p2820, %s21, 1
          %p2822 = scmp.lt.s32.totalorder %s22, 0
          %s2823 = scalar_select %p2822, %s22, 0
          %s2824 = sadd.s32 %s2823, %s2821
          %s2825 = smul.addr %s2824, 4
          %s2826 = scalar_lea.vmem %s4, %s2825
        $region151: #{_lambda_.1} parent=146 // pred_fallthru
          _
      $region147: #{_lambda_.1} parent=5 // pred_fallthru
        _
    $region6: #{_lambda_.1} parent=1 // loop_footer
      %s14 = sadd.s32 1, %s10
    $region7: #{_lambda_.1} parent=1 // loop_footer_branch
      %9 = sbr.rel target = $region3
    $region8: #{_lambda_.1} parent=1 // loop_exit
      _

</llo_original>
